<compile_context>
chip_gen: v7x
topology: tpu7x:2x2x1
jax: 0.10.0
libtpu: 0.0.40
codegen_flags: <defaults>
</compile_context>

<pallas_src>
import jax
import jax.numpy as jnp
from jax.experimental import pallas as pl
from jax.experimental.pallas import tpu as pltpu

# Logical (PyTorch) layer dims.
DIMS = [784, 520, 320, 240, 120, 10]


def _round_up(x, m):
    return (x + m - 1) // m * m


# Lane-dense padded dims used inside the kernel.  The input stays 784 (the
# block covers the full array dim, which Pallas allows); hidden/output widths
# are zero-padded to multiples of 128 so every layer's output is lane-dense
# (no masked partial stores).  Zero-padded units stay exactly zero through
# ReLU, so the math is unchanged.
PADDED_DIMS = [DIMS[0]] + [_round_up(d, 128) for d in DIMS[1:]]
# -> [784, 640, 384, 256, 128, 128]


def mlp_kernel(x_ref,
               w1_ref, b1_ref,
               w2_ref, b2_ref,
               w3_ref, b3_ref,
               w4_ref, b4_ref,
               w5_ref, b5_ref,
               o_ref):
    """Fused 5-layer MLP forward on one (TB, 784) batch tile.

    x_ref is f32 (cast to bf16 here, on the VPU); weights are bf16; every
    jnp.dot accumulates in f32; bias-add and ReLU run in f32."""

    def layer(h_bf16, w_ref, b_ref, relu):
        acc = jnp.dot(h_bf16, w_ref[...], preferred_element_type=jnp.float32)
        acc = acc + b_ref[...]
        if relu:
            acc = jnp.maximum(acc, 0.0)
        return acc

    h = x_ref[...].astype(jnp.bfloat16)                        # (TB, 784) bf16
    h = layer(h, w1_ref, b1_ref, True).astype(jnp.bfloat16)    # (TB, 640)
    h = layer(h, w2_ref, b2_ref, True).astype(jnp.bfloat16)    # (TB, 384)
    h = layer(h, w3_ref, b3_ref, True).astype(jnp.bfloat16)    # (TB, 256)
    h = layer(h, w4_ref, b4_ref, True).astype(jnp.bfloat16)    # (TB, 128)
    out = layer(h, w5_ref, b5_ref, False)                      # (TB, 128) f32
    o_ref[...] = out.astype(o_ref.dtype)


def init_params(key):
    """torch.nn.Linear default init: U(-1/sqrt(fan_in), 1/sqrt(fan_in)).

    Weights stored as (in, out) == PyTorch weight.T; biases as (out,)."""
    params = []
    for d_in, d_out in zip(DIMS[:-1], DIMS[1:]):
        key, kw, kb = jax.random.split(key, 3)
        bound = 1.0 / jnp.sqrt(jnp.float32(d_in))
        w = jax.random.uniform(kw, (d_in, d_out), jnp.float32, -bound, bound)
        b = jax.random.uniform(kb, (d_out,), jnp.float32, -bound, bound)
        params.append((w, b))
    return params


def prepare_params(params):
    """Zero-pad to lane-dense padded dims; weights -> bf16, biases stay f32.

    Call this ONCE and reuse the result for every forward call (the padded
    params are cached outside the per-call path)."""
    padded = []
    for li, (w, b) in enumerate(params):
        in_pad = PADDED_DIMS[li]
        out_pad = PADDED_DIMS[li + 1]
        d_in, d_out = w.shape
        w_p = jnp.zeros((in_pad, out_pad), jnp.float32)
        w_p = w_p.at[:d_in, :d_out].set(w)
        b_p = jnp.zeros((1, out_pad), jnp.float32)
        b_p = b_p.at[0, :d_out].set(b)
        padded.append((w_p.astype(jnp.bfloat16), b_p))
    return padded


def _resident_spec(shape):
    """BlockSpec for an operand whose block index is pinned at (0, 0): it is
    DMA'd once and stays VMEM-resident, so a single buffer suffices."""
    if hasattr(pl, "Buffered"):
        try:
            return pl.BlockSpec(shape, lambda i: (0, 0),
                                pipeline_mode=pl.Buffered(1))
        except Exception:  # construction-time fallback on older pallas
            pass
    return pl.BlockSpec(shape, lambda i: (0, 0))


def _select_tile(batch, tb):
    """Batch tile: a multiple of 128 (bf16 sublane / MXU aligned) and small
    enough that the grid has >= 2 steps whenever batch > 128, so both of
    v7x's TensorCores get work under dimension_semantics=("parallel",)."""
    tb = _round_up(max(int(tb), 128), 128)
    tb = min(tb, max(128, _round_up(pl.cdiv(batch, 2), 128)))
    return tb


def mlp_forward(x, padded_params, tb=256):
    """Forward pass equivalent to the PyTorch Model.forward.

    `padded_params` must be the (cached) output of prepare_params().  Intended
    to be called under jax.jit with tb static."""
    flat = x.reshape(-1, DIMS[0]).astype(jnp.float32)   # input.view(-1, 784)
    B = flat.shape[0]

    TB = _select_tile(B, tb)
    B_pad = _round_up(B, TB)
    if B_pad != B:
        # Padded batch rows pick up biases before being sliced off below;
        # anyone fusing a reduction (e.g. a loss) over the raw kernel output
        # must mask them.
        flat = jnp.pad(flat, ((0, B_pad - B), (0, 0)))

    operands = [flat]
    # Input stays f32 (kernel casts to bf16 on the VPU): no wrapper-side
    # HBM cast pass.
    in_specs = [pl.BlockSpec((TB, DIMS[0]), lambda i: (i, 0))]
    for w, b in padded_params:
        operands.append(w)
        operands.append(b)
        in_specs.append(_resident_spec(w.shape))
        in_specs.append(_resident_spec(b.shape))

    d_out_pad = PADDED_DIMS[-1]
    flops = 2 * B_pad * sum(
        di * do for di, do in zip(PADDED_DIMS[:-1], PADDED_DIMS[1:]))
    weight_bytes = sum(
        w.size * w.dtype.itemsize + b.size * b.dtype.itemsize
        for w, b in padded_params)
    bytes_accessed = (weight_bytes
                      + B_pad * DIMS[0] * 4      # f32 activations in
                      + B_pad * d_out_pad * 4)   # f32 logits out

    compiler_kwargs = dict(dimension_semantics=("parallel",))
    if TB > 512:
        # Headroom for large tiles (layer-1 f32 accumulator + double-buffered
        # x/out tiles) beyond the 32 MiB scoped default; v7x physical is 64 MiB.
        compiler_kwargs["vmem_limit_bytes"] = 64 * 1024 * 1024

    out = pl.pallas_call(
        mlp_kernel,
        out_shape=jax.ShapeDtypeStruct((B_pad, d_out_pad), jnp.float32),
        grid=(B_pad // TB,),
        in_specs=in_specs,
        out_specs=pl.BlockSpec((TB, d_out_pad), lambda i: (i, 0)),
        compiler_params=pltpu.CompilerParams(**compiler_kwargs),
        cost_estimate=pl.CostEstimate(
            flops=flops, transcendentals=0, bytes_accessed=bytes_accessed),
    )(*operands)

    # Drop batch padding and the zero-padded output columns.
    return out[:B, :DIMS[-1]]


def mlp_reference_f32(x, params):
    """Pure-f32 reference matching the PyTorch module exactly."""
    h = x.reshape(-1, DIMS[0]).astype(jnp.float32)
    for i, (w, b) in enumerate(params):
        h = h @ w + b
        if i < len(params) - 1:
            h = jnp.maximum(h, 0.0)
    return h


def mlp_reference_bf16(x, params):
    """Reference emulating the kernel's numerics (bf16 operands, f32 acc)."""
    h = x.reshape(-1, DIMS[0]).astype(jnp.bfloat16)
    for i, (w, b) in enumerate(params):
        acc = jnp.dot(h, w.astype(jnp.bfloat16),
                      preferred_element_type=jnp.float32) + b
        if i < len(params) - 1:
            h = jnp.maximum(acc, 0.0).astype(jnp.bfloat16)
        else:
            h = acc
    return h


if __name__ == "__main__":
    key = jax.random.PRNGKey(0)
    key, kx1, kx2 = jax.random.split(key, 3)
    params = init_params(key)

    # Hoisted out of the per-call path: pad + bf16-cast the weights ONCE.
    padded_params = prepare_params(params)

    # jit the wrapper; tb is static so grid/BlockSpecs are compile-time.
    forward = jax.jit(mlp_forward, static_argnames=("tb",))

    # Test 1: small MNIST-like batch, NCHW (B, 1, 28, 28) -> (B, 784).
    B1 = 8
    x1 = jax.random.normal(kx1, (B1, 1, 28, 28), jnp.float32)
    out1 = jax.block_until_ready(forward(x1, padded_params))
    assert out1.shape == (B1, 10)
    assert jnp.allclose(out1, mlp_reference_bf16(x1, params),
                        atol=1e-2, rtol=1e-2)
    assert jnp.allclose(out1, mlp_reference_f32(x1, params),
                        atol=3e-2, rtol=3e-2)

    # Test 2: non-multiple batch with a small tile to exercise batch padding
    # and a multi-step parallel grid (TB=128 -> grid=(3,)).
    B2 = 300
    x2 = jax.random.normal(kx2, (B2, 1, 28, 28), jnp.float32)
    out2 = jax.block_until_ready(forward(x2, padded_params, tb=128))
    assert out2.shape == (B2, 10)
    assert jnp.allclose(out2, mlp_reference_bf16(x2, params),
                        atol=1e-2, rtol=1e-2)
    assert jnp.allclose(out2, mlp_reference_f32(x2, params),
                        atol=3e-2, rtol=3e-2)

    print("KERNEL_OK")
</pallas_src>

<mosaic_0001>
module attributes {stable_mosaic.version = 11 : i64} {
  func.func @mlp_kernel(%arg0: i32, %arg1: memref<128x784xf32, #tpu.memory_space<vmem>>, %arg2: memref<784x640xbf16, #tpu.memory_space<vmem>>, %arg3: memref<1x640xf32, #tpu.memory_space<vmem>>, %arg4: memref<640x384xbf16, #tpu.memory_space<vmem>>, %arg5: memref<1x384xf32, #tpu.memory_space<vmem>>, %arg6: memref<384x256xbf16, #tpu.memory_space<vmem>>, %arg7: memref<1x256xf32, #tpu.memory_space<vmem>>, %arg8: memref<256x128xbf16, #tpu.memory_space<vmem>>, %arg9: memref<1x128xf32, #tpu.memory_space<vmem>>, %arg10: memref<128x128xbf16, #tpu.memory_space<vmem>>, %arg11: memref<1x128xf32, #tpu.memory_space<vmem>>, %arg12: memref<128x128xf32, #tpu.memory_space<vmem>>) attributes {dimension_semantics = [#tpu.dimension_semantics<parallel>], iteration_bounds = array<i64: 1>, scalar_prefetch = 0 : i64, scratch_operands = 0 : i64, tpu.core_type = #tpu.core_type<tc>, window_params = [{transform_indices = @transform_0, window_bounds = array<i64: 128, 784>}, {pipeline_mode = #tpu.pipeline_mode<synchronous>, transform_indices = @transform_1, window_bounds = array<i64: 784, 640>}, {pipeline_mode = #tpu.pipeline_mode<synchronous>, transform_indices = @transform_2, window_bounds = array<i64: 1, 640>}, {pipeline_mode = #tpu.pipeline_mode<synchronous>, transform_indices = @transform_3, window_bounds = array<i64: 640, 384>}, {pipeline_mode = #tpu.pipeline_mode<synchronous>, transform_indices = @transform_4, window_bounds = array<i64: 1, 384>}, {pipeline_mode = #tpu.pipeline_mode<synchronous>, transform_indices = @transform_5, window_bounds = array<i64: 384, 256>}, {pipeline_mode = #tpu.pipeline_mode<synchronous>, transform_indices = @transform_6, window_bounds = array<i64: 1, 256>}, {pipeline_mode = #tpu.pipeline_mode<synchronous>, transform_indices = @transform_7, window_bounds = array<i64: 256, 128>}, {pipeline_mode = #tpu.pipeline_mode<synchronous>, transform_indices = @transform_8, window_bounds = array<i64: 1, 128>}, {pipeline_mode = #tpu.pipeline_mode<synchronous>, transform_indices = @transform_9, window_bounds = array<i64: 128, 128>}, {pipeline_mode = #tpu.pipeline_mode<synchronous>, transform_indices = @transform_10, window_bounds = array<i64: 1, 128>}, {transform_indices = @transform_11, window_bounds = array<i64: 128, 128>}]} {
    %c0 = arith.constant 0 : index
    %c0_0 = arith.constant 0 : index
    %0 = vector.load %arg1[%c0, %c0_0] : memref<128x784xf32, #tpu.memory_space<vmem>>, vector<128x784xf32>
    %1 = arith.truncf %0 : vector<128x784xf32> to vector<128x784xbf16>
    %c0_1 = arith.constant 0 : index
    %c0_2 = arith.constant 0 : index
    %2 = vector.load %arg2[%c0_1, %c0_2] : memref<784x640xbf16, #tpu.memory_space<vmem>>, vector<784x640xbf16>
    %cst = arith.constant dense<0.000000e+00> : vector<128x640xf32>
    %3 = tpu.matmul %1, %2, %cst {dimension_numbers = #tpu.dot_dimension_numbers<[1], [0], [0], [1], [0, 0, 1, 1], [], []>} : vector<128x784xbf16>, vector<784x640xbf16>, vector<128x640xf32> -> vector<128x640xf32>
    %c0_3 = arith.constant 0 : index
    %c0_4 = arith.constant 0 : index
    %4 = vector.load %arg3[%c0_3, %c0_4] : memref<1x640xf32, #tpu.memory_space<vmem>>, vector<1x640xf32>
    %5 = vector.broadcast %4 : vector<1x640xf32> to vector<128x640xf32>
    %6 = arith.addf %3, %5 : vector<128x640xf32>
    %cst_5 = arith.constant 0.000000e+00 : f32
    %7 = vector.broadcast %cst_5 : f32 to vector<128x640xf32>
    %8 = arith.maximumf %6, %7 : vector<128x640xf32>
    %9 = arith.truncf %8 : vector<128x640xf32> to vector<128x640xbf16>
    %c0_6 = arith.constant 0 : index
    %c0_7 = arith.constant 0 : index
    %10 = vector.load %arg4[%c0_6, %c0_7] : memref<640x384xbf16, #tpu.memory_space<vmem>>, vector<640x384xbf16>
    %cst_8 = arith.constant dense<0.000000e+00> : vector<128x384xf32>
    %11 = tpu.matmul %9, %10, %cst_8 {dimension_numbers = #tpu.dot_dimension_numbers<[1], [0], [0], [1], [0, 0, 1, 1], [], []>} : vector<128x640xbf16>, vector<640x384xbf16>, vector<128x384xf32> -> vector<128x384xf32>
    %c0_9 = arith.constant 0 : index
    %c0_10 = arith.constant 0 : index
    %12 = vector.load %arg5[%c0_9, %c0_10] : memref<1x384xf32, #tpu.memory_space<vmem>>, vector<1x384xf32>
    %13 = vector.broadcast %12 : vector<1x384xf32> to vector<128x384xf32>
    %14 = arith.addf %11, %13 : vector<128x384xf32>
    %cst_11 = arith.constant 0.000000e+00 : f32
    %15 = vector.broadcast %cst_11 : f32 to vector<128x384xf32>
    %16 = arith.maximumf %14, %15 : vector<128x384xf32>
    %17 = arith.truncf %16 : vector<128x384xf32> to vector<128x384xbf16>
    %c0_12 = arith.constant 0 : index
    %c0_13 = arith.constant 0 : index
    %18 = vector.load %arg6[%c0_12, %c0_13] : memref<384x256xbf16, #tpu.memory_space<vmem>>, vector<384x256xbf16>
    %cst_14 = arith.constant dense<0.000000e+00> : vector<128x256xf32>
    %19 = tpu.matmul %17, %18, %cst_14 {dimension_numbers = #tpu.dot_dimension_numbers<[1], [0], [0], [1], [0, 0, 1, 1], [], []>} : vector<128x384xbf16>, vector<384x256xbf16>, vector<128x256xf32> -> vector<128x256xf32>
    %c0_15 = arith.constant 0 : index
    %c0_16 = arith.constant 0 : index
    %20 = vector.load %arg7[%c0_15, %c0_16] : memref<1x256xf32, #tpu.memory_space<vmem>>, vector<1x256xf32>
    %21 = vector.broadcast %20 : vector<1x256xf32> to vector<128x256xf32>
    %22 = arith.addf %19, %21 : vector<128x256xf32>
    %cst_17 = arith.constant 0.000000e+00 : f32
    %23 = vector.broadcast %cst_17 : f32 to vector<128x256xf32>
    %24 = arith.maximumf %22, %23 : vector<128x256xf32>
    %25 = arith.truncf %24 : vector<128x256xf32> to vector<128x256xbf16>
    %c0_18 = arith.constant 0 : index
    %c0_19 = arith.constant 0 : index
    %26 = vector.load %arg8[%c0_18, %c0_19] : memref<256x128xbf16, #tpu.memory_space<vmem>>, vector<256x128xbf16>
    %cst_20 = arith.constant dense<0.000000e+00> : vector<128x128xf32>
    %27 = tpu.matmul %25, %26, %cst_20 {dimension_numbers = #tpu.dot_dimension_numbers<[1], [0], [0], [1], [0, 0, 1, 1], [], []>} : vector<128x256xbf16>, vector<256x128xbf16>, vector<128x128xf32> -> vector<128x128xf32>
    %c0_21 = arith.constant 0 : index
    %c0_22 = arith.constant 0 : index
    %28 = vector.load %arg9[%c0_21, %c0_22] : memref<1x128xf32, #tpu.memory_space<vmem>>, vector<1x128xf32>
    %29 = vector.broadcast %28 : vector<1x128xf32> to vector<128x128xf32>
    %30 = arith.addf %27, %29 : vector<128x128xf32>
    %cst_23 = arith.constant 0.000000e+00 : f32
    %31 = vector.broadcast %cst_23 : f32 to vector<128x128xf32>
    %32 = arith.maximumf %30, %31 : vector<128x128xf32>
    %33 = arith.truncf %32 : vector<128x128xf32> to vector<128x128xbf16>
    %c0_24 = arith.constant 0 : index
    %c0_25 = arith.constant 0 : index
    %34 = vector.load %arg10[%c0_24, %c0_25] : memref<128x128xbf16, #tpu.memory_space<vmem>>, vector<128x128xbf16>
    %cst_26 = arith.constant dense<0.000000e+00> : vector<128x128xf32>
    %35 = tpu.matmul %33, %34, %cst_26 {dimension_numbers = #tpu.dot_dimension_numbers<[1], [0], [0], [1], [0, 0, 1, 1], [], []>} : vector<128x128xbf16>, vector<128x128xbf16>, vector<128x128xf32> -> vector<128x128xf32>
    %c0_27 = arith.constant 0 : index
    %c0_28 = arith.constant 0 : index
    %36 = vector.load %arg11[%c0_27, %c0_28] : memref<1x128xf32, #tpu.memory_space<vmem>>, vector<1x128xf32>
    %37 = vector.broadcast %36 : vector<1x128xf32> to vector<128x128xf32>
    %38 = arith.addf %35, %37 : vector<128x128xf32>
    %c0_29 = arith.constant 0 : index
    %c0_30 = arith.constant 0 : index
    %39 = vector.load %arg12[%c0_29, %c0_30] : memref<128x128xf32, #tpu.memory_space<vmem>>, vector<128x128xf32>
    tpu.vector_store %arg12[%c0_29, %c0_30], %38 {strides = array<i32>} : memref<128x128xf32, #tpu.memory_space<vmem>>, vector<128x128xf32>,
    return
  }
  func.func @transform_0(%arg0: i32) -> (i32, i32) {
    %c0_i32 = arith.constant 0 : i32
    %c0_i32_0 = arith.constant 0 : i32
    return %arg0, %c0_i32 : i32, i32
  }
  func.func @transform_1(%arg0: i32) -> (i32, i32) {
    %c0_i32 = arith.constant 0 : i32
    %c0_i32_0 = arith.constant 0 : i32
    %c0_i32_1 = arith.constant 0 : i32
    return %c0_i32, %c0_i32_0 : i32, i32
  }
  func.func @transform_2(%arg0: i32) -> (i32, i32) {
    %c0_i32 = arith.constant 0 : i32
    %c0_i32_0 = arith.constant 0 : i32
    %c0_i32_1 = arith.constant 0 : i32
    return %c0_i32, %c0_i32_0 : i32, i32
  }
  func.func @transform_3(%arg0: i32) -> (i32, i32) {
    %c0_i32 = arith.constant 0 : i32
    %c0_i32_0 = arith.constant 0 : i32
    %c0_i32_1 = arith.constant 0 : i32
    return %c0_i32, %c0_i32_0 : i32, i32
  }
  func.func @transform_4(%arg0: i32) -> (i32, i32) {
    %c0_i32 = arith.constant 0 : i32
    %c0_i32_0 = arith.constant 0 : i32
    %c0_i32_1 = arith.constant 0 : i32
    return %c0_i32, %c0_i32_0 : i32, i32
  }
  func.func @transform_5(%arg0: i32) -> (i32, i32) {
    %c0_i32 = arith.constant 0 : i32
    %c0_i32_0 = arith.constant 0 : i32
    %c0_i32_1 = arith.constant 0 : i32
    return %c0_i32, %c0_i32_0 : i32, i32
  }
  func.func @transform_6(%arg0: i32) -> (i32, i32) {
    %c0_i32 = arith.constant 0 : i32
    %c0_i32_0 = arith.constant 0 : i32
    %c0_i32_1 = arith.constant 0 : i32
    return %c0_i32, %c0_i32_0 : i32, i32
  }
  func.func @transform_7(%arg0: i32) -> (i32, i32) {
    %c0_i32 = arith.constant 0 : i32
    %c0_i32_0 = arith.constant 0 : i32
    %c0_i32_1 = arith.constant 0 : i32
    return %c0_i32, %c0_i32_0 : i32, i32
  }
  func.func @transform_8(%arg0: i32) -> (i32, i32) {
    %c0_i32 = arith.constant 0 : i32
    %c0_i32_0 = arith.constant 0 : i32
    %c0_i32_1 = arith.constant 0 : i32
    return %c0_i32, %c0_i32_0 : i32, i32
  }
  func.func @transform_9(%arg0: i32) -> (i32, i32) {
    %c0_i32 = arith.constant 0 : i32
    %c0_i32_0 = arith.constant 0 : i32
    %c0_i32_1 = arith.constant 0 : i32
    return %c0_i32, %c0_i32_0 : i32, i32
  }
  func.func @transform_10(%arg0: i32) -> (i32, i32) {
    %c0_i32 = arith.constant 0 : i32
    %c0_i32_0 = arith.constant 0 : i32
    %c0_i32_1 = arith.constant 0 : i32
    return %c0_i32, %c0_i32_0 : i32, i32
  }
  func.func @transform_11(%arg0: i32) -> (i32, i32) {
    %c0_i32 = arith.constant 0 : i32
    %c0_i32_0 = arith.constant 0 : i32
    return %arg0, %c0_i32 : i32, i32
  }
}

</mosaic_0001>

<llo_original>
// kernel: mlp_forward.1
$region0: #{mlp_forward.1}
  #allocation0 [shape = 'u32[]', space=smem, size = 0x4, offset = 0x4, fixed_abs, tag = 'smem constant byte address 0x4 - core index']
  #allocation1 [shape = 'u32[144,128]{1,0:T(1,128)}', space=vmem, size = 0x12000, scoped, tag = 'internal scratch']
  %s0 = inlined_call_operand.vmem [shape: f32[128,784], index: 0, kind: input, shape index: {}]
  %s1 = inlined_call_operand.hbm [shape: bf16[784,640], index: 1, kind: input, shape index: {}]
  %s2 = inlined_call_operand.vmem [shape: f32[1,640], index: 2, kind: input, shape index: {}]
  %s3 = inlined_call_operand.vmem [shape: bf16[640,384], index: 3, kind: input, shape index: {}]
  %s4 = inlined_call_operand.vmem [shape: f32[1,384], index: 4, kind: input, shape index: {}]
  %s5 = inlined_call_operand.vmem [shape: bf16[384,256], index: 5, kind: input, shape index: {}]
  %s6 = inlined_call_operand.vmem [shape: f32[1,256], index: 6, kind: input, shape index: {}]
  %s7 = inlined_call_operand.vmem [shape: bf16[256,128], index: 7, kind: input, shape index: {}]
  %s8 = inlined_call_operand.vmem [shape: f32[1,128], index: 8, kind: input, shape index: {}]
  %s9 = inlined_call_operand.vmem [shape: bf16[128,128], index: 9, kind: input, shape index: {}]
  %s10 = inlined_call_operand.vmem [shape: f32[1,128], index: 10, kind: input, shape index: {}]
  %s11 = inlined_call_operand.vmem [shape: f32[128,128], index: 11, kind: output, shape index: {}]
  %s12 = sld [smem:[#allocation0]]
  $region58: #{mlp_forward.1} parent=0
    _
  %s14 = ssub.s32 1, %s12
  %s15 = scalar_select 0, %s14, %s12
  $region1: #{mlp_forward.1} parent=0
    #allocation2 [shape = 'u8[1003520]{0}', space=vmem, size = 0xf5000, scoped, tag = 'input window, operand 1, single buffered']
    #allocation3 [shape = 's32[1]{0}', space=sflag, size = 0x4, scoped, tag = 'scoped memory for mlp_forward.1']
    %16 = vsyncpa [#allocation3], 0
    // Predicated region
    $region2: #{mlp_forward.1} parent=1 // pred_check
      _
    $region3: #{mlp_forward.1} parent=1 // pred_check_branch
      %18 = sbr.rel (0) target = $region5
    $region4: #{mlp_forward.1} parent=1 // pred_region
      _
    $region5: #{mlp_forward.1} parent=1 // pred_fallthru
      _
    // Predicated region
    $region6: #{mlp_forward.1} parent=1 // pred_check
      _
    $region7: #{mlp_forward.1} parent=1 // pred_check_branch
      %20 = sbr.rel (0) target = $region9
    $region8: #{mlp_forward.1} parent=1 // pred_region
      %s22 = ssub.s32 31360, 31360
      %23 = vsyncadd [#allocation3], %s22
      %s24 = sshll.u32 [#allocation2], 4
      %s25 = int_to_ptr.vmem [resolvable:$true] %s24
      %30 = dma.hbm_to_vmem [thread:$0]  %s1, 31360, %s25, [#allocation3], 320, 320, 20
    $region9: #{mlp_forward.1} parent=1 // pred_fallthru
      _
    // Predicated region
    $region10: #{mlp_forward.1} parent=1 // pred_check
      _
    $region11: #{mlp_forward.1} parent=1 // pred_check_branch
      %32 = sbr.rel (0) target = $region13
    $region12: #{mlp_forward.1} parent=1 // pred_region
      _
    $region13: #{mlp_forward.1} parent=1 // pred_fallthru
      _
    // Predicated region
    $region14: #{mlp_forward.1} parent=1 // pred_check
      _
    $region15: #{mlp_forward.1} parent=1 // pred_check_branch
      %34 = sbr.rel (0) target = $region17
    $region16: #{mlp_forward.1} parent=1 // pred_region
      _
    $region17: #{mlp_forward.1} parent=1 // pred_fallthru
      _
    // Predicated region
    $region18: #{mlp_forward.1} parent=1 // pred_check
      _
    $region19: #{mlp_forward.1} parent=1 // pred_check_branch
      %36 = sbr.rel (0) target = $region21
    $region20: #{mlp_forward.1} parent=1 // pred_region
      _
    $region21: #{mlp_forward.1} parent=1 // pred_fallthru
      _
    // Predicated region
    $region22: #{mlp_forward.1} parent=1 // pred_check
      _
    $region23: #{mlp_forward.1} parent=1 // pred_check_branch
      %38 = sbr.rel (0) target = $region25
    $region24: #{mlp_forward.1} parent=1 // pred_region
      _
    $region25: #{mlp_forward.1} parent=1 // pred_fallthru
      _
    // Predicated region
    $region26: #{mlp_forward.1} parent=1 // pred_check
      _
    $region27: #{mlp_forward.1} parent=1 // pred_check_branch
      %40 = sbr.rel (0) target = $region29
    $region28: #{mlp_forward.1} parent=1 // pred_region
      _
    $region29: #{mlp_forward.1} parent=1 // pred_fallthru
      _
    // Predicated region
    $region30: #{mlp_forward.1} parent=1 // pred_check
      _
    $region31: #{mlp_forward.1} parent=1 // pred_check_branch
      %42 = sbr.rel (0) target = $region33
    $region32: #{mlp_forward.1} parent=1 // pred_region
      _
    $region33: #{mlp_forward.1} parent=1 // pred_fallthru
      _
    // Predicated region
    $region34: #{mlp_forward.1} parent=1 // pred_check
      _
    $region35: #{mlp_forward.1} parent=1 // pred_check_branch
      %44 = sbr.rel (0) target = $region37
    $region36: #{mlp_forward.1} parent=1 // pred_region
      _
    $region37: #{mlp_forward.1} parent=1 // pred_fallthru
      _
    // Predicated region
    $region38: #{mlp_forward.1} parent=1 // pred_check
      _
    $region39: #{mlp_forward.1} parent=1 // pred_check_branch
      %46 = sbr.rel (0) target = $region41
    $region40: #{mlp_forward.1} parent=1 // pred_region
      _
    $region41: #{mlp_forward.1} parent=1 // pred_fallthru
      _
    // Predicated region
    $region42: #{mlp_forward.1} parent=1 // pred_check
      _
    $region43: #{mlp_forward.1} parent=1 // pred_check_branch
      %48 = sbr.rel (0) target = $region45
    $region44: #{mlp_forward.1} parent=1 // pred_region
      _
    $region45: #{mlp_forward.1} parent=1 // pred_fallthru
      _
    // Predicated region
    $region46: #{mlp_forward.1} parent=1 // pred_check
      _
    $region47: #{mlp_forward.1} parent=1 // pred_check_branch
      %50 = sbr.rel (0) target = $region49
    $region48: #{mlp_forward.1} parent=1 // pred_region
      %51 = dma.done [#allocation3], 31360
    $region49: #{mlp_forward.1} parent=1 // pred_fallthru
      _
    %v53 = vld [vmem:[%s0] sm:$0xff]
    %v54 = vld [vmem:[%s0 + $0x8] sm:$0xff]
    %v55 = vld [vmem:[%s0 + $0x10] sm:$0xff]
    %v56 = vld [vmem:[%s0 + $0x18] sm:$0xff]
    %v57 = vld [vmem:[%s0 + $0x20] sm:$0xff]
    %v58 = vld [vmem:[%s0 + $0x28] sm:$0xff]
    %v59 = vld [vmem:[%s0 + $0x30] sm:$0xff]
    %v60 = vld [vmem:[%s0 + $0x38] sm:$0xff]
    %v61 = vld [vmem:[%s0 + $0x40] sm:$0xff]
    %v62 = vld [vmem:[%s0 + $0x48] sm:$0xff]
    %v63 = vld [vmem:[%s0 + $0x50] sm:$0xff]
    %v64 = vld [vmem:[%s0 + $0x58] sm:$0xff]
    %v65 = vld [vmem:[%s0 + $0x60] sm:$0xff]
    %v66 = vld [vmem:[%s0 + $0x68] sm:$0xff]
    %v67 = vld [vmem:[%s0 + $0x70] sm:$0xff]
    %v68 = vld [vmem:[%s0 + $0x78] sm:$0xff]
    %v69 = vld [vmem:[%s0 + $0x80] sm:$0xff]
    %v70 = vld [vmem:[%s0 + $0x88] sm:$0xff]
    %v71 = vld [vmem:[%s0 + $0x90] sm:$0xff]
    %v72 = vld [vmem:[%s0 + $0x98] sm:$0xff]
    %v73 = vld [vmem:[%s0 + $0xa0] sm:$0xff]
    %v74 = vld [vmem:[%s0 + $0xa8] sm:$0xff]
    %v75 = vld [vmem:[%s0 + $0xb0] sm:$0xff]
    %v76 = vld [vmem:[%s0 + $0xb8] sm:$0xff]
    %v77 = vld [vmem:[%s0 + $0xc0] sm:$0xff]
    %v78 = vld [vmem:[%s0 + $0xc8] sm:$0xff]
    %v79 = vld [vmem:[%s0 + $0xd0] sm:$0xff]
    %v80 = vld [vmem:[%s0 + $0xd8] sm:$0xff]
    %v81 = vld [vmem:[%s0 + $0xe0] sm:$0xff]
    %v82 = vld [vmem:[%s0 + $0xe8] sm:$0xff]
    %v83 = vld [vmem:[%s0 + $0xf0] sm:$0xff]
    %v84 = vld [vmem:[%s0 + $0xf8] sm:$0xff]
    %v85 = vld [vmem:[%s0 + $0x100] sm:$0xff]
    %v86 = vld [vmem:[%s0 + $0x108] sm:$0xff]
    %v87 = vld [vmem:[%s0 + $0x110] sm:$0xff]
    %v88 = vld [vmem:[%s0 + $0x118] sm:$0xff]
    %v89 = vld [vmem:[%s0 + $0x120] sm:$0xff]
    %v90 = vld [vmem:[%s0 + $0x128] sm:$0xff]
    %v91 = vld [vmem:[%s0 + $0x130] sm:$0xff]
    %v92 = vld [vmem:[%s0 + $0x138] sm:$0xff]
    %v93 = vld [vmem:[%s0 + $0x140] sm:$0xff]
    %v94 = vld [vmem:[%s0 + $0x148] sm:$0xff]
    %v95 = vld [vmem:[%s0 + $0x150] sm:$0xff]
    %v96 = vld [vmem:[%s0 + $0x158] sm:$0xff]
    %v97 = vld [vmem:[%s0 + $0x160] sm:$0xff]
    %v98 = vld [vmem:[%s0 + $0x168] sm:$0xff]
    %v99 = vld [vmem:[%s0 + $0x170] sm:$0xff]
    %v100 = vld [vmem:[%s0 + $0x178] sm:$0xff]
    %v101 = vld [vmem:[%s0 + $0x180] sm:$0xff]
    %v102 = vld [vmem:[%s0 + $0x188] sm:$0xff]
    %v103 = vld [vmem:[%s0 + $0x190] sm:$0xff]
    %v104 = vld [vmem:[%s0 + $0x198] sm:$0xff]
    %v105 = vld [vmem:[%s0 + $0x1a0] sm:$0xff]
    %v106 = vld [vmem:[%s0 + $0x1a8] sm:$0xff]
    %v107 = vld [vmem:[%s0 + $0x1b0] sm:$0xff]
    %v108 = vld [vmem:[%s0 + $0x1b8] sm:$0xff]
    %v109 = vld [vmem:[%s0 + $0x1c0] sm:$0xff]
    %v110 = vld [vmem:[%s0 + $0x1c8] sm:$0xff]
    %v111 = vld [vmem:[%s0 + $0x1d0] sm:$0xff]
    %v112 = vld [vmem:[%s0 + $0x1d8] sm:$0xff]
    %v113 = vld [vmem:[%s0 + $0x1e0] sm:$0xff]
    %v114 = vld [vmem:[%s0 + $0x1e8] sm:$0xff]
    %v115 = vld [vmem:[%s0 + $0x1f0] sm:$0xff]
    %v116 = vld [vmem:[%s0 + $0x1f8] sm:$0xff]
    %v117 = vld [vmem:[%s0 + $0x200] sm:$0xff]
    %v118 = vld [vmem:[%s0 + $0x208] sm:$0xff]
    %v119 = vld [vmem:[%s0 + $0x210] sm:$0xff]
    %v120 = vld [vmem:[%s0 + $0x218] sm:$0xff]
    %v121 = vld [vmem:[%s0 + $0x220] sm:$0xff]
    %v122 = vld [vmem:[%s0 + $0x228] sm:$0xff]
    %v123 = vld [vmem:[%s0 + $0x230] sm:$0xff]
    %v124 = vld [vmem:[%s0 + $0x238] sm:$0xff]
    %v125 = vld [vmem:[%s0 + $0x240] sm:$0xff]
    %v126 = vld [vmem:[%s0 + $0x248] sm:$0xff]
    %v127 = vld [vmem:[%s0 + $0x250] sm:$0xff]
    %v128 = vld [vmem:[%s0 + $0x258] sm:$0xff]
    %v129 = vld [vmem:[%s0 + $0x260] sm:$0xff]
    %v130 = vld [vmem:[%s0 + $0x268] sm:$0xff]
    %v131 = vld [vmem:[%s0 + $0x270] sm:$0xff]
    %v132 = vld [vmem:[%s0 + $0x278] sm:$0xff]
    %v133 = vld [vmem:[%s0 + $0x280] sm:$0xff]
    %v134 = vld [vmem:[%s0 + $0x288] sm:$0xff]
    %v135 = vld [vmem:[%s0 + $0x290] sm:$0xff]
    %v136 = vld [vmem:[%s0 + $0x298] sm:$0xff]
    %v137 = vld [vmem:[%s0 + $0x2a0] sm:$0xff]
    %v138 = vld [vmem:[%s0 + $0x2a8] sm:$0xff]
    %v139 = vld [vmem:[%s0 + $0x2b0] sm:$0xff]
    %v140 = vld [vmem:[%s0 + $0x2b8] sm:$0xff]
    %v141 = vld [vmem:[%s0 + $0x2c0] sm:$0xff]
    %v142 = vld [vmem:[%s0 + $0x2c8] sm:$0xff]
    %v143 = vld [vmem:[%s0 + $0x2d0] sm:$0xff]
    %v144 = vld [vmem:[%s0 + $0x2d8] sm:$0xff]
    %v145 = vld [vmem:[%s0 + $0x2e0] sm:$0xff]
    %v146 = vld [vmem:[%s0 + $0x2e8] sm:$0xff]
    %v147 = vld [vmem:[%s0 + $0x2f0] sm:$0xff]
    %v148 = vld [vmem:[%s0 + $0x2f8] sm:$0xff]
    %v149 = vld [vmem:[%s0 + $0x300] sm:$0xff]
    %v150 = vld [vmem:[%s0 + $0x308] sm:$0xff]
    %v151 = vld [vmem:[%s0 + $0x310] sm:$0xff]
    %v152 = vld [vmem:[%s0 + $0x318] sm:$0xff]
    %v153 = vld [vmem:[%s0 + $0x320] sm:$0xff]
    %v154 = vld [vmem:[%s0 + $0x328] sm:$0xff]
    %v155 = vld [vmem:[%s0 + $0x330] sm:$0xff]
    %v156 = vld [vmem:[%s0 + $0x338] sm:$0xff]
    %v157 = vld [vmem:[%s0 + $0x340] sm:$0xff]
    %v158 = vld [vmem:[%s0 + $0x348] sm:$0xff]
    %v159 = vld [vmem:[%s0 + $0x350] sm:$0xff]
    %v160 = vld [vmem:[%s0 + $0x358] sm:$0xff]
    %v161 = vld [vmem:[%s0 + $0x360] sm:$0xff]
    %v162 = vld [vmem:[%s0 + $0x368] sm:$0xff]
    %v163 = vld [vmem:[%s0 + $0x370] sm:$0xff]
    %v164 = vld [vmem:[%s0 + $0x378] sm:$0xff]
    %v165 = vpack.c.bf16 %v60, %v53
    %v166 = vpack.c.bf16 %v61, %v54
    %v167 = vpack.c.bf16 %v62, %v55
    %v168 = vpack.c.bf16 %v63, %v56
    %v169 = vpack.c.bf16 %v64, %v57
    %v170 = vpack.c.bf16 %v65, %v58
    %v171 = vpack.c.bf16 %v66, %v59
    %v172 = vpack.c.bf16 %v74, %v67
    %v173 = vpack.c.bf16 %v75, %v68
    %v174 = vpack.c.bf16 %v76, %v69
    %v175 = vpack.c.bf16 %v77, %v70
    %v176 = vpack.c.bf16 %v78, %v71
    %v177 = vpack.c.bf16 %v79, %v72
    %v178 = vpack.c.bf16 %v80, %v73
    %v179 = vpack.c.bf16 %v88, %v81
    %v180 = vpack.c.bf16 %v89, %v82
    %v181 = vpack.c.bf16 %v90, %v83
    %v182 = vpack.c.bf16 %v91, %v84
    %v183 = vpack.c.bf16 %v92, %v85
    %v184 = vpack.c.bf16 %v93, %v86
    %v185 = vpack.c.bf16 %v94, %v87
    %v186 = vpack.c.bf16 %v102, %v95
    %v187 = vpack.c.bf16 %v103, %v96
    %v188 = vpack.c.bf16 %v104, %v97
    %v189 = vpack.c.bf16 %v105, %v98
    %v190 = vpack.c.bf16 %v106, %v99
    %v191 = vpack.c.bf16 %v107, %v100
    %v192 = vpack.c.bf16 %v108, %v101
    %v193 = vpack.c.bf16 %v116, %v109
    %v194 = vpack.c.bf16 %v117, %v110
    %v195 = vpack.c.bf16 %v118, %v111
    %v196 = vpack.c.bf16 %v119, %v112
    %v197 = vpack.c.bf16 %v120, %v113
    %v198 = vpack.c.bf16 %v121, %v114
    %v199 = vpack.c.bf16 %v122, %v115
    %v200 = vpack.c.bf16 %v130, %v123
    %v201 = vpack.c.bf16 %v131, %v124
    %v202 = vpack.c.bf16 %v132, %v125
    %v203 = vpack.c.bf16 %v133, %v126
    %v204 = vpack.c.bf16 %v134, %v127
    %v205 = vpack.c.bf16 %v135, %v128
    %v206 = vpack.c.bf16 %v136, %v129
    %v207 = vpack.c.bf16 %v144, %v137
    %v208 = vpack.c.bf16 %v145, %v138
    %v209 = vpack.c.bf16 %v146, %v139
    %v210 = vpack.c.bf16 %v147, %v140
    %v211 = vpack.c.bf16 %v148, %v141
    %v212 = vpack.c.bf16 %v149, %v142
    %v213 = vpack.c.bf16 %v150, %v143
    %v214 = vpack.c.bf16 %v158, %v151
    %v215 = vpack.c.bf16 %v159, %v152
    %v216 = vpack.c.bf16 %v160, %v153
    %v217 = vpack.c.bf16 %v161, %v154
    %v218 = vpack.c.bf16 %v162, %v155
    %v219 = vpack.c.bf16 %v163, %v156
    %v220 = vpack.c.bf16 %v164, %v157
    %v221 = vld [vmem:[#allocation2] sm:$0xff]
    %v222 = vld [vmem:[#allocation2 + $0x8] sm:$0xff]
    %v223 = vld [vmem:[#allocation2 + $0x10] sm:$0xf]
    %v224 = vld [vmem:[#allocation2 + $0x14] sm:$0xff]
    %v225 = vld [vmem:[#allocation2 + $0x1c] sm:$0xff]
    %v226 = vld [vmem:[#allocation2 + $0x24] sm:$0xf]
    %v227 = vld [vmem:[#allocation2 + $0x28] sm:$0xff]
    %v228 = vld [vmem:[#allocation2 + $0x30] sm:$0xff]
    %v229 = vld [vmem:[#allocation2 + $0x38] sm:$0xf]
    %v230 = vld [vmem:[#allocation2 + $0x3c] sm:$0xff]
    %v231 = vld [vmem:[#allocation2 + $0x44] sm:$0xff]
    %v232 = vld [vmem:[#allocation2 + $0x4c] sm:$0xf]
    %v233 = vld [vmem:[#allocation2 + $0x50] sm:$0xff]
    %v234 = vld [vmem:[#allocation2 + $0x58] sm:$0xff]
    %v235 = vld [vmem:[#allocation2 + $0x60] sm:$0xf]
    %v236 = vld [vmem:[#allocation2 + $0x64] sm:$0xff]
    %v237 = vld [vmem:[#allocation2 + $0x6c] sm:$0xff]
    %v238 = vld [vmem:[#allocation2 + $0x74] sm:$0xf]
    %v239 = vld [vmem:[#allocation2 + $0x78] sm:$0xff]
    %v240 = vld [vmem:[#allocation2 + $0x80] sm:$0xff]
    %v241 = vld [vmem:[#allocation2 + $0x88] sm:$0xf]
    %v242 = vld [vmem:[#allocation2 + $0x8c] sm:$0xff]
    %v243 = vld [vmem:[#allocation2 + $0x94] sm:$0xff]
    %v244 = vld [vmem:[#allocation2 + $0x9c] sm:$0xf]
    %v245 = vld [vmem:[#allocation2 + $0xa0] sm:$0xff]
    %v246 = vld [vmem:[#allocation2 + $0xa8] sm:$0xff]
    %v247 = vld [vmem:[#allocation2 + $0xb0] sm:$0xf]
    %v248 = vld [vmem:[#allocation2 + $0xb4] sm:$0xff]
    %v249 = vld [vmem:[#allocation2 + $0xbc] sm:$0xff]
    %v250 = vld [vmem:[#allocation2 + $0xc4] sm:$0xf]
    %v251 = vld [vmem:[#allocation2 + $0xc8] sm:$0xff]
    %v252 = vld [vmem:[#allocation2 + $0xd0] sm:$0xff]
    %v253 = vld [vmem:[#allocation2 + $0xd8] sm:$0xf]
    %v254 = vld [vmem:[#allocation2 + $0xdc] sm:$0xff]
    %v255 = vld [vmem:[#allocation2 + $0xe4] sm:$0xff]
    %v256 = vld [vmem:[#allocation2 + $0xec] sm:$0xf]
    %v257 = vld [vmem:[#allocation2 + $0xf0] sm:$0xff]
    %v258 = vld [vmem:[#allocation2 + $0xf8] sm:$0xff]
    %v259 = vld [vmem:[#allocation2 + $0x100] sm:$0xf]
    %v260 = vld [vmem:[#allocation2 + $0x104] sm:$0xff]
    %v261 = vld [vmem:[#allocation2 + $0x10c] sm:$0xff]
    %v262 = vld [vmem:[#allocation2 + $0x114] sm:$0xf]
    %v263 = vld [vmem:[#allocation2 + $0x118] sm:$0xff]
    %v264 = vld [vmem:[#allocation2 + $0x120] sm:$0xff]
    %v265 = vld [vmem:[#allocation2 + $0x128] sm:$0xf]
    %v266 = vld [vmem:[#allocation2 + $0x12c] sm:$0xff]
    %v267 = vld [vmem:[#allocation2 + $0x134] sm:$0xff]
    %v268 = vld [vmem:[#allocation2 + $0x13c] sm:$0xf]
    %v269 = vld [vmem:[#allocation2 + $0x140] sm:$0xff]
    %v270 = vld [vmem:[#allocation2 + $0x148] sm:$0xff]
    %v271 = vld [vmem:[#allocation2 + $0x150] sm:$0xf]
    %v272 = vld [vmem:[#allocation2 + $0x154] sm:$0xff]
    %v273 = vld [vmem:[#allocation2 + $0x15c] sm:$0xff]
    %v274 = vld [vmem:[#allocation2 + $0x164] sm:$0xf]
    %v275 = vld [vmem:[#allocation2 + $0x168] sm:$0xff]
    %v276 = vld [vmem:[#allocation2 + $0x170] sm:$0xff]
    %v277 = vld [vmem:[#allocation2 + $0x178] sm:$0xf]
    %v278 = vld [vmem:[#allocation2 + $0x17c] sm:$0xff]
    %v279 = vld [vmem:[#allocation2 + $0x184] sm:$0xff]
    %v280 = vld [vmem:[#allocation2 + $0x18c] sm:$0xf]
    %v281 = vld [vmem:[#allocation2 + $0x190] sm:$0xff]
    %v282 = vld [vmem:[#allocation2 + $0x198] sm:$0xff]
    %v283 = vld [vmem:[#allocation2 + $0x1a0] sm:$0xf]
    %v284 = vld [vmem:[#allocation2 + $0x1a4] sm:$0xff]
    %v285 = vld [vmem:[#allocation2 + $0x1ac] sm:$0xff]
    %v286 = vld [vmem:[#allocation2 + $0x1b4] sm:$0xf]
    %v287 = vld [vmem:[#allocation2 + $0x1b8] sm:$0xff]
    %v288 = vld [vmem:[#allocation2 + $0x1c0] sm:$0xff]
    %v289 = vld [vmem:[#allocation2 + $0x1c8] sm:$0xf]
    %v290 = vld [vmem:[#allocation2 + $0x1cc] sm:$0xff]
    %v291 = vld [vmem:[#allocation2 + $0x1d4] sm:$0xff]
    %v292 = vld [vmem:[#allocation2 + $0x1dc] sm:$0xf]
    %v293 = vld [vmem:[#allocation2 + $0x1e0] sm:$0xff]
    %v294 = vld [vmem:[#allocation2 + $0x1e8] sm:$0xff]
    %v295 = vld [vmem:[#allocation2 + $0x1f0] sm:$0xf]
    %v296 = vld [vmem:[#allocation2 + $0x1f4] sm:$0xff]
    %v297 = vld [vmem:[#allocation2 + $0x1fc] sm:$0xff]
    %v298 = vld [vmem:[#allocation2 + $0x204] sm:$0xf]
    %v299 = vld [vmem:[#allocation2 + $0x208] sm:$0xff]
    %v300 = vld [vmem:[#allocation2 + $0x210] sm:$0xff]
    %v301 = vld [vmem:[#allocation2 + $0x218] sm:$0xf]
    %v302 = vld [vmem:[#allocation2 + $0x21c] sm:$0xff]
    %v303 = vld [vmem:[#allocation2 + $0x224] sm:$0xff]
    %v304 = vld [vmem:[#allocation2 + $0x22c] sm:$0xf]
    %v305 = vld [vmem:[#allocation2 + $0x230] sm:$0xff]
    %v306 = vld [vmem:[#allocation2 + $0x238] sm:$0xff]
    %v307 = vld [vmem:[#allocation2 + $0x240] sm:$0xf]
    %v308 = vld [vmem:[#allocation2 + $0x244] sm:$0xff]
    %v309 = vld [vmem:[#allocation2 + $0x24c] sm:$0xff]
    %v310 = vld [vmem:[#allocation2 + $0x254] sm:$0xf]
    %v311 = vld [vmem:[#allocation2 + $0x258] sm:$0xff]
    %v312 = vld [vmem:[#allocation2 + $0x260] sm:$0xff]
    %v313 = vld [vmem:[#allocation2 + $0x268] sm:$0xf]
    %v314 = vld [vmem:[#allocation2 + $0x26c] sm:$0xff]
    %v315 = vld [vmem:[#allocation2 + $0x274] sm:$0xff]
    %v316 = vld [vmem:[#allocation2 + $0x27c] sm:$0xf]
    %v317 = vld [vmem:[#allocation2 + $0x280] sm:$0xff]
    %v318 = vld [vmem:[#allocation2 + $0x288] sm:$0xff]
    %v319 = vld [vmem:[#allocation2 + $0x290] sm:$0xf]
    %v320 = vld [vmem:[#allocation2 + $0x294] sm:$0xff]
    %v321 = vld [vmem:[#allocation2 + $0x29c] sm:$0xff]
    %v322 = vld [vmem:[#allocation2 + $0x2a4] sm:$0xf]
    %v323 = vld [vmem:[#allocation2 + $0x2a8] sm:$0xff]
    %v324 = vld [vmem:[#allocation2 + $0x2b0] sm:$0xff]
    %v325 = vld [vmem:[#allocation2 + $0x2b8] sm:$0xf]
    %v326 = vld [vmem:[#allocation2 + $0x2bc] sm:$0xff]
    %v327 = vld [vmem:[#allocation2 + $0x2c4] sm:$0xff]
    %v328 = vld [vmem:[#allocation2 + $0x2cc] sm:$0xf]
    %v329 = vld [vmem:[#allocation2 + $0x2d0] sm:$0xff]
    %v330 = vld [vmem:[#allocation2 + $0x2d8] sm:$0xff]
    %v331 = vld [vmem:[#allocation2 + $0x2e0] sm:$0xf]
    %v332 = vld [vmem:[#allocation2 + $0x2e4] sm:$0xff]
    %v333 = vld [vmem:[#allocation2 + $0x2ec] sm:$0xff]
    %v334 = vld [vmem:[#allocation2 + $0x2f4] sm:$0xf]
    %v335 = vld [vmem:[#allocation2 + $0x2f8] sm:$0xff]
    %v336 = vld [vmem:[#allocation2 + $0x300] sm:$0xff]
    %v337 = vld [vmem:[#allocation2 + $0x308] sm:$0xf]
    %v338 = vld [vmem:[#allocation2 + $0x30c] sm:$0xff]
    %v339 = vld [vmem:[#allocation2 + $0x314] sm:$0xff]
    %v340 = vld [vmem:[#allocation2 + $0x31c] sm:$0xf]
    %v341 = vld [vmem:[#allocation2 + $0x320] sm:$0xff]
    %v342 = vld [vmem:[#allocation2 + $0x328] sm:$0xff]
    %v343 = vld [vmem:[#allocation2 + $0x330] sm:$0xf]
    %v344 = vld [vmem:[#allocation2 + $0x334] sm:$0xff]
    %v345 = vld [vmem:[#allocation2 + $0x33c] sm:$0xff]
    %v346 = vld [vmem:[#allocation2 + $0x344] sm:$0xf]
    %v347 = vld [vmem:[#allocation2 + $0x348] sm:$0xff]
    %v348 = vld [vmem:[#allocation2 + $0x350] sm:$0xff]
    %v349 = vld [vmem:[#allocation2 + $0x358] sm:$0xf]
    %v350 = vld [vmem:[#allocation2 + $0x35c] sm:$0xff]
    %v351 = vld [vmem:[#allocation2 + $0x364] sm:$0xff]
    %v352 = vld [vmem:[#allocation2 + $0x36c] sm:$0xf]
    %v353 = vld [vmem:[#allocation2 + $0x370] sm:$0xff]
    %v354 = vld [vmem:[#allocation2 + $0x378] sm:$0xff]
    %v355 = vld [vmem:[#allocation2 + $0x380] sm:$0xf]
    %v356 = vld [vmem:[#allocation2 + $0x384] sm:$0xff]
    %v357 = vld [vmem:[#allocation2 + $0x38c] sm:$0xff]
    %v358 = vld [vmem:[#allocation2 + $0x394] sm:$0xf]
    %v359 = vld [vmem:[#allocation2 + $0x398] sm:$0xff]
    %v360 = vld [vmem:[#allocation2 + $0x3a0] sm:$0xff]
    %v361 = vld [vmem:[#allocation2 + $0x3a8] sm:$0xf]
    %v362 = vld [vmem:[#allocation2 + $0x3ac] sm:$0xff]
    %v363 = vld [vmem:[#allocation2 + $0x3b4] sm:$0xff]
    %v364 = vld [vmem:[#allocation2 + $0x3bc] sm:$0xf]
    %v365 = vld [vmem:[#allocation2 + $0x3c0] sm:$0xff]
    %v366 = vld [vmem:[#allocation2 + $0x3c8] sm:$0xff]
    %v367 = vld [vmem:[#allocation2 + $0x3d0] sm:$0xf]
    %v368 = vld [vmem:[#allocation2 + $0x3d4] sm:$0xff]
    %v369 = vld [vmem:[#allocation2 + $0x3dc] sm:$0xff]
    %v370 = vld [vmem:[#allocation2 + $0x3e4] sm:$0xf]
    %v371 = vld [vmem:[#allocation2 + $0x3e8] sm:$0xff]
    %v372 = vld [vmem:[#allocation2 + $0x3f0] sm:$0xff]
    %v373 = vld [vmem:[#allocation2 + $0x3f8] sm:$0xf]
    %v374 = vld [vmem:[#allocation2 + $0x3fc] sm:$0xff]
    %v375 = vld [vmem:[#allocation2 + $0x404] sm:$0xff]
    %v376 = vld [vmem:[#allocation2 + $0x40c] sm:$0xf]
    %v377 = vld [vmem:[#allocation2 + $0x410] sm:$0xff]
    %v378 = vld [vmem:[#allocation2 + $0x418] sm:$0xff]
    %v379 = vld [vmem:[#allocation2 + $0x420] sm:$0xf]
    %v380 = vld [vmem:[#allocation2 + $0x424] sm:$0xff]
    %v381 = vld [vmem:[#allocation2 + $0x42c] sm:$0xff]
    %v382 = vld [vmem:[#allocation2 + $0x434] sm:$0xf]
    %v383 = vld [vmem:[#allocation2 + $0x438] sm:$0xff]
    %v384 = vld [vmem:[#allocation2 + $0x440] sm:$0xff]
    %v385 = vld [vmem:[#allocation2 + $0x448] sm:$0xf]
    %v386 = vld [vmem:[#allocation2 + $0x44c] sm:$0xff]
    %v387 = vld [vmem:[#allocation2 + $0x454] sm:$0xff]
    %v388 = vld [vmem:[#allocation2 + $0x45c] sm:$0xf]
    %v389 = vld [vmem:[#allocation2 + $0x460] sm:$0xff]
    %v390 = vld [vmem:[#allocation2 + $0x468] sm:$0xff]
    %v391 = vld [vmem:[#allocation2 + $0x470] sm:$0xf]
    %v392 = vld [vmem:[#allocation2 + $0x474] sm:$0xff]
    %v393 = vld [vmem:[#allocation2 + $0x47c] sm:$0xff]
    %v394 = vld [vmem:[#allocation2 + $0x484] sm:$0xf]
    %v395 = vld [vmem:[#allocation2 + $0x488] sm:$0xff]
    %v396 = vld [vmem:[#allocation2 + $0x490] sm:$0xff]
    %v397 = vld [vmem:[#allocation2 + $0x498] sm:$0xf]
    %v398 = vld [vmem:[#allocation2 + $0x49c] sm:$0xff]
    %v399 = vld [vmem:[#allocation2 + $0x4a4] sm:$0xff]
    %v400 = vld [vmem:[#allocation2 + $0x4ac] sm:$0xf]
    %v401 = vld [vmem:[#allocation2 + $0x4b0] sm:$0xff]
    %v402 = vld [vmem:[#allocation2 + $0x4b8] sm:$0xff]
    %v403 = vld [vmem:[#allocation2 + $0x4c0] sm:$0xf]
    %v404 = vld [vmem:[#allocation2 + $0x4c4] sm:$0xff]
    %v405 = vld [vmem:[#allocation2 + $0x4cc] sm:$0xff]
    %v406 = vld [vmem:[#allocation2 + $0x4d4] sm:$0xf]
    %v407 = vld [vmem:[#allocation2 + $0x4d8] sm:$0xff]
    %v408 = vld [vmem:[#allocation2 + $0x4e0] sm:$0xff]
    %v409 = vld [vmem:[#allocation2 + $0x4e8] sm:$0xf]
    %v410 = vld [vmem:[#allocation2 + $0x4ec] sm:$0xff]
    %v411 = vld [vmem:[#allocation2 + $0x4f4] sm:$0xff]
    %v412 = vld [vmem:[#allocation2 + $0x4fc] sm:$0xf]
    %v413 = vld [vmem:[#allocation2 + $0x500] sm:$0xff]
    %v414 = vld [vmem:[#allocation2 + $0x508] sm:$0xff]
    %v415 = vld [vmem:[#allocation2 + $0x510] sm:$0xf]
    %v416 = vld [vmem:[#allocation2 + $0x514] sm:$0xff]
    %v417 = vld [vmem:[#allocation2 + $0x51c] sm:$0xff]
    %v418 = vld [vmem:[#allocation2 + $0x524] sm:$0xf]
    %v419 = vld [vmem:[#allocation2 + $0x528] sm:$0xff]
    %v420 = vld [vmem:[#allocation2 + $0x530] sm:$0xff]
    %v421 = vld [vmem:[#allocation2 + $0x538] sm:$0xf]
    %v422 = vld [vmem:[#allocation2 + $0x53c] sm:$0xff]
    %v423 = vld [vmem:[#allocation2 + $0x544] sm:$0xff]
    %v424 = vld [vmem:[#allocation2 + $0x54c] sm:$0xf]
    %v425 = vld [vmem:[#allocation2 + $0x550] sm:$0xff]
    %v426 = vld [vmem:[#allocation2 + $0x558] sm:$0xff]
    %v427 = vld [vmem:[#allocation2 + $0x560] sm:$0xf]
    %v428 = vld [vmem:[#allocation2 + $0x564] sm:$0xff]
    %v429 = vld [vmem:[#allocation2 + $0x56c] sm:$0xff]
    %v430 = vld [vmem:[#allocation2 + $0x574] sm:$0xf]
    %v431 = vld [vmem:[#allocation2 + $0x578] sm:$0xff]
    %v432 = vld [vmem:[#allocation2 + $0x580] sm:$0xff]
    %v433 = vld [vmem:[#allocation2 + $0x588] sm:$0xf]
    %v434 = vld [vmem:[#allocation2 + $0x58c] sm:$0xff]
    %v435 = vld [vmem:[#allocation2 + $0x594] sm:$0xff]
    %v436 = vld [vmem:[#allocation2 + $0x59c] sm:$0xf]
    %v437 = vld [vmem:[#allocation2 + $0x5a0] sm:$0xff]
    %v438 = vld [vmem:[#allocation2 + $0x5a8] sm:$0xff]
    %v439 = vld [vmem:[#allocation2 + $0x5b0] sm:$0xf]
    %v440 = vld [vmem:[#allocation2 + $0x5b4] sm:$0xff]
    %v441 = vld [vmem:[#allocation2 + $0x5bc] sm:$0xff]
    %v442 = vld [vmem:[#allocation2 + $0x5c4] sm:$0xf]
    %v443 = vld [vmem:[#allocation2 + $0x5c8] sm:$0xff]
    %v444 = vld [vmem:[#allocation2 + $0x5d0] sm:$0xff]
    %v445 = vld [vmem:[#allocation2 + $0x5d8] sm:$0xf]
    %v446 = vld [vmem:[#allocation2 + $0x5dc] sm:$0xff]
    %v447 = vld [vmem:[#allocation2 + $0x5e4] sm:$0xff]
    %v448 = vld [vmem:[#allocation2 + $0x5ec] sm:$0xf]
    %v449 = vld [vmem:[#allocation2 + $0x5f0] sm:$0xff]
    %v450 = vld [vmem:[#allocation2 + $0x5f8] sm:$0xff]
    %v451 = vld [vmem:[#allocation2 + $0x600] sm:$0xf]
    %v452 = vld [vmem:[#allocation2 + $0x604] sm:$0xff]
    %v453 = vld [vmem:[#allocation2 + $0x60c] sm:$0xff]
    %v454 = vld [vmem:[#allocation2 + $0x614] sm:$0xf]
    %v455 = vld [vmem:[#allocation2 + $0x618] sm:$0xff]
    %v456 = vld [vmem:[#allocation2 + $0x620] sm:$0xff]
    %v457 = vld [vmem:[#allocation2 + $0x628] sm:$0xf]
    %v458 = vld [vmem:[#allocation2 + $0x62c] sm:$0xff]
    %v459 = vld [vmem:[#allocation2 + $0x634] sm:$0xff]
    %v460 = vld [vmem:[#allocation2 + $0x63c] sm:$0xf]
    %v461 = vld [vmem:[#allocation2 + $0x640] sm:$0xff]
    %v462 = vld [vmem:[#allocation2 + $0x648] sm:$0xff]
    %v463 = vld [vmem:[#allocation2 + $0x650] sm:$0xf]
    %v464 = vld [vmem:[#allocation2 + $0x654] sm:$0xff]
    %v465 = vld [vmem:[#allocation2 + $0x65c] sm:$0xff]
    %v466 = vld [vmem:[#allocation2 + $0x664] sm:$0xf]
    %v467 = vld [vmem:[#allocation2 + $0x668] sm:$0xff]
    %v468 = vld [vmem:[#allocation2 + $0x670] sm:$0xff]
    %v469 = vld [vmem:[#allocation2 + $0x678] sm:$0xf]
    %v470 = vld [vmem:[#allocation2 + $0x67c] sm:$0xff]
    %v471 = vld [vmem:[#allocation2 + $0x684] sm:$0xff]
    %v472 = vld [vmem:[#allocation2 + $0x68c] sm:$0xf]
    %v473 = vld [vmem:[#allocation2 + $0x690] sm:$0xff]
    %v474 = vld [vmem:[#allocation2 + $0x698] sm:$0xff]
    %v475 = vld [vmem:[#allocation2 + $0x6a0] sm:$0xf]
    %v476 = vld [vmem:[#allocation2 + $0x6a4] sm:$0xff]
    %v477 = vld [vmem:[#allocation2 + $0x6ac] sm:$0xff]
    %v478 = vld [vmem:[#allocation2 + $0x6b4] sm:$0xf]
    %v479 = vld [vmem:[#allocation2 + $0x6b8] sm:$0xff]
    %v480 = vld [vmem:[#allocation2 + $0x6c0] sm:$0xff]
    %v481 = vld [vmem:[#allocation2 + $0x6c8] sm:$0xf]
    %v482 = vld [vmem:[#allocation2 + $0x6cc] sm:$0xff]
    %v483 = vld [vmem:[#allocation2 + $0x6d4] sm:$0xff]
    %v484 = vld [vmem:[#allocation2 + $0x6dc] sm:$0xf]
    %v485 = vld [vmem:[#allocation2 + $0x6e0] sm:$0xff]
    %v486 = vld [vmem:[#allocation2 + $0x6e8] sm:$0xff]
    %v487 = vld [vmem:[#allocation2 + $0x6f0] sm:$0xf]
    %v488 = vld [vmem:[#allocation2 + $0x6f4] sm:$0xff]
    %v489 = vld [vmem:[#allocation2 + $0x6fc] sm:$0xff]
    %v490 = vld [vmem:[#allocation2 + $0x704] sm:$0xf]
    %v491 = vld [vmem:[#allocation2 + $0x708] sm:$0xff]
    %v492 = vld [vmem:[#allocation2 + $0x710] sm:$0xff]
    %v493 = vld [vmem:[#allocation2 + $0x718] sm:$0xf]
    %v494 = vld [vmem:[#allocation2 + $0x71c] sm:$0xff]
    %v495 = vld [vmem:[#allocation2 + $0x724] sm:$0xff]
    %v496 = vld [vmem:[#allocation2 + $0x72c] sm:$0xf]
    %v497 = vld [vmem:[#allocation2 + $0x730] sm:$0xff]
    %v498 = vld [vmem:[#allocation2 + $0x738] sm:$0xff]
    %v499 = vld [vmem:[#allocation2 + $0x740] sm:$0xf]
    %v500 = vld [vmem:[#allocation2 + $0x744] sm:$0xff]
    %v501 = vld [vmem:[#allocation2 + $0x74c] sm:$0xff]
    %v502 = vld [vmem:[#allocation2 + $0x754] sm:$0xf]
    %v503 = vld [vmem:[#allocation2 + $0x758] sm:$0xff]
    %v504 = vld [vmem:[#allocation2 + $0x760] sm:$0xff]
    %v505 = vld [vmem:[#allocation2 + $0x768] sm:$0xf]
    %v506 = vld [vmem:[#allocation2 + $0x76c] sm:$0xff]
    %v507 = vld [vmem:[#allocation2 + $0x774] sm:$0xff]
    %v508 = vld [vmem:[#allocation2 + $0x77c] sm:$0xf]
    %v509 = vld [vmem:[#allocation2 + $0x780] sm:$0xff]
    %v510 = vld [vmem:[#allocation2 + $0x788] sm:$0xff]
    %v511 = vld [vmem:[#allocation2 + $0x790] sm:$0xf]
    %v512 = vld [vmem:[#allocation2 + $0x794] sm:$0xff]
    %v513 = vld [vmem:[#allocation2 + $0x79c] sm:$0xff]
    %v514 = vld [vmem:[#allocation2 + $0x7a4] sm:$0xf]
    %v515 = vld [vmem:[%s2] sm:$0x1f]
    %v517 = vlaneseq
    %v518 = vshrl.u32 %v517, 7
    %v519 = vsub.s32 0, %v518
    %v520 = vrot.slane %v515, %v519
    %v521 = vlaneseq
    %v522 = vshrl.u32 %v521, 7
    %v523 = vsub.s32 1, %v522
    %v524 = vrot.slane %v515, %v523
    %v525 = vlaneseq
    %v526 = vshrl.u32 %v525, 7
    %v527 = vsub.s32 2, %v526
    %v528 = vrot.slane %v515, %v527
    %v529 = vlaneseq
    %v530 = vshrl.u32 %v529, 7
    %v531 = vsub.s32 3, %v530
    %v532 = vrot.slane %v515, %v531
    %v533 = vlaneseq
    %v534 = vshrl.u32 %v533, 7
    %v535 = vsub.s32 4, %v534
    %v536 = vrot.slane %v515, %v535
    %v836 = vunpack.c.l.b16 %v221
    %v837 = vunpack.c.h.b16 %v221
    %v838 = vunpack.c.l.b16 %v222
    %v839 = vunpack.c.h.b16 %v222
    %v840 = vunpack.c.l.b16 %v223
    %v841 = vunpack.c.l.b16 %v224
    %v842 = vunpack.c.h.b16 %v224
    %v843 = vunpack.c.l.b16 %v225
    %v844 = vunpack.c.h.b16 %v225
    %v845 = vunpack.c.l.b16 %v226
    %v846 = vunpack.c.l.b16 %v227
    %v847 = vunpack.c.h.b16 %v227
    %v848 = vunpack.c.l.b16 %v228
    %v849 = vunpack.c.h.b16 %v228
    %v850 = vunpack.c.l.b16 %v229
    %v851 = vunpack.c.l.b16 %v230
    %v852 = vunpack.c.h.b16 %v230
    %v853 = vunpack.c.l.b16 %v231
    %v854 = vunpack.c.h.b16 %v231
    %v855 = vunpack.c.l.b16 %v232
    %v856 = vunpack.c.l.b16 %v233
    %v857 = vunpack.c.h.b16 %v233
    %v858 = vunpack.c.l.b16 %v234
    %v859 = vunpack.c.h.b16 %v234
    %v860 = vunpack.c.l.b16 %v235
    %v861 = vunpack.c.l.b16 %v236
    %v862 = vunpack.c.h.b16 %v236
    %v863 = vunpack.c.l.b16 %v237
    %v864 = vunpack.c.h.b16 %v237
    %v865 = vunpack.c.l.b16 %v238
    %v866 = vunpack.c.l.b16 %v239
    %v867 = vunpack.c.h.b16 %v239
    %v868 = vunpack.c.l.b16 %v240
    %v869 = vunpack.c.h.b16 %v240
    %v870 = vunpack.c.l.b16 %v241
    %v871 = vunpack.c.l.b16 %v242
    %v872 = vunpack.c.h.b16 %v242
    %v873 = vunpack.c.l.b16 %v243
    %v874 = vunpack.c.h.b16 %v243
    %v875 = vunpack.c.l.b16 %v244
    %v876 = vunpack.c.l.b16 %v245
    %v877 = vunpack.c.h.b16 %v245
    %v878 = vunpack.c.l.b16 %v246
    %v879 = vunpack.c.h.b16 %v246
    %v880 = vunpack.c.l.b16 %v247
    %v881 = vunpack.c.l.b16 %v248
    %v882 = vunpack.c.h.b16 %v248
    %v883 = vunpack.c.l.b16 %v249
    %v884 = vunpack.c.h.b16 %v249
    %v885 = vunpack.c.l.b16 %v250
    %v886 = vunpack.c.l.b16 %v251
    %v887 = vunpack.c.h.b16 %v251
    %v888 = vunpack.c.l.b16 %v252
    %v889 = vunpack.c.h.b16 %v252
    %v890 = vunpack.c.l.b16 %v253
    %v891 = vunpack.c.l.b16 %v254
    %v892 = vunpack.c.h.b16 %v254
    %v893 = vunpack.c.l.b16 %v255
    %v894 = vunpack.c.h.b16 %v255
    %v895 = vunpack.c.l.b16 %v256
    %v896 = vunpack.c.l.b16 %v257
    %v897 = vunpack.c.h.b16 %v257
    %v898 = vunpack.c.l.b16 %v258
    %v899 = vunpack.c.h.b16 %v258
    %v900 = vunpack.c.l.b16 %v259
    %v901 = vunpack.c.l.b16 %v260
    %v902 = vunpack.c.h.b16 %v260
    %v903 = vunpack.c.l.b16 %v261
    %v904 = vunpack.c.h.b16 %v261
    %v905 = vunpack.c.l.b16 %v262
    %v906 = vunpack.c.l.b16 %v263
    %v907 = vunpack.c.h.b16 %v263
    %v908 = vunpack.c.l.b16 %v264
    %v909 = vunpack.c.h.b16 %v264
    %v910 = vunpack.c.l.b16 %v265
    %v911 = vunpack.c.l.b16 %v266
    %v912 = vunpack.c.h.b16 %v266
    %v913 = vunpack.c.l.b16 %v267
    %v914 = vunpack.c.h.b16 %v267
    %v915 = vunpack.c.l.b16 %v268
    %v916 = vunpack.c.l.b16 %v269
    %v917 = vunpack.c.h.b16 %v269
    %v918 = vunpack.c.l.b16 %v270
    %v919 = vunpack.c.h.b16 %v270
    %v920 = vunpack.c.l.b16 %v271
    %v921 = vunpack.c.l.b16 %v272
    %v922 = vunpack.c.h.b16 %v272
    %v923 = vunpack.c.l.b16 %v273
    %v924 = vunpack.c.h.b16 %v273
    %v925 = vunpack.c.l.b16 %v274
    %v926 = vunpack.c.l.b16 %v275
    %v927 = vunpack.c.h.b16 %v275
    %v928 = vunpack.c.l.b16 %v276
    %v929 = vunpack.c.h.b16 %v276
    %v930 = vunpack.c.l.b16 %v277
    %v931 = vunpack.c.l.b16 %v278
    %v932 = vunpack.c.h.b16 %v278
    %v933 = vunpack.c.l.b16 %v279
    %v934 = vunpack.c.h.b16 %v279
    %v935 = vunpack.c.l.b16 %v280
    %v936 = vunpack.c.l.b16 %v281
    %v937 = vunpack.c.h.b16 %v281
    %v938 = vunpack.c.l.b16 %v282
    %v939 = vunpack.c.h.b16 %v282
    %v940 = vunpack.c.l.b16 %v283
    %v941 = vunpack.c.l.b16 %v284
    %v942 = vunpack.c.h.b16 %v284
    %v943 = vunpack.c.l.b16 %v285
    %v944 = vunpack.c.h.b16 %v285
    %v945 = vunpack.c.l.b16 %v286
    %v946 = vunpack.c.l.b16 %v287
    %v947 = vunpack.c.h.b16 %v287
    %v948 = vunpack.c.l.b16 %v288
    %v949 = vunpack.c.h.b16 %v288
    %v950 = vunpack.c.l.b16 %v289
    %v951 = vunpack.c.l.b16 %v290
    %v952 = vunpack.c.h.b16 %v290
    %v953 = vunpack.c.l.b16 %v291
    %v954 = vunpack.c.h.b16 %v291
    %v955 = vunpack.c.l.b16 %v292
    %v956 = vunpack.c.l.b16 %v293
    %v957 = vunpack.c.h.b16 %v293
    %v958 = vunpack.c.l.b16 %v294
    %v959 = vunpack.c.h.b16 %v294
    %v960 = vunpack.c.l.b16 %v295
    %v961 = vunpack.c.l.b16 %v296
    %v962 = vunpack.c.h.b16 %v296
    %v963 = vunpack.c.l.b16 %v297
    %v964 = vunpack.c.h.b16 %v297
    %v965 = vunpack.c.l.b16 %v298
    %v966 = vunpack.c.l.b16 %v299
    %v967 = vunpack.c.h.b16 %v299
    %v968 = vunpack.c.l.b16 %v300
    %v969 = vunpack.c.h.b16 %v300
    %v970 = vunpack.c.l.b16 %v301
    %v971 = vunpack.c.l.b16 %v302
    %v972 = vunpack.c.h.b16 %v302
    %v973 = vunpack.c.l.b16 %v303
    %v974 = vunpack.c.h.b16 %v303
    %v975 = vunpack.c.l.b16 %v304
    %v976 = vunpack.c.l.b16 %v305
    %v977 = vunpack.c.h.b16 %v305
    %v978 = vunpack.c.l.b16 %v306
    %v979 = vunpack.c.h.b16 %v306
    %v980 = vunpack.c.l.b16 %v307
    %v981 = vunpack.c.l.b16 %v308
    %v982 = vunpack.c.h.b16 %v308
    %v983 = vunpack.c.l.b16 %v309
    %v984 = vunpack.c.h.b16 %v309
    %v985 = vunpack.c.l.b16 %v310
    %v986 = vunpack.c.l.b16 %v311
    %v987 = vunpack.c.h.b16 %v311
    %v988 = vunpack.c.l.b16 %v312
    %v989 = vunpack.c.h.b16 %v312
    %v990 = vunpack.c.l.b16 %v313
    %v991 = vunpack.c.l.b16 %v314
    %v992 = vunpack.c.h.b16 %v314
    %v993 = vunpack.c.l.b16 %v315
    %v994 = vunpack.c.h.b16 %v315
    %v995 = vunpack.c.l.b16 %v316
    %v996 = vunpack.c.l.b16 %v317
    %v997 = vunpack.c.h.b16 %v317
    %v998 = vunpack.c.l.b16 %v318
    %v999 = vunpack.c.h.b16 %v318
    %v1000 = vunpack.c.l.b16 %v319
    %v1001 = vunpack.c.l.b16 %v320
    %v1002 = vunpack.c.h.b16 %v320
    %v1003 = vunpack.c.l.b16 %v321
    %v1004 = vunpack.c.h.b16 %v321
    %v1005 = vunpack.c.l.b16 %v322
    %v1006 = vunpack.c.l.b16 %v323
    %v1007 = vunpack.c.h.b16 %v323
    %v1008 = vunpack.c.l.b16 %v324
    %v1009 = vunpack.c.h.b16 %v324
    %v1010 = vunpack.c.l.b16 %v325
    %v1011 = vunpack.c.l.b16 %v326
    %v1012 = vunpack.c.h.b16 %v326
    %v1013 = vunpack.c.l.b16 %v327
    %v1014 = vunpack.c.h.b16 %v327
    %v1015 = vunpack.c.l.b16 %v328
    %v1016 = vunpack.c.l.b16 %v329
    %v1017 = vunpack.c.h.b16 %v329
    %v1018 = vunpack.c.l.b16 %v330
    %v1019 = vunpack.c.h.b16 %v330
    %v1020 = vunpack.c.l.b16 %v331
    %v1021 = vunpack.c.l.b16 %v332
    %v1022 = vunpack.c.h.b16 %v332
    %v1023 = vunpack.c.l.b16 %v333
    %v1024 = vunpack.c.h.b16 %v333
    %v1025 = vunpack.c.l.b16 %v334
    %v1026 = vunpack.c.l.b16 %v335
    %v1027 = vunpack.c.h.b16 %v335
    %v1028 = vunpack.c.l.b16 %v336
    %v1029 = vunpack.c.h.b16 %v336
    %v1030 = vunpack.c.l.b16 %v337
    %v1031 = vunpack.c.l.b16 %v338
    %v1032 = vunpack.c.h.b16 %v338
    %v1033 = vunpack.c.l.b16 %v339
    %v1034 = vunpack.c.h.b16 %v339
    %v1035 = vunpack.c.l.b16 %v340
    %v1036 = vunpack.c.l.b16 %v341
    %v1037 = vunpack.c.h.b16 %v341
    %v1038 = vunpack.c.l.b16 %v342
    %v1039 = vunpack.c.h.b16 %v342
    %v1040 = vunpack.c.l.b16 %v343
    %v1041 = vunpack.c.l.b16 %v344
    %v1042 = vunpack.c.h.b16 %v344
    %v1043 = vunpack.c.l.b16 %v345
    %v1044 = vunpack.c.h.b16 %v345
    %v1045 = vunpack.c.l.b16 %v346
    %v1046 = vunpack.c.l.b16 %v347
    %v1047 = vunpack.c.h.b16 %v347
    %v1048 = vunpack.c.l.b16 %v348
    %v1049 = vunpack.c.h.b16 %v348
    %v1050 = vunpack.c.l.b16 %v349
    %v1051 = vunpack.c.l.b16 %v350
    %v1052 = vunpack.c.h.b16 %v350
    %v1053 = vunpack.c.l.b16 %v351
    %v1054 = vunpack.c.h.b16 %v351
    %v1055 = vunpack.c.l.b16 %v352
    %v1056 = vunpack.c.l.b16 %v353
    %v1057 = vunpack.c.h.b16 %v353
    %v1058 = vunpack.c.l.b16 %v354
    %v1059 = vunpack.c.h.b16 %v354
    %v1060 = vunpack.c.l.b16 %v355
    %v1061 = vunpack.c.l.b16 %v356
    %v1062 = vunpack.c.h.b16 %v356
    %v1063 = vunpack.c.l.b16 %v357
    %v1064 = vunpack.c.h.b16 %v357
    %v1065 = vunpack.c.l.b16 %v358
    %v1066 = vunpack.c.l.b16 %v359
    %v1067 = vunpack.c.h.b16 %v359
    %v1068 = vunpack.c.l.b16 %v360
    %v1069 = vunpack.c.h.b16 %v360
    %v1070 = vunpack.c.l.b16 %v361
    %v1071 = vunpack.c.l.b16 %v362
    %v1072 = vunpack.c.h.b16 %v362
    %v1073 = vunpack.c.l.b16 %v363
    %v1074 = vunpack.c.h.b16 %v363
    %v1075 = vunpack.c.l.b16 %v364
    %v1076 = vunpack.c.l.b16 %v365
    %v1077 = vunpack.c.h.b16 %v365
    %v1078 = vunpack.c.l.b16 %v366
    %v1079 = vunpack.c.h.b16 %v366
    %v1080 = vunpack.c.l.b16 %v367
    %v1081 = vunpack.c.l.b16 %v368
    %v1082 = vunpack.c.h.b16 %v368
    %v1083 = vunpack.c.l.b16 %v369
    %v1084 = vunpack.c.h.b16 %v369
    %v1085 = vunpack.c.l.b16 %v370
    %v1086 = vunpack.c.l.b16 %v371
    %v1087 = vunpack.c.h.b16 %v371
    %v1088 = vunpack.c.l.b16 %v372
    %v1089 = vunpack.c.h.b16 %v372
    %v1090 = vunpack.c.l.b16 %v373
    %v1091 = vunpack.c.l.b16 %v374
    %v1092 = vunpack.c.h.b16 %v374
    %v1093 = vunpack.c.l.b16 %v375
    %v1094 = vunpack.c.h.b16 %v375
    %v1095 = vunpack.c.l.b16 %v376
    %v1096 = vunpack.c.l.b16 %v377
    %v1097 = vunpack.c.h.b16 %v377
    %v1098 = vunpack.c.l.b16 %v378
    %v1099 = vunpack.c.h.b16 %v378
    %v1100 = vunpack.c.l.b16 %v379
    %v1101 = vunpack.c.l.b16 %v380
    %v1102 = vunpack.c.h.b16 %v380
    %v1103 = vunpack.c.l.b16 %v381
    %v1104 = vunpack.c.h.b16 %v381
    %v1105 = vunpack.c.l.b16 %v382
    %v1106 = vunpack.c.l.b16 %v383
    %v1107 = vunpack.c.h.b16 %v383
    %v1108 = vunpack.c.l.b16 %v384
    %v1109 = vunpack.c.h.b16 %v384
    %v1110 = vunpack.c.l.b16 %v385
    %v1111 = vunpack.c.l.b16 %v386
    %v1112 = vunpack.c.h.b16 %v386
    %v1113 = vunpack.c.l.b16 %v387
    %v1114 = vunpack.c.h.b16 %v387
    %v1115 = vunpack.c.l.b16 %v388
    %v1116 = vunpack.c.l.b16 %v389
    %v1117 = vunpack.c.h.b16 %v389
    %v1118 = vunpack.c.l.b16 %v390
    %v1119 = vunpack.c.h.b16 %v390
    %v1120 = vunpack.c.l.b16 %v391
    %v1121 = vunpack.c.l.b16 %v392
    %v1122 = vunpack.c.h.b16 %v392
    %v1123 = vunpack.c.l.b16 %v393
    %v1124 = vunpack.c.h.b16 %v393
    %v1125 = vunpack.c.l.b16 %v394
    %v1126 = vunpack.c.l.b16 %v395
    %v1127 = vunpack.c.h.b16 %v395
    %v1128 = vunpack.c.l.b16 %v396
    %v1129 = vunpack.c.h.b16 %v396
    %v1130 = vunpack.c.l.b16 %v397
    %v1131 = vunpack.c.l.b16 %v398
    %v1132 = vunpack.c.h.b16 %v398
    %v1133 = vunpack.c.l.b16 %v399
    %v1134 = vunpack.c.h.b16 %v399
    %v1135 = vunpack.c.l.b16 %v400
    %v1136 = vunpack.c.l.b16 %v401
    %v1137 = vunpack.c.h.b16 %v401
    %v1138 = vunpack.c.l.b16 %v402
    %v1139 = vunpack.c.h.b16 %v402
    %v1140 = vunpack.c.l.b16 %v403
    %v1141 = vunpack.c.l.b16 %v404
    %v1142 = vunpack.c.h.b16 %v404
    %v1143 = vunpack.c.l.b16 %v405
    %v1144 = vunpack.c.h.b16 %v405
    %v1145 = vunpack.c.l.b16 %v406
    %v1146 = vunpack.c.l.b16 %v407
    %v1147 = vunpack.c.h.b16 %v407
    %v1148 = vunpack.c.l.b16 %v408
    %v1149 = vunpack.c.h.b16 %v408
    %v1150 = vunpack.c.l.b16 %v409
    %v1151 = vunpack.c.l.b16 %v410
    %v1152 = vunpack.c.h.b16 %v410
    %v1153 = vunpack.c.l.b16 %v411
    %v1154 = vunpack.c.h.b16 %v411
    %v1155 = vunpack.c.l.b16 %v412
    %v1156 = vunpack.c.l.b16 %v413
    %v1157 = vunpack.c.h.b16 %v413
    %v1158 = vunpack.c.l.b16 %v414
    %v1159 = vunpack.c.h.b16 %v414
    %v1160 = vunpack.c.l.b16 %v415
    %v1161 = vunpack.c.l.b16 %v416
    %v1162 = vunpack.c.h.b16 %v416
    %v1163 = vunpack.c.l.b16 %v417
    %v1164 = vunpack.c.h.b16 %v417
    %v1165 = vunpack.c.l.b16 %v418
    %v1166 = vunpack.c.l.b16 %v419
    %v1167 = vunpack.c.h.b16 %v419
    %v1168 = vunpack.c.l.b16 %v420
    %v1169 = vunpack.c.h.b16 %v420
    %v1170 = vunpack.c.l.b16 %v421
    %v1171 = vunpack.c.l.b16 %v422
    %v1172 = vunpack.c.h.b16 %v422
    %v1173 = vunpack.c.l.b16 %v423
    %v1174 = vunpack.c.h.b16 %v423
    %v1175 = vunpack.c.l.b16 %v424
    %v1176 = vunpack.c.l.b16 %v425
    %v1177 = vunpack.c.h.b16 %v425
    %v1178 = vunpack.c.l.b16 %v426
    %v1179 = vunpack.c.h.b16 %v426
    %v1180 = vunpack.c.l.b16 %v427
    %v1181 = vunpack.c.l.b16 %v428
    %v1182 = vunpack.c.h.b16 %v428
    %v1183 = vunpack.c.l.b16 %v429
    %v1184 = vunpack.c.h.b16 %v429
    %v1185 = vunpack.c.l.b16 %v430
    %v1186 = vunpack.c.l.b16 %v431
    %v1187 = vunpack.c.h.b16 %v431
    %v1188 = vunpack.c.l.b16 %v432
    %v1189 = vunpack.c.h.b16 %v432
    %v1190 = vunpack.c.l.b16 %v433
    %v1191 = vunpack.c.l.b16 %v434
    %v1192 = vunpack.c.h.b16 %v434
    %v1193 = vunpack.c.l.b16 %v435
    %v1194 = vunpack.c.h.b16 %v435
    %v1195 = vunpack.c.l.b16 %v436
    %v1196 = vunpack.c.l.b16 %v437
    %v1197 = vunpack.c.h.b16 %v437
    %v1198 = vunpack.c.l.b16 %v438
    %v1199 = vunpack.c.h.b16 %v438
    %v1200 = vunpack.c.l.b16 %v439
    %v1201 = vunpack.c.l.b16 %v440
    %v1202 = vunpack.c.h.b16 %v440
    %v1203 = vunpack.c.l.b16 %v441
    %v1204 = vunpack.c.h.b16 %v441
    %v1205 = vunpack.c.l.b16 %v442
    %v1206 = vunpack.c.l.b16 %v443
    %v1207 = vunpack.c.h.b16 %v443
    %v1208 = vunpack.c.l.b16 %v444
    %v1209 = vunpack.c.h.b16 %v444
    %v1210 = vunpack.c.l.b16 %v445
    %v1211 = vunpack.c.l.b16 %v446
    %v1212 = vunpack.c.h.b16 %v446
    %v1213 = vunpack.c.l.b16 %v447
    %v1214 = vunpack.c.h.b16 %v447
    %v1215 = vunpack.c.l.b16 %v448
    %v1216 = vunpack.c.l.b16 %v449
    %v1217 = vunpack.c.h.b16 %v449
    %v1218 = vunpack.c.l.b16 %v450
    %v1219 = vunpack.c.h.b16 %v450
    %v1220 = vunpack.c.l.b16 %v451
    %v1221 = vunpack.c.l.b16 %v452
    %v1222 = vunpack.c.h.b16 %v452
    %v1223 = vunpack.c.l.b16 %v453
    %v1224 = vunpack.c.h.b16 %v453
    %v1225 = vunpack.c.l.b16 %v454
    %v1226 = vunpack.c.l.b16 %v455
    %v1227 = vunpack.c.h.b16 %v455
    %v1228 = vunpack.c.l.b16 %v456
    %v1229 = vunpack.c.h.b16 %v456
    %v1230 = vunpack.c.l.b16 %v457
    %v1231 = vunpack.c.l.b16 %v458
    %v1232 = vunpack.c.h.b16 %v458
    %v1233 = vunpack.c.l.b16 %v459
    %v1234 = vunpack.c.h.b16 %v459
    %v1235 = vunpack.c.l.b16 %v460
    %v1236 = vunpack.c.l.b16 %v461
    %v1237 = vunpack.c.h.b16 %v461
    %v1238 = vunpack.c.l.b16 %v462
    %v1239 = vunpack.c.h.b16 %v462
    %v1240 = vunpack.c.l.b16 %v463
    %v1241 = vunpack.c.l.b16 %v464
    %v1242 = vunpack.c.h.b16 %v464
    %v1243 = vunpack.c.l.b16 %v465
    %v1244 = vunpack.c.h.b16 %v465
    %v1245 = vunpack.c.l.b16 %v466
    %v1246 = vunpack.c.l.b16 %v467
    %v1247 = vunpack.c.h.b16 %v467
    %v1248 = vunpack.c.l.b16 %v468
    %v1249 = vunpack.c.h.b16 %v468
    %v1250 = vunpack.c.l.b16 %v469
    %v1251 = vunpack.c.l.b16 %v470
    %v1252 = vunpack.c.h.b16 %v470
    %v1253 = vunpack.c.l.b16 %v471
    %v1254 = vunpack.c.h.b16 %v471
    %v1255 = vunpack.c.l.b16 %v472
    %v1256 = vunpack.c.l.b16 %v473
    %v1257 = vunpack.c.h.b16 %v473
    %v1258 = vunpack.c.l.b16 %v474
    %v1259 = vunpack.c.h.b16 %v474
    %v1260 = vunpack.c.l.b16 %v475
    %v1261 = vunpack.c.l.b16 %v476
    %v1262 = vunpack.c.h.b16 %v476
    %v1263 = vunpack.c.l.b16 %v477
    %v1264 = vunpack.c.h.b16 %v477
    %v1265 = vunpack.c.l.b16 %v478
    %v1266 = vunpack.c.l.b16 %v479
    %v1267 = vunpack.c.h.b16 %v479
    %v1268 = vunpack.c.l.b16 %v480
    %v1269 = vunpack.c.h.b16 %v480
    %v1270 = vunpack.c.l.b16 %v481
    %v1271 = vunpack.c.l.b16 %v482
    %v1272 = vunpack.c.h.b16 %v482
    %v1273 = vunpack.c.l.b16 %v483
    %v1274 = vunpack.c.h.b16 %v483
    %v1275 = vunpack.c.l.b16 %v484
    %v1276 = vunpack.c.l.b16 %v485
    %v1277 = vunpack.c.h.b16 %v485
    %v1278 = vunpack.c.l.b16 %v486
    %v1279 = vunpack.c.h.b16 %v486
    %v1280 = vunpack.c.l.b16 %v487
    %v1281 = vunpack.c.l.b16 %v488
    %v1282 = vunpack.c.h.b16 %v488
    %v1283 = vunpack.c.l.b16 %v489
    %v1284 = vunpack.c.h.b16 %v489
    %v1285 = vunpack.c.l.b16 %v490
    %v1286 = vunpack.c.l.b16 %v491
    %v1287 = vunpack.c.h.b16 %v491
    %v1288 = vunpack.c.l.b16 %v492
    %v1289 = vunpack.c.h.b16 %v492
    %v1290 = vunpack.c.l.b16 %v493
    %v1291 = vunpack.c.l.b16 %v494
    %v1292 = vunpack.c.h.b16 %v494
    %v1293 = vunpack.c.l.b16 %v495
    %v1294 = vunpack.c.h.b16 %v495
    %v1295 = vunpack.c.l.b16 %v496
    %v1296 = vunpack.c.l.b16 %v497
    %v1297 = vunpack.c.h.b16 %v497
    %v1298 = vunpack.c.l.b16 %v498
    %v1299 = vunpack.c.h.b16 %v498
    %v1300 = vunpack.c.l.b16 %v499
    %v1301 = vunpack.c.l.b16 %v500
    %v1302 = vunpack.c.h.b16 %v500
    %v1303 = vunpack.c.l.b16 %v501
    %v1304 = vunpack.c.h.b16 %v501
    %v1305 = vunpack.c.l.b16 %v502
    %v1306 = vunpack.c.l.b16 %v503
    %v1307 = vunpack.c.h.b16 %v503
    %v1308 = vunpack.c.l.b16 %v504
    %v1309 = vunpack.c.h.b16 %v504
    %v1310 = vunpack.c.l.b16 %v505
    %v1311 = vunpack.c.l.b16 %v506
    %v1312 = vunpack.c.h.b16 %v506
    %v1313 = vunpack.c.l.b16 %v507
    %v1314 = vunpack.c.h.b16 %v507
    %v1315 = vunpack.c.l.b16 %v508
    %v1316 = vunpack.c.l.b16 %v509
    %v1317 = vunpack.c.h.b16 %v509
    %v1318 = vunpack.c.l.b16 %v510
    %v1319 = vunpack.c.h.b16 %v510
    %v1320 = vunpack.c.l.b16 %v511
    %v1321 = vunpack.c.l.b16 %v512
    %v1322 = vunpack.c.h.b16 %v512
    %v1323 = vunpack.c.l.b16 %v513
    %v1324 = vunpack.c.h.b16 %v513
    %v1325 = vunpack.c.l.b16 %v514
    %v1326 = vpack.c.b16 %v841, %v836
    %v1327 = vpack.c.b16 %v842, %v837
    %v1328 = vpack.c.b16 %v843, %v838
    %v1329 = vpack.c.b16 %v844, %v839
    %v1330 = vpack.c.b16 %v845, %v840
    %v1331 = vpack.c.b16 %v851, %v846
    %v1332 = vpack.c.b16 %v852, %v847
    %v1333 = vpack.c.b16 %v853, %v848
    %v1334 = vpack.c.b16 %v854, %v849
    %v1335 = vpack.c.b16 %v855, %v850
    %v1336 = vpack.c.b16 %v861, %v856
    %v1337 = vpack.c.b16 %v862, %v857
    %v1338 = vpack.c.b16 %v863, %v858
    %v1339 = vpack.c.b16 %v864, %v859
    %v1340 = vpack.c.b16 %v865, %v860
    %v1341 = vpack.c.b16 %v871, %v866
    %v1342 = vpack.c.b16 %v872, %v867
    %v1343 = vpack.c.b16 %v873, %v868
    %v1344 = vpack.c.b16 %v874, %v869
    %v1345 = vpack.c.b16 %v875, %v870
    %v1346 = vpack.c.b16 %v881, %v876
    %v1347 = vpack.c.b16 %v882, %v877
    %v1348 = vpack.c.b16 %v883, %v878
    %v1349 = vpack.c.b16 %v884, %v879
    %v1350 = vpack.c.b16 %v885, %v880
    %v1351 = vpack.c.b16 %v891, %v886
    %v1352 = vpack.c.b16 %v892, %v887
    %v1353 = vpack.c.b16 %v893, %v888
    %v1354 = vpack.c.b16 %v894, %v889
    %v1355 = vpack.c.b16 %v895, %v890
    %v1356 = vpack.c.b16 %v901, %v896
    %v1357 = vpack.c.b16 %v902, %v897
    %v1358 = vpack.c.b16 %v903, %v898
    %v1359 = vpack.c.b16 %v904, %v899
    %v1360 = vpack.c.b16 %v905, %v900
    %v1361 = vpack.c.b16 %v911, %v906
    %v1362 = vpack.c.b16 %v912, %v907
    %v1363 = vpack.c.b16 %v913, %v908
    %v1364 = vpack.c.b16 %v914, %v909
    %v1365 = vpack.c.b16 %v915, %v910
    %v1366 = vpack.c.b16 %v921, %v916
    %v1367 = vpack.c.b16 %v922, %v917
    %v1368 = vpack.c.b16 %v923, %v918
    %v1369 = vpack.c.b16 %v924, %v919
    %v1370 = vpack.c.b16 %v925, %v920
    %v1371 = vpack.c.b16 %v931, %v926
    %v1372 = vpack.c.b16 %v932, %v927
    %v1373 = vpack.c.b16 %v933, %v928
    %v1374 = vpack.c.b16 %v934, %v929
    %v1375 = vpack.c.b16 %v935, %v930
    %v1376 = vpack.c.b16 %v941, %v936
    %v1377 = vpack.c.b16 %v942, %v937
    %v1378 = vpack.c.b16 %v943, %v938
    %v1379 = vpack.c.b16 %v944, %v939
    %v1380 = vpack.c.b16 %v945, %v940
    %v1381 = vpack.c.b16 %v951, %v946
    %v1382 = vpack.c.b16 %v952, %v947
    %v1383 = vpack.c.b16 %v953, %v948
    %v1384 = vpack.c.b16 %v954, %v949
    %v1385 = vpack.c.b16 %v955, %v950
    %v1386 = vpack.c.b16 %v961, %v956
    %v1387 = vpack.c.b16 %v962, %v957
    %v1388 = vpack.c.b16 %v963, %v958
    %v1389 = vpack.c.b16 %v964, %v959
    %v1390 = vpack.c.b16 %v965, %v960
    %v1391 = vpack.c.b16 %v971, %v966
    %v1392 = vpack.c.b16 %v972, %v967
    %v1393 = vpack.c.b16 %v973, %v968
    %v1394 = vpack.c.b16 %v974, %v969
    %v1395 = vpack.c.b16 %v975, %v970
    %v1396 = vpack.c.b16 %v981, %v976
    %v1397 = vpack.c.b16 %v982, %v977
    %v1398 = vpack.c.b16 %v983, %v978
    %v1399 = vpack.c.b16 %v984, %v979
    %v1400 = vpack.c.b16 %v985, %v980
    %v1401 = vpack.c.b16 %v991, %v986
    %v1402 = vpack.c.b16 %v992, %v987
    %v1403 = vpack.c.b16 %v993, %v988
    %v1404 = vpack.c.b16 %v994, %v989
    %v1405 = vpack.c.b16 %v995, %v990
    %v1406 = vpack.c.b16 %v1001, %v996
    %v1407 = vpack.c.b16 %v1002, %v997
    %v1408 = vpack.c.b16 %v1003, %v998
    %v1409 = vpack.c.b16 %v1004, %v999
    %v1410 = vpack.c.b16 %v1005, %v1000
    %v1411 = vpack.c.b16 %v1011, %v1006
    %v1412 = vpack.c.b16 %v1012, %v1007
    %v1413 = vpack.c.b16 %v1013, %v1008
    %v1414 = vpack.c.b16 %v1014, %v1009
    %v1415 = vpack.c.b16 %v1015, %v1010
    %v1416 = vpack.c.b16 %v1021, %v1016
    %v1417 = vpack.c.b16 %v1022, %v1017
    %v1418 = vpack.c.b16 %v1023, %v1018
    %v1419 = vpack.c.b16 %v1024, %v1019
    %v1420 = vpack.c.b16 %v1025, %v1020
    %v1421 = vpack.c.b16 %v1031, %v1026
    %v1422 = vpack.c.b16 %v1032, %v1027
    %v1423 = vpack.c.b16 %v1033, %v1028
    %v1424 = vpack.c.b16 %v1034, %v1029
    %v1425 = vpack.c.b16 %v1035, %v1030
    %v1426 = vpack.c.b16 %v1041, %v1036
    %v1427 = vpack.c.b16 %v1042, %v1037
    %v1428 = vpack.c.b16 %v1043, %v1038
    %v1429 = vpack.c.b16 %v1044, %v1039
    %v1430 = vpack.c.b16 %v1045, %v1040
    %v1431 = vpack.c.b16 %v1051, %v1046
    %v1432 = vpack.c.b16 %v1052, %v1047
    %v1433 = vpack.c.b16 %v1053, %v1048
    %v1434 = vpack.c.b16 %v1054, %v1049
    %v1435 = vpack.c.b16 %v1055, %v1050
    %v1436 = vpack.c.b16 %v1061, %v1056
    %v1437 = vpack.c.b16 %v1062, %v1057
    %v1438 = vpack.c.b16 %v1063, %v1058
    %v1439 = vpack.c.b16 %v1064, %v1059
    %v1440 = vpack.c.b16 %v1065, %v1060
    %v1441 = vpack.c.b16 %v1071, %v1066
    %v1442 = vpack.c.b16 %v1072, %v1067
    %v1443 = vpack.c.b16 %v1073, %v1068
    %v1444 = vpack.c.b16 %v1074, %v1069
    %v1445 = vpack.c.b16 %v1075, %v1070
    %v1446 = vpack.c.b16 %v1081, %v1076
    %v1447 = vpack.c.b16 %v1082, %v1077
    %v1448 = vpack.c.b16 %v1083, %v1078
    %v1449 = vpack.c.b16 %v1084, %v1079
    %v1450 = vpack.c.b16 %v1085, %v1080
    %v1451 = vpack.c.b16 %v1091, %v1086
    %v1452 = vpack.c.b16 %v1092, %v1087
    %v1453 = vpack.c.b16 %v1093, %v1088
    %v1454 = vpack.c.b16 %v1094, %v1089
    %v1455 = vpack.c.b16 %v1095, %v1090
    %v1456 = vpack.c.b16 %v1101, %v1096
    %v1457 = vpack.c.b16 %v1102, %v1097
    %v1458 = vpack.c.b16 %v1103, %v1098
    %v1459 = vpack.c.b16 %v1104, %v1099
    %v1460 = vpack.c.b16 %v1105, %v1100
    %v1461 = vpack.c.b16 %v1111, %v1106
    %v1462 = vpack.c.b16 %v1112, %v1107
    %v1463 = vpack.c.b16 %v1113, %v1108
    %v1464 = vpack.c.b16 %v1114, %v1109
    %v1465 = vpack.c.b16 %v1115, %v1110
    %v1466 = vpack.c.b16 %v1121, %v1116
    %v1467 = vpack.c.b16 %v1122, %v1117
    %v1468 = vpack.c.b16 %v1123, %v1118
    %v1469 = vpack.c.b16 %v1124, %v1119
    %v1470 = vpack.c.b16 %v1125, %v1120
    %v1471 = vpack.c.b16 %v1131, %v1126
    %v1472 = vpack.c.b16 %v1132, %v1127
    %v1473 = vpack.c.b16 %v1133, %v1128
    %v1474 = vpack.c.b16 %v1134, %v1129
    %v1475 = vpack.c.b16 %v1135, %v1130
    %v1476 = vpack.c.b16 %v1141, %v1136
    %v1477 = vpack.c.b16 %v1142, %v1137
    %v1478 = vpack.c.b16 %v1143, %v1138
    %v1479 = vpack.c.b16 %v1144, %v1139
    %v1480 = vpack.c.b16 %v1145, %v1140
    %v1481 = vpack.c.b16 %v1151, %v1146
    %v1482 = vpack.c.b16 %v1152, %v1147
    %v1483 = vpack.c.b16 %v1153, %v1148
    %v1484 = vpack.c.b16 %v1154, %v1149
    %v1485 = vpack.c.b16 %v1155, %v1150
    %v1486 = vpack.c.b16 %v1161, %v1156
    %v1487 = vpack.c.b16 %v1162, %v1157
    %v1488 = vpack.c.b16 %v1163, %v1158
    %v1489 = vpack.c.b16 %v1164, %v1159
    %v1490 = vpack.c.b16 %v1165, %v1160
    %v1491 = vpack.c.b16 %v1171, %v1166
    %v1492 = vpack.c.b16 %v1172, %v1167
    %v1493 = vpack.c.b16 %v1173, %v1168
    %v1494 = vpack.c.b16 %v1174, %v1169
    %v1495 = vpack.c.b16 %v1175, %v1170
    %v1496 = vpack.c.b16 %v1181, %v1176
    %v1497 = vpack.c.b16 %v1182, %v1177
    %v1498 = vpack.c.b16 %v1183, %v1178
    %v1499 = vpack.c.b16 %v1184, %v1179
    %v1500 = vpack.c.b16 %v1185, %v1180
    %v1501 = vpack.c.b16 %v1191, %v1186
    %v1502 = vpack.c.b16 %v1192, %v1187
    %v1503 = vpack.c.b16 %v1193, %v1188
    %v1504 = vpack.c.b16 %v1194, %v1189
    %v1505 = vpack.c.b16 %v1195, %v1190
    %v1506 = vpack.c.b16 %v1201, %v1196
    %v1507 = vpack.c.b16 %v1202, %v1197
    %v1508 = vpack.c.b16 %v1203, %v1198
    %v1509 = vpack.c.b16 %v1204, %v1199
    %v1510 = vpack.c.b16 %v1205, %v1200
    %v1511 = vpack.c.b16 %v1211, %v1206
    %v1512 = vpack.c.b16 %v1212, %v1207
    %v1513 = vpack.c.b16 %v1213, %v1208
    %v1514 = vpack.c.b16 %v1214, %v1209
    %v1515 = vpack.c.b16 %v1215, %v1210
    %v1516 = vpack.c.b16 %v1221, %v1216
    %v1517 = vpack.c.b16 %v1222, %v1217
    %v1518 = vpack.c.b16 %v1223, %v1218
    %v1519 = vpack.c.b16 %v1224, %v1219
    %v1520 = vpack.c.b16 %v1225, %v1220
    %v1521 = vpack.c.b16 %v1231, %v1226
    %v1522 = vpack.c.b16 %v1232, %v1227
    %v1523 = vpack.c.b16 %v1233, %v1228
    %v1524 = vpack.c.b16 %v1234, %v1229
    %v1525 = vpack.c.b16 %v1235, %v1230
    %v1526 = vpack.c.b16 %v1241, %v1236
    %v1527 = vpack.c.b16 %v1242, %v1237
    %v1528 = vpack.c.b16 %v1243, %v1238
    %v1529 = vpack.c.b16 %v1244, %v1239
    %v1530 = vpack.c.b16 %v1245, %v1240
    %v1531 = vpack.c.b16 %v1251, %v1246
    %v1532 = vpack.c.b16 %v1252, %v1247
    %v1533 = vpack.c.b16 %v1253, %v1248
    %v1534 = vpack.c.b16 %v1254, %v1249
    %v1535 = vpack.c.b16 %v1255, %v1250
    %v1536 = vpack.c.b16 %v1261, %v1256
    %v1537 = vpack.c.b16 %v1262, %v1257
    %v1538 = vpack.c.b16 %v1263, %v1258
    %v1539 = vpack.c.b16 %v1264, %v1259
    %v1540 = vpack.c.b16 %v1265, %v1260
    %v1541 = vpack.c.b16 %v1271, %v1266
    %v1542 = vpack.c.b16 %v1272, %v1267
    %v1543 = vpack.c.b16 %v1273, %v1268
    %v1544 = vpack.c.b16 %v1274, %v1269
    %v1545 = vpack.c.b16 %v1275, %v1270
    %v1546 = vpack.c.b16 %v1281, %v1276
    %v1547 = vpack.c.b16 %v1282, %v1277
    %v1548 = vpack.c.b16 %v1283, %v1278
    %v1549 = vpack.c.b16 %v1284, %v1279
    %v1550 = vpack.c.b16 %v1285, %v1280
    %v1551 = vpack.c.b16 %v1291, %v1286
    %v1552 = vpack.c.b16 %v1292, %v1287
    %v1553 = vpack.c.b16 %v1293, %v1288
    %v1554 = vpack.c.b16 %v1294, %v1289
    %v1555 = vpack.c.b16 %v1295, %v1290
    %v1556 = vpack.c.b16 %v1301, %v1296
    %v1557 = vpack.c.b16 %v1302, %v1297
    %v1558 = vpack.c.b16 %v1303, %v1298
    %v1559 = vpack.c.b16 %v1304, %v1299
    %v1560 = vpack.c.b16 %v1305, %v1300
    %v1561 = vpack.c.b16 %v1311, %v1306
    %v1562 = vpack.c.b16 %v1312, %v1307
    %v1563 = vpack.c.b16 %v1313, %v1308
    %v1564 = vpack.c.b16 %v1314, %v1309
    %v1565 = vpack.c.b16 %v1315, %v1310
    %v1566 = vpack.c.b16 %v1321, %v1316
    %v1567 = vpack.c.b16 %v1322, %v1317
    %v1568 = vpack.c.b16 %v1323, %v1318
    %v1569 = vpack.c.b16 %v1324, %v1319
    %v1570 = vpack.c.b16 %v1325, %v1320
    %vm1816 = vcmask 130048
    %v1818 = vsel %vm1816, %v171, 0
    %v1821 = vsel %vm1816, %v178, 0
    %v1824 = vsel %vm1816, %v185, 0
    %v1827 = vsel %vm1816, %v192, 0
    %v1830 = vsel %vm1816, %v199, 0
    %v1833 = vsel %vm1816, %v206, 0
    %v1836 = vsel %vm1816, %v213, 0
    %v1839 = vsel %vm1816, %v220, 0
    %1841 = vmatprep.subr.bf16.mxu0 %v1327
    %1842 = vmatpush1.bf16.msra.mxu0 %v1326
    %1843 = vmatprep.subr.bf16.mxu0 %v1332
    %1844 = vmatpush1.bf16.msra.mxu0 %v1331
    %1845 = vmatprep.subr.bf16.mxu0 %v1337
    %1846 = vmatpush1.bf16.msra.mxu0 %v1336
    %1847 = vmatprep.subr.bf16.mxu0 %v1342
    %1848 = vmatpush1.bf16.msra.mxu0 %v1341
    %1849 = vmatprep.subr.bf16.mxu0 %v1347
    %1850 = vmatpush1.bf16.msra.mxu0 %v1346
    %1851 = vmatprep.subr.bf16.mxu0 %v1352
    %1852 = vmatpush1.bf16.msra.mxu0 %v1351
    %1853 = vmatprep.subr.bf16.mxu0 %v1357
    %1854 = vmatpush1.bf16.msra.mxu0 %v1356
    %1855 = vmatprep.subr.bf16.mxu0 %v1362
    %1856 = vmatpush1.bf16.msra.mxu0 %v1361
    %1857 = vmatprep.subr.bf16.mxu0 %v1367
    %1858 = vmatpush1.bf16.msra.mxu0 %v1366
    %1859 = vmatprep.subr.bf16.mxu0 %v1372
    %1860 = vmatpush1.bf16.msra.mxu0 %v1371
    %1861 = vmatprep.subr.bf16.mxu0 %v1377
    %1862 = vmatpush1.bf16.msra.mxu0 %v1376
    %1863 = vmatprep.subr.bf16.mxu0 %v1382
    %1864 = vmatpush1.bf16.msra.mxu0 %v1381
    %1865 = vmatprep.subr.bf16.mxu0 %v1387
    %1866 = vmatpush1.bf16.msra.mxu0 %v1386
    %1867 = vmatprep.subr.bf16.mxu0 %v1392
    %1868 = vmatpush1.bf16.msra.mxu0 %v1391
    %1869 = vmatprep.subr.bf16.mxu0 %v1397
    %1870 = vmatpush1.bf16.msra.mxu0 %v1396
    %1871 = vmatprep.subr.bf16.mxu0 %v1402
    %1872 = vmatpush1.bf16.msra.mxu0 %v1401
    %1873 = vmatprep.mubr.bf16.mxu0 %v166
    %1874 = vmatmul.mubr.bf16.gmra.mrb[0].mxu0 %v165
    %v1875 = vpop.f32.mrb[0].mxu0
    %v1876 = vadd.f32 %v520, %v1875
    %v1877 = vpop.f32.mrb[0].mxu0
    %v1878 = vadd.f32 %v524, %v1877
    %v1879 = vpop.f32.mrb[0].mxu0
    %v1880 = vadd.f32 %v520, %v1879
    %v1881 = vpop.f32.mrb[0].mxu0
    %v1882 = vadd.f32 %v524, %v1881
    %1883 = vmatprep.mubr.bf16.mxu0 %v173
    %1884 = vmatmul.mubr.bf16.gmra.mrb[0].mxu0 %v172
    %v1885 = vpop.f32.mrb[0].mxu0
    %v1886 = vadd.f32 %v520, %v1885
    %v1887 = vpop.f32.mrb[0].mxu0
    %v1888 = vadd.f32 %v524, %v1887
    %v1889 = vpop.f32.mrb[0].mxu0
    %v1890 = vadd.f32 %v520, %v1889
    %v1891 = vpop.f32.mrb[0].mxu0
    %v1892 = vadd.f32 %v524, %v1891
    %1893 = vmatprep.mubr.bf16.mxu0 %v180
    %1894 = vmatmul.mubr.bf16.gmra.mrb[0].mxu0 %v179
    %v1895 = vpop.f32.mrb[0].mxu0
    %v1896 = vadd.f32 %v520, %v1895
    %v1897 = vpop.f32.mrb[0].mxu0
    %v1898 = vadd.f32 %v524, %v1897
    %v1899 = vpop.f32.mrb[0].mxu0
    %v1900 = vadd.f32 %v520, %v1899
    %v1901 = vpop.f32.mrb[0].mxu0
    %v1902 = vadd.f32 %v524, %v1901
    %1903 = vmatprep.mubr.bf16.mxu0 %v187
    %1904 = vmatmul.mubr.bf16.gmra.mrb[0].mxu0 %v186
    %v1905 = vpop.f32.mrb[0].mxu0
    %v1906 = vadd.f32 %v520, %v1905
    %v1907 = vpop.f32.mrb[0].mxu0
    %v1908 = vadd.f32 %v524, %v1907
    %v1909 = vpop.f32.mrb[0].mxu0
    %v1910 = vadd.f32 %v520, %v1909
    %v1911 = vpop.f32.mrb[0].mxu0
    %v1912 = vadd.f32 %v524, %v1911
    %1913 = vmatprep.mubr.bf16.mxu0 %v194
    %1914 = vmatmul.mubr.bf16.gmra.mrb[0].mxu0 %v193
    %v1915 = vpop.f32.mrb[0].mxu0
    %v1916 = vadd.f32 %v520, %v1915
    %v1917 = vpop.f32.mrb[0].mxu0
    %v1918 = vadd.f32 %v524, %v1917
    %v1919 = vpop.f32.mrb[0].mxu0
    %v1920 = vadd.f32 %v520, %v1919
    %v1921 = vpop.f32.mrb[0].mxu0
    %v1922 = vadd.f32 %v524, %v1921
    %1923 = vmatprep.mubr.bf16.mxu0 %v201
    %1924 = vmatmul.mubr.bf16.gmra.mrb[0].mxu0 %v200
    %v1925 = vpop.f32.mrb[0].mxu0
    %v1926 = vadd.f32 %v520, %v1925
    %v1927 = vpop.f32.mrb[0].mxu0
    %v1928 = vadd.f32 %v524, %v1927
    %v1929 = vpop.f32.mrb[0].mxu0
    %v1930 = vadd.f32 %v520, %v1929
    %v1931 = vpop.f32.mrb[0].mxu0
    %v1932 = vadd.f32 %v524, %v1931
    %1933 = vmatprep.mubr.bf16.mxu0 %v208
    %1934 = vmatmul.mubr.bf16.gmra.mrb[0].mxu0 %v207
    %v1935 = vpop.f32.mrb[0].mxu0
    %v1936 = vadd.f32 %v520, %v1935
    %v1937 = vpop.f32.mrb[0].mxu0
    %v1938 = vadd.f32 %v524, %v1937
    %v1939 = vpop.f32.mrb[0].mxu0
    %v1940 = vadd.f32 %v520, %v1939
    %v1941 = vpop.f32.mrb[0].mxu0
    %v1942 = vadd.f32 %v524, %v1941
    %1943 = vmatprep.mubr.bf16.mxu0 %v215
    %1944 = vmatmul.mubr.bf16.gmra.mrb[0].mxu0 %v214
    %v1945 = vpop.f32.mrb[0].mxu0
    %v1946 = vadd.f32 %v520, %v1945
    %v1947 = vpop.f32.mrb[0].mxu0
    %v1948 = vadd.f32 %v524, %v1947
    %v1949 = vpop.f32.mrb[0].mxu0
    %v1950 = vadd.f32 %v520, %v1949
    %v1951 = vpop.f32.mrb[0].mxu0
    %v1952 = vadd.f32 %v524, %v1951
    %1953 = vdwg.mxu0
    %1954 = vmatprep.subr.bf16.mxu0 %v1407
    %1955 = vmatpush1.bf16.msra.mxu0 %v1406
    %1956 = vmatprep.subr.bf16.mxu0 %v1412
    %1957 = vmatpush1.bf16.msra.mxu0 %v1411
    %1958 = vmatprep.subr.bf16.mxu0 %v1417
    %1959 = vmatpush1.bf16.msra.mxu0 %v1416
    %1960 = vmatprep.subr.bf16.mxu0 %v1422
    %1961 = vmatpush1.bf16.msra.mxu0 %v1421
    %1962 = vmatprep.subr.bf16.mxu0 %v1427
    %1963 = vmatpush1.bf16.msra.mxu0 %v1426
    %1964 = vmatprep.subr.bf16.mxu0 %v1432
    %1965 = vmatpush1.bf16.msra.mxu0 %v1431
    %1966 = vmatprep.subr.bf16.mxu0 %v1437
    %1967 = vmatpush1.bf16.msra.mxu0 %v1436
    %1968 = vmatprep.subr.bf16.mxu0 %v1442
    %1969 = vmatpush1.bf16.msra.mxu0 %v1441
    %1970 = vmatprep.subr.bf16.mxu0 %v1447
    %1971 = vmatpush1.bf16.msra.mxu0 %v1446
    %1972 = vmatprep.subr.bf16.mxu0 %v1452
    %1973 = vmatpush1.bf16.msra.mxu0 %v1451
    %1974 = vmatprep.subr.bf16.mxu0 %v1457
    %1975 = vmatpush1.bf16.msra.mxu0 %v1456
    %1976 = vmatprep.subr.bf16.mxu0 %v1462
    %1977 = vmatpush1.bf16.msra.mxu0 %v1461
    %1978 = vmatprep.subr.bf16.mxu0 %v1467
    %1979 = vmatpush1.bf16.msra.mxu0 %v1466
    %1980 = vmatprep.subr.bf16.mxu0 %v1472
    %1981 = vmatpush1.bf16.msra.mxu0 %v1471
    %1982 = vmatprep.subr.bf16.mxu0 %v1477
    %1983 = vmatpush1.bf16.msra.mxu0 %v1476
    %1984 = vmatprep.subr.bf16.mxu0 %v1482
    %1985 = vmatpush1.bf16.msra.mxu0 %v1481
    %1986 = vmatprep.mubr.bf16.mxu0 %v168
    %1987 = vmatmul.mubr.bf16.gmra.mrb[0].mxu0 %v167
    %v1988 = vpop.f32.mrb[0].mxu0
    %v1989 = vadd.f32 %v1876, %v1988
    %v1990 = vpop.f32.mrb[0].mxu0
    %v1991 = vadd.f32 %v1878, %v1990
    %v1992 = vpop.f32.mrb[0].mxu0
    %v1993 = vadd.f32 %v1880, %v1992
    %v1994 = vpop.f32.mrb[0].mxu0
    %v1995 = vadd.f32 %v1882, %v1994
    %1996 = vmatprep.mubr.bf16.mxu0 %v175
    %1997 = vmatmul.mubr.bf16.gmra.mrb[0].mxu0 %v174
    %v1998 = vpop.f32.mrb[0].mxu0
    %v1999 = vadd.f32 %v1886, %v1998
    %v2000 = vpop.f32.mrb[0].mxu0
    %v2001 = vadd.f32 %v1888, %v2000
    %v2002 = vpop.f32.mrb[0].mxu0
    %v2003 = vadd.f32 %v1890, %v2002
    %v2004 = vpop.f32.mrb[0].mxu0
    %v2005 = vadd.f32 %v1892, %v2004
    %2006 = vmatprep.mubr.bf16.mxu0 %v182
    %2007 = vmatmul.mubr.bf16.gmra.mrb[0].mxu0 %v181
    %v2008 = vpop.f32.mrb[0].mxu0
    %v2009 = vadd.f32 %v1896, %v2008
    %v2010 = vpop.f32.mrb[0].mxu0
    %v2011 = vadd.f32 %v1898, %v2010
    %v2012 = vpop.f32.mrb[0].mxu0
    %v2013 = vadd.f32 %v1900, %v2012
    %v2014 = vpop.f32.mrb[0].mxu0
    %v2015 = vadd.f32 %v1902, %v2014
    %2016 = vmatprep.mubr.bf16.mxu0 %v189
    %2017 = vmatmul.mubr.bf16.gmra.mrb[0].mxu0 %v188
    %v2018 = vpop.f32.mrb[0].mxu0
    %v2019 = vadd.f32 %v1906, %v2018
    %v2020 = vpop.f32.mrb[0].mxu0
    %v2021 = vadd.f32 %v1908, %v2020
    %v2022 = vpop.f32.mrb[0].mxu0
    %v2023 = vadd.f32 %v1910, %v2022
    %v2024 = vpop.f32.mrb[0].mxu0
    %v2025 = vadd.f32 %v1912, %v2024
    %2026 = vmatprep.mubr.bf16.mxu0 %v196
    %2027 = vmatmul.mubr.bf16.gmra.mrb[0].mxu0 %v195
    %v2028 = vpop.f32.mrb[0].mxu0
    %v2029 = vadd.f32 %v1916, %v2028
    %v2030 = vpop.f32.mrb[0].mxu0
    %v2031 = vadd.f32 %v1918, %v2030
    %v2032 = vpop.f32.mrb[0].mxu0
    %v2033 = vadd.f32 %v1920, %v2032
    %v2034 = vpop.f32.mrb[0].mxu0
    %v2035 = vadd.f32 %v1922, %v2034
    %2036 = vmatprep.mubr.bf16.mxu0 %v203
    %2037 = vmatmul.mubr.bf16.gmra.mrb[0].mxu0 %v202
    %v2038 = vpop.f32.mrb[0].mxu0
    %v2039 = vadd.f32 %v1926, %v2038
    %v2040 = vpop.f32.mrb[0].mxu0
    %v2041 = vadd.f32 %v1928, %v2040
    %v2042 = vpop.f32.mrb[0].mxu0
    %v2043 = vadd.f32 %v1930, %v2042
    %v2044 = vpop.f32.mrb[0].mxu0
    %v2045 = vadd.f32 %v1932, %v2044
    %2046 = vmatprep.mubr.bf16.mxu0 %v210
    %2047 = vmatmul.mubr.bf16.gmra.mrb[0].mxu0 %v209
    %v2048 = vpop.f32.mrb[0].mxu0
    %v2049 = vadd.f32 %v1936, %v2048
    %v2050 = vpop.f32.mrb[0].mxu0
    %v2051 = vadd.f32 %v1938, %v2050
    %v2052 = vpop.f32.mrb[0].mxu0
    %v2053 = vadd.f32 %v1940, %v2052
    %v2054 = vpop.f32.mrb[0].mxu0
    %v2055 = vadd.f32 %v1942, %v2054
    %2056 = vmatprep.mubr.bf16.mxu0 %v217
    %2057 = vmatmul.mubr.bf16.gmra.mrb[0].mxu0 %v216
    %v2058 = vpop.f32.mrb[0].mxu0
    %v2059 = vadd.f32 %v1946, %v2058
    %v2060 = vpop.f32.mrb[0].mxu0
    %v2061 = vadd.f32 %v1948, %v2060
    %v2062 = vpop.f32.mrb[0].mxu0
    %v2063 = vadd.f32 %v1950, %v2062
    %v2064 = vpop.f32.mrb[0].mxu0
    %v2065 = vadd.f32 %v1952, %v2064
    %2066 = vdwg.mxu0
    %2067 = vmatprep.subr.bf16.mxu0 %v1487
    %2068 = vmatpush1.bf16.msra.mxu0 %v1486
    %2069 = vmatprep.subr.bf16.mxu0 %v1492
    %2070 = vmatpush1.bf16.msra.mxu0 %v1491
    %2071 = vmatprep.subr.bf16.mxu0 %v1497
    %2072 = vmatpush1.bf16.msra.mxu0 %v1496
    %2073 = vmatprep.subr.bf16.mxu0 %v1502
    %2074 = vmatpush1.bf16.msra.mxu0 %v1501
    %2075 = vmatprep.subr.bf16.mxu0 %v1507
    %2076 = vmatpush1.bf16.msra.mxu0 %v1506
    %2077 = vmatprep.subr.bf16.mxu0 %v1512
    %2078 = vmatpush1.bf16.msra.mxu0 %v1511
    %2079 = vmatprep.subr.bf16.mxu0 %v1517
    %2080 = vmatpush1.bf16.msra.mxu0 %v1516
    %2081 = vmatprep.subr.bf16.mxu0 %v1522
    %2082 = vmatpush1.bf16.msra.mxu0 %v1521
    %2083 = vmatprep.subr.bf16.mxu0 %v1527
    %2084 = vmatpush1.bf16.msra.mxu0 %v1526
    %2085 = vmatprep.subr.bf16.mxu0 %v1532
    %2086 = vmatpush1.bf16.msra.mxu0 %v1531
    %2087 = vmatprep.subr.bf16.mxu0 %v1537
    %2088 = vmatpush1.bf16.msra.mxu0 %v1536
    %2089 = vmatprep.subr.bf16.mxu0 %v1542
    %2090 = vmatpush1.bf16.msra.mxu0 %v1541
    %2091 = vmatprep.subr.bf16.mxu0 %v1547
    %2092 = vmatpush1.bf16.msra.mxu0 %v1546
    %2093 = vmatprep.subr.bf16.mxu0 %v1552
    %2094 = vmatpush1.bf16.msra.mxu0 %v1551
    %2095 = vmatprep.subr.bf16.mxu0 %v1557
    %2096 = vmatpush1.bf16.msra.mxu0 %v1556
    %2097 = vmatprep.subr.bf16.mxu0 %v1562
    %2098 = vmatpush1.bf16.msra.mxu0 %v1561
    %2099 = vmatprep.mubr.bf16.mxu0 %v170
    %2100 = vmatmul.mubr.bf16.gmra.mrb[0].mxu0 %v169
    %v2101 = vpop.f32.mrb[0].mxu0
    %v2102 = vadd.f32 %v1989, %v2101
    %v2103 = vpop.f32.mrb[0].mxu0
    %v2104 = vadd.f32 %v1991, %v2103
    %v2105 = vpop.f32.mrb[0].mxu0
    %v2106 = vadd.f32 %v1993, %v2105
    %v2107 = vpop.f32.mrb[0].mxu0
    %v2108 = vadd.f32 %v1995, %v2107
    %2109 = vmatprep.mubr.bf16.mxu0 %v177
    %2110 = vmatmul.mubr.bf16.gmra.mrb[0].mxu0 %v176
    %v2111 = vpop.f32.mrb[0].mxu0
    %v2112 = vadd.f32 %v1999, %v2111
    %v2113 = vpop.f32.mrb[0].mxu0
    %v2114 = vadd.f32 %v2001, %v2113
    %v2115 = vpop.f32.mrb[0].mxu0
    %v2116 = vadd.f32 %v2003, %v2115
    %v2117 = vpop.f32.mrb[0].mxu0
    %v2118 = vadd.f32 %v2005, %v2117
    %2119 = vmatprep.mubr.bf16.mxu0 %v184
    %2120 = vmatmul.mubr.bf16.gmra.mrb[0].mxu0 %v183
    %v2121 = vpop.f32.mrb[0].mxu0
    %v2122 = vadd.f32 %v2009, %v2121
    %v2123 = vpop.f32.mrb[0].mxu0
    %v2124 = vadd.f32 %v2011, %v2123
    %v2125 = vpop.f32.mrb[0].mxu0
    %v2126 = vadd.f32 %v2013, %v2125
    %v2127 = vpop.f32.mrb[0].mxu0
    %v2128 = vadd.f32 %v2015, %v2127
    %2129 = vmatprep.mubr.bf16.mxu0 %v191
    %2130 = vmatmul.mubr.bf16.gmra.mrb[0].mxu0 %v190
    %v2131 = vpop.f32.mrb[0].mxu0
    %v2132 = vadd.f32 %v2019, %v2131
    %v2133 = vpop.f32.mrb[0].mxu0
    %v2134 = vadd.f32 %v2021, %v2133
    %v2135 = vpop.f32.mrb[0].mxu0
    %v2136 = vadd.f32 %v2023, %v2135
    %v2137 = vpop.f32.mrb[0].mxu0
    %v2138 = vadd.f32 %v2025, %v2137
    %2139 = vmatprep.mubr.bf16.mxu0 %v198
    %2140 = vmatmul.mubr.bf16.gmra.mrb[0].mxu0 %v197
    %v2141 = vpop.f32.mrb[0].mxu0
    %v2142 = vadd.f32 %v2029, %v2141
    %v2143 = vpop.f32.mrb[0].mxu0
    %v2144 = vadd.f32 %v2031, %v2143
    %v2145 = vpop.f32.mrb[0].mxu0
    %v2146 = vadd.f32 %v2033, %v2145
    %v2147 = vpop.f32.mrb[0].mxu0
    %v2148 = vadd.f32 %v2035, %v2147
    %2149 = vmatprep.mubr.bf16.mxu0 %v205
    %2150 = vmatmul.mubr.bf16.gmra.mrb[0].mxu0 %v204
    %v2151 = vpop.f32.mrb[0].mxu0
    %v2152 = vadd.f32 %v2039, %v2151
    %v2153 = vpop.f32.mrb[0].mxu0
    %v2154 = vadd.f32 %v2041, %v2153
    %v2155 = vpop.f32.mrb[0].mxu0
    %v2156 = vadd.f32 %v2043, %v2155
    %v2157 = vpop.f32.mrb[0].mxu0
    %v2158 = vadd.f32 %v2045, %v2157
    %2159 = vmatprep.mubr.bf16.mxu0 %v212
    %2160 = vmatmul.mubr.bf16.gmra.mrb[0].mxu0 %v211
    %v2161 = vpop.f32.mrb[0].mxu0
    %v2162 = vadd.f32 %v2049, %v2161
    %v2163 = vpop.f32.mrb[0].mxu0
    %v2164 = vadd.f32 %v2051, %v2163
    %v2165 = vpop.f32.mrb[0].mxu0
    %v2166 = vadd.f32 %v2053, %v2165
    %v2167 = vpop.f32.mrb[0].mxu0
    %v2168 = vadd.f32 %v2055, %v2167
    %2169 = vmatprep.mubr.bf16.mxu0 %v219
    %2170 = vmatmul.mubr.bf16.gmra.mrb[0].mxu0 %v218
    %v2171 = vpop.f32.mrb[0].mxu0
    %v2172 = vadd.f32 %v2059, %v2171
    %v2173 = vpop.f32.mrb[0].mxu0
    %v2174 = vadd.f32 %v2061, %v2173
    %v2175 = vpop.f32.mrb[0].mxu0
    %v2176 = vadd.f32 %v2063, %v2175
    %v2177 = vpop.f32.mrb[0].mxu0
    %v2178 = vadd.f32 %v2065, %v2177
    %2179 = vdwg.mxu0
    %2180 = vmatprep.subr.bf16.mxu0 %v1567
    %2181 = vmatpush1.bf16.msra.mxu0 %v1566
    %2182 = vmatprep.subr.bf16.mxu0 0
    %2183 = vmatpush1.bf16.msra.mxu0 0
    %2184 = vmatprep.subr.bf16.mxu0 0
    %2185 = vmatpush1.bf16.msra.mxu0 0
    %2186 = vmatprep.subr.bf16.mxu0 0
    %2187 = vmatpush1.bf16.msra.mxu0 0
    %2188 = vmatprep.subr.bf16.mxu0 0
    %2189 = vmatpush1.bf16.msra.mxu0 0
    %2190 = vmatprep.subr.bf16.mxu0 0
    %2191 = vmatpush1.bf16.msra.mxu0 0
    %2192 = vmatprep.subr.bf16.mxu0 0
    %2193 = vmatpush1.bf16.msra.mxu0 0
    %2194 = vmatprep.subr.bf16.mxu0 0
    %2195 = vmatpush1.bf16.msra.mxu0 0
    %2196 = vmatprep.subr.bf16.mxu0 0
    %2197 = vmatpush1.bf16.msra.mxu0 0
    %2198 = vmatprep.subr.bf16.mxu0 0
    %2199 = vmatpush1.bf16.msra.mxu0 0
    %2200 = vmatprep.subr.bf16.mxu0 0
    %2201 = vmatpush1.bf16.msra.mxu0 0
    %2202 = vmatprep.subr.bf16.mxu0 0
    %2203 = vmatpush1.bf16.msra.mxu0 0
    %2204 = vmatprep.subr.bf16.mxu0 0
    %2205 = vmatpush1.bf16.msra.mxu0 0
    %2206 = vmatprep.subr.bf16.mxu0 0
    %2207 = vmatpush1.bf16.msra.mxu0 0
    %2208 = vmatprep.subr.bf16.mxu0 0
    %2209 = vmatpush1.bf16.msra.mxu0 0
    %2210 = vmatprep.subr.bf16.mxu0 0
    %2211 = vmatpush1.bf16.msra.mxu0 0
    %2212 = vmatprep.mubr.bf16.mxu0 0
    %2213 = vmatmul.mubr.bf16.gmra.mrb[0].mxu0 %v1818
    %v2214 = vpop.f32.mrb[0].mxu0
    %v2215 = vadd.f32 %v2102, %v2214
    %v2216 = vpop.f32.mrb[0].mxu0
    %v2217 = vadd.f32 %v2104, %v2216
    %v2218 = vpop.f32.mrb[0].mxu0
    %v2219 = vadd.f32 %v2106, %v2218
    %v2220 = vpop.f32.mrb[0].mxu0
    %v2221 = vadd.f32 %v2108, %v2220
    %2222 = vmatprep.mubr.bf16.mxu0 0
    %2223 = vmatmul.mubr.bf16.gmra.mrb[0].mxu0 %v1821
    %v2224 = vpop.f32.mrb[0].mxu0
    %v2225 = vadd.f32 %v2112, %v2224
    %v2226 = vpop.f32.mrb[0].mxu0
    %v2227 = vadd.f32 %v2114, %v2226
    %v2228 = vpop.f32.mrb[0].mxu0
    %v2229 = vadd.f32 %v2116, %v2228
    %v2230 = vpop.f32.mrb[0].mxu0
    %v2231 = vadd.f32 %v2118, %v2230
    %2232 = vmatprep.mubr.bf16.mxu0 0
    %2233 = vmatmul.mubr.bf16.gmra.mrb[0].mxu0 %v1824
    %v2234 = vpop.f32.mrb[0].mxu0
    %v2235 = vadd.f32 %v2122, %v2234
    %v2236 = vpop.f32.mrb[0].mxu0
    %v2237 = vadd.f32 %v2124, %v2236
    %v2238 = vpop.f32.mrb[0].mxu0
    %v2239 = vadd.f32 %v2126, %v2238
    %v2240 = vpop.f32.mrb[0].mxu0
    %v2241 = vadd.f32 %v2128, %v2240
    %2242 = vmatprep.mubr.bf16.mxu0 0
    %2243 = vmatmul.mubr.bf16.gmra.mrb[0].mxu0 %v1827
    %v2244 = vpop.f32.mrb[0].mxu0
    %v2245 = vadd.f32 %v2132, %v2244
    %v2246 = vpop.f32.mrb[0].mxu0
    %v2247 = vadd.f32 %v2134, %v2246
    %v2248 = vpop.f32.mrb[0].mxu0
    %v2249 = vadd.f32 %v2136, %v2248
    %v2250 = vpop.f32.mrb[0].mxu0
    %v2251 = vadd.f32 %v2138, %v2250
    %2252 = vmatprep.mubr.bf16.mxu0 0
    %2253 = vmatmul.mubr.bf16.gmra.mrb[0].mxu0 %v1830
    %v2254 = vpop.f32.mrb[0].mxu0
    %v2255 = vadd.f32 %v2142, %v2254
    %v2256 = vpop.f32.mrb[0].mxu0
    %v2257 = vadd.f32 %v2144, %v2256
    %v2258 = vpop.f32.mrb[0].mxu0
    %v2259 = vadd.f32 %v2146, %v2258
    %v2260 = vpop.f32.mrb[0].mxu0
    %v2261 = vadd.f32 %v2148, %v2260
    %2262 = vmatprep.mubr.bf16.mxu0 0
    %2263 = vmatmul.mubr.bf16.gmra.mrb[0].mxu0 %v1833
    %v2264 = vpop.f32.mrb[0].mxu0
    %v2265 = vadd.f32 %v2152, %v2264
    %v2266 = vpop.f32.mrb[0].mxu0
    %v2267 = vadd.f32 %v2154, %v2266
    %v2268 = vpop.f32.mrb[0].mxu0
    %v2269 = vadd.f32 %v2156, %v2268
    %v2270 = vpop.f32.mrb[0].mxu0
    %v2271 = vadd.f32 %v2158, %v2270
    %2272 = vmatprep.mubr.bf16.mxu0 0
    %2273 = vmatmul.mubr.bf16.gmra.mrb[0].mxu0 %v1836
    %v2274 = vpop.f32.mrb[0].mxu0
    %v2275 = vadd.f32 %v2162, %v2274
    %v2276 = vpop.f32.mrb[0].mxu0
    %v2277 = vadd.f32 %v2164, %v2276
    %v2278 = vpop.f32.mrb[0].mxu0
    %v2279 = vadd.f32 %v2166, %v2278
    %v2280 = vpop.f32.mrb[0].mxu0
    %v2281 = vadd.f32 %v2168, %v2280
    %2282 = vmatprep.mubr.bf16.mxu0 0
    %2283 = vmatmul.mubr.bf16.gmra.mrb[0].mxu0 %v1839
    %v2284 = vpop.f32.mrb[0].mxu0
    %v2285 = vadd.f32 %v2172, %v2284
    %v2286 = vpop.f32.mrb[0].mxu0
    %v2287 = vadd.f32 %v2174, %v2286
    %v2288 = vpop.f32.mrb[0].mxu0
    %v2289 = vadd.f32 %v2176, %v2288
    %v2290 = vpop.f32.mrb[0].mxu0
    %v2291 = vadd.f32 %v2178, %v2290
    %2292 = vdwg.mxu0
    %2293 = vmatprep.subr.bf16.mxu0 %v1329
    %2294 = vmatpush1.bf16.msra.mxu0 %v1328
    %2295 = vmatprep.subr.bf16.mxu0 %v1334
    %2296 = vmatpush1.bf16.msra.mxu0 %v1333
    %2297 = vmatprep.subr.bf16.mxu0 %v1339
    %2298 = vmatpush1.bf16.msra.mxu0 %v1338
    %2299 = vmatprep.subr.bf16.mxu0 %v1344
    %2300 = vmatpush1.bf16.msra.mxu0 %v1343
    %2301 = vmatprep.subr.bf16.mxu0 %v1349
    %2302 = vmatpush1.bf16.msra.mxu0 %v1348
    %2303 = vmatprep.subr.bf16.mxu0 %v1354
    %2304 = vmatpush1.bf16.msra.mxu0 %v1353
    %2305 = vmatprep.subr.bf16.mxu0 %v1359
    %2306 = vmatpush1.bf16.msra.mxu0 %v1358
    %2307 = vmatprep.subr.bf16.mxu0 %v1364
    %2308 = vmatpush1.bf16.msra.mxu0 %v1363
    %2309 = vmatprep.subr.bf16.mxu0 %v1369
    %2310 = vmatpush1.bf16.msra.mxu0 %v1368
    %2311 = vmatprep.subr.bf16.mxu0 %v1374
    %2312 = vmatpush1.bf16.msra.mxu0 %v1373
    %2313 = vmatprep.subr.bf16.mxu0 %v1379
    %2314 = vmatpush1.bf16.msra.mxu0 %v1378
    %2315 = vmatprep.subr.bf16.mxu0 %v1384
    %2316 = vmatpush1.bf16.msra.mxu0 %v1383
    %2317 = vmatprep.subr.bf16.mxu0 %v1389
    %2318 = vmatpush1.bf16.msra.mxu0 %v1388
    %2319 = vmatprep.subr.bf16.mxu0 %v1394
    %2320 = vmatpush1.bf16.msra.mxu0 %v1393
    %2321 = vmatprep.subr.bf16.mxu0 %v1399
    %2322 = vmatpush1.bf16.msra.mxu0 %v1398
    %2323 = vmatprep.subr.bf16.mxu0 %v1404
    %2324 = vmatpush1.bf16.msra.mxu0 %v1403
    %2325 = vmatprep.mubr.bf16.mxu0 %v166
    %2326 = vmatmul.mubr.bf16.gmra.mrb[0].mxu0 %v165
    %v2327 = vpop.f32.mrb[0].mxu0
    %v2328 = vadd.f32 %v528, %v2327
    %v2329 = vpop.f32.mrb[0].mxu0
    %v2330 = vadd.f32 %v532, %v2329
    %v2331 = vpop.f32.mrb[0].mxu0
    %v2332 = vadd.f32 %v528, %v2331
    %v2333 = vpop.f32.mrb[0].mxu0
    %v2334 = vadd.f32 %v532, %v2333
    %2335 = vmatprep.mubr.bf16.mxu0 %v173
    %2336 = vmatmul.mubr.bf16.gmra.mrb[0].mxu0 %v172
    %v2337 = vpop.f32.mrb[0].mxu0
    %v2338 = vadd.f32 %v528, %v2337
    %v2339 = vpop.f32.mrb[0].mxu0
    %v2340 = vadd.f32 %v532, %v2339
    %v2341 = vpop.f32.mrb[0].mxu0
    %v2342 = vadd.f32 %v528, %v2341
    %v2343 = vpop.f32.mrb[0].mxu0
    %v2344 = vadd.f32 %v532, %v2343
    %2345 = vmatprep.mubr.bf16.mxu0 %v180
    %2346 = vmatmul.mubr.bf16.gmra.mrb[0].mxu0 %v179
    %v2347 = vpop.f32.mrb[0].mxu0
    %v2348 = vadd.f32 %v528, %v2347
    %v2349 = vpop.f32.mrb[0].mxu0
    %v2350 = vadd.f32 %v532, %v2349
    %v2351 = vpop.f32.mrb[0].mxu0
    %v2352 = vadd.f32 %v528, %v2351
    %v2353 = vpop.f32.mrb[0].mxu0
    %v2354 = vadd.f32 %v532, %v2353
    %2355 = vmatprep.mubr.bf16.mxu0 %v187
    %2356 = vmatmul.mubr.bf16.gmra.mrb[0].mxu0 %v186
    %v2357 = vpop.f32.mrb[0].mxu0
    %v2358 = vadd.f32 %v528, %v2357
    %v2359 = vpop.f32.mrb[0].mxu0
    %v2360 = vadd.f32 %v532, %v2359
    %v2361 = vpop.f32.mrb[0].mxu0
    %v2362 = vadd.f32 %v528, %v2361
    %v2363 = vpop.f32.mrb[0].mxu0
    %v2364 = vadd.f32 %v532, %v2363
    %2365 = vmatprep.mubr.bf16.mxu0 %v194
    %2366 = vmatmul.mubr.bf16.gmra.mrb[0].mxu0 %v193
    %v2367 = vpop.f32.mrb[0].mxu0
    %v2368 = vadd.f32 %v528, %v2367
    %v2369 = vpop.f32.mrb[0].mxu0
    %v2370 = vadd.f32 %v532, %v2369
    %v2371 = vpop.f32.mrb[0].mxu0
    %v2372 = vadd.f32 %v528, %v2371
    %v2373 = vpop.f32.mrb[0].mxu0
    %v2374 = vadd.f32 %v532, %v2373
    %2375 = vmatprep.mubr.bf16.mxu0 %v201
    %2376 = vmatmul.mubr.bf16.gmra.mrb[0].mxu0 %v200
    %v2377 = vpop.f32.mrb[0].mxu0
    %v2378 = vadd.f32 %v528, %v2377
    %v2379 = vpop.f32.mrb[0].mxu0
    %v2380 = vadd.f32 %v532, %v2379
    %v2381 = vpop.f32.mrb[0].mxu0
    %v2382 = vadd.f32 %v528, %v2381
    %v2383 = vpop.f32.mrb[0].mxu0
    %v2384 = vadd.f32 %v532, %v2383
    %2385 = vmatprep.mubr.bf16.mxu0 %v208
    %2386 = vmatmul.mubr.bf16.gmra.mrb[0].mxu0 %v207
    %v2387 = vpop.f32.mrb[0].mxu0
    %v2388 = vadd.f32 %v528, %v2387
    %v2389 = vpop.f32.mrb[0].mxu0
    %v2390 = vadd.f32 %v532, %v2389
    %v2391 = vpop.f32.mrb[0].mxu0
    %v2392 = vadd.f32 %v528, %v2391
    %v2393 = vpop.f32.mrb[0].mxu0
    %v2394 = vadd.f32 %v532, %v2393
    %2395 = vmatprep.mubr.bf16.mxu0 %v215
    %2396 = vmatmul.mubr.bf16.gmra.mrb[0].mxu0 %v214
    %v2397 = vpop.f32.mrb[0].mxu0
    %v2398 = vadd.f32 %v528, %v2397
    %v2399 = vpop.f32.mrb[0].mxu0
    %v2400 = vadd.f32 %v532, %v2399
    %v2401 = vpop.f32.mrb[0].mxu0
    %v2402 = vadd.f32 %v528, %v2401
    %v2403 = vpop.f32.mrb[0].mxu0
    %v2404 = vadd.f32 %v532, %v2403
    %2405 = vdwg.mxu0
    %2406 = vmatprep.subr.bf16.mxu0 %v1409
    %2407 = vmatpush1.bf16.msra.mxu0 %v1408
    %2408 = vmatprep.subr.bf16.mxu0 %v1414
    %2409 = vmatpush1.bf16.msra.mxu0 %v1413
    %2410 = vmatprep.subr.bf16.mxu0 %v1419
    %2411 = vmatpush1.bf16.msra.mxu0 %v1418
    %2412 = vmatprep.subr.bf16.mxu0 %v1424
    %2413 = vmatpush1.bf16.msra.mxu0 %v1423
    %2414 = vmatprep.subr.bf16.mxu0 %v1429
    %2415 = vmatpush1.bf16.msra.mxu0 %v1428
    %2416 = vmatprep.subr.bf16.mxu0 %v1434
    %2417 = vmatpush1.bf16.msra.mxu0 %v1433
    %2418 = vmatprep.subr.bf16.mxu0 %v1439
    %2419 = vmatpush1.bf16.msra.mxu0 %v1438
    %2420 = vmatprep.subr.bf16.mxu0 %v1444
    %2421 = vmatpush1.bf16.msra.mxu0 %v1443
    %2422 = vmatprep.subr.bf16.mxu0 %v1449
    %2423 = vmatpush1.bf16.msra.mxu0 %v1448
    %2424 = vmatprep.subr.bf16.mxu0 %v1454
    %2425 = vmatpush1.bf16.msra.mxu0 %v1453
    %2426 = vmatprep.subr.bf16.mxu0 %v1459
    %2427 = vmatpush1.bf16.msra.mxu0 %v1458
    %2428 = vmatprep.subr.bf16.mxu0 %v1464
    %2429 = vmatpush1.bf16.msra.mxu0 %v1463
    %2430 = vmatprep.subr.bf16.mxu0 %v1469
    %2431 = vmatpush1.bf16.msra.mxu0 %v1468
    %2432 = vmatprep.subr.bf16.mxu0 %v1474
    %2433 = vmatpush1.bf16.msra.mxu0 %v1473
    %2434 = vmatprep.subr.bf16.mxu0 %v1479
    %2435 = vmatpush1.bf16.msra.mxu0 %v1478
    %2436 = vmatprep.subr.bf16.mxu0 %v1484
    %2437 = vmatpush1.bf16.msra.mxu0 %v1483
    %2438 = vmatprep.mubr.bf16.mxu0 %v168
    %2439 = vmatmul.mubr.bf16.gmra.mrb[0].mxu0 %v167
    %v2440 = vpop.f32.mrb[0].mxu0
    %v2441 = vadd.f32 %v2328, %v2440
    %v2442 = vpop.f32.mrb[0].mxu0
    %v2443 = vadd.f32 %v2330, %v2442
    %v2444 = vpop.f32.mrb[0].mxu0
    %v2445 = vadd.f32 %v2332, %v2444
    %v2446 = vpop.f32.mrb[0].mxu0
    %v2447 = vadd.f32 %v2334, %v2446
    %2448 = vmatprep.mubr.bf16.mxu0 %v175
    %2449 = vmatmul.mubr.bf16.gmra.mrb[0].mxu0 %v174
    %v2450 = vpop.f32.mrb[0].mxu0
    %v2451 = vadd.f32 %v2338, %v2450
    %v2452 = vpop.f32.mrb[0].mxu0
    %v2453 = vadd.f32 %v2340, %v2452
    %v2454 = vpop.f32.mrb[0].mxu0
    %v2455 = vadd.f32 %v2342, %v2454
    %v2456 = vpop.f32.mrb[0].mxu0
    %v2457 = vadd.f32 %v2344, %v2456
    %2458 = vmatprep.mubr.bf16.mxu0 %v182
    %2459 = vmatmul.mubr.bf16.gmra.mrb[0].mxu0 %v181
    %v2460 = vpop.f32.mrb[0].mxu0
    %v2461 = vadd.f32 %v2348, %v2460
    %v2462 = vpop.f32.mrb[0].mxu0
    %v2463 = vadd.f32 %v2350, %v2462
    %v2464 = vpop.f32.mrb[0].mxu0
    %v2465 = vadd.f32 %v2352, %v2464
    %v2466 = vpop.f32.mrb[0].mxu0
    %v2467 = vadd.f32 %v2354, %v2466
    %2468 = vmatprep.mubr.bf16.mxu0 %v189
    %2469 = vmatmul.mubr.bf16.gmra.mrb[0].mxu0 %v188
    %v2470 = vpop.f32.mrb[0].mxu0
    %v2471 = vadd.f32 %v2358, %v2470
    %v2472 = vpop.f32.mrb[0].mxu0
    %v2473 = vadd.f32 %v2360, %v2472
    %v2474 = vpop.f32.mrb[0].mxu0
    %v2475 = vadd.f32 %v2362, %v2474
    %v2476 = vpop.f32.mrb[0].mxu0
    %v2477 = vadd.f32 %v2364, %v2476
    %2478 = vmatprep.mubr.bf16.mxu0 %v196
    %2479 = vmatmul.mubr.bf16.gmra.mrb[0].mxu0 %v195
    %v2480 = vpop.f32.mrb[0].mxu0
    %v2481 = vadd.f32 %v2368, %v2480
    %v2482 = vpop.f32.mrb[0].mxu0
    %v2483 = vadd.f32 %v2370, %v2482
    %v2484 = vpop.f32.mrb[0].mxu0
    %v2485 = vadd.f32 %v2372, %v2484
    %v2486 = vpop.f32.mrb[0].mxu0
    %v2487 = vadd.f32 %v2374, %v2486
    %2488 = vmatprep.mubr.bf16.mxu0 %v203
    %2489 = vmatmul.mubr.bf16.gmra.mrb[0].mxu0 %v202
    %v2490 = vpop.f32.mrb[0].mxu0
    %v2491 = vadd.f32 %v2378, %v2490
    %v2492 = vpop.f32.mrb[0].mxu0
    %v2493 = vadd.f32 %v2380, %v2492
    %v2494 = vpop.f32.mrb[0].mxu0
    %v2495 = vadd.f32 %v2382, %v2494
    %v2496 = vpop.f32.mrb[0].mxu0
    %v2497 = vadd.f32 %v2384, %v2496
    %2498 = vmatprep.mubr.bf16.mxu0 %v210
    %2499 = vmatmul.mubr.bf16.gmra.mrb[0].mxu0 %v209
    %v2500 = vpop.f32.mrb[0].mxu0
    %v2501 = vadd.f32 %v2388, %v2500
    %v2502 = vpop.f32.mrb[0].mxu0
    %v2503 = vadd.f32 %v2390, %v2502
    %v2504 = vpop.f32.mrb[0].mxu0
    %v2505 = vadd.f32 %v2392, %v2504
    %v2506 = vpop.f32.mrb[0].mxu0
    %v2507 = vadd.f32 %v2394, %v2506
    %2508 = vmatprep.mubr.bf16.mxu0 %v217
    %2509 = vmatmul.mubr.bf16.gmra.mrb[0].mxu0 %v216
    %v2510 = vpop.f32.mrb[0].mxu0
    %v2511 = vadd.f32 %v2398, %v2510
    %v2512 = vpop.f32.mrb[0].mxu0
    %v2513 = vadd.f32 %v2400, %v2512
    %v2514 = vpop.f32.mrb[0].mxu0
    %v2515 = vadd.f32 %v2402, %v2514
    %v2516 = vpop.f32.mrb[0].mxu0
    %v2517 = vadd.f32 %v2404, %v2516
    %2518 = vdwg.mxu0
    %2519 = vmatprep.subr.bf16.mxu0 %v1489
    %2520 = vmatpush1.bf16.msra.mxu0 %v1488
    %2521 = vmatprep.subr.bf16.mxu0 %v1494
    %2522 = vmatpush1.bf16.msra.mxu0 %v1493
    %2523 = vmatprep.subr.bf16.mxu0 %v1499
    %2524 = vmatpush1.bf16.msra.mxu0 %v1498
    %2525 = vmatprep.subr.bf16.mxu0 %v1504
    %2526 = vmatpush1.bf16.msra.mxu0 %v1503
    %2527 = vmatprep.subr.bf16.mxu0 %v1509
    %2528 = vmatpush1.bf16.msra.mxu0 %v1508
    %2529 = vmatprep.subr.bf16.mxu0 %v1514
    %2530 = vmatpush1.bf16.msra.mxu0 %v1513
    %2531 = vmatprep.subr.bf16.mxu0 %v1519
    %2532 = vmatpush1.bf16.msra.mxu0 %v1518
    %2533 = vmatprep.subr.bf16.mxu0 %v1524
    %2534 = vmatpush1.bf16.msra.mxu0 %v1523
    %2535 = vmatprep.subr.bf16.mxu0 %v1529
    %2536 = vmatpush1.bf16.msra.mxu0 %v1528
    %2537 = vmatprep.subr.bf16.mxu0 %v1534
    %2538 = vmatpush1.bf16.msra.mxu0 %v1533
    %2539 = vmatprep.subr.bf16.mxu0 %v1539
    %2540 = vmatpush1.bf16.msra.mxu0 %v1538
    %2541 = vmatprep.subr.bf16.mxu0 %v1544
    %2542 = vmatpush1.bf16.msra.mxu0 %v1543
    %2543 = vmatprep.subr.bf16.mxu0 %v1549
    %2544 = vmatpush1.bf16.msra.mxu0 %v1548
    %2545 = vmatprep.subr.bf16.mxu0 %v1554
    %2546 = vmatpush1.bf16.msra.mxu0 %v1553
    %2547 = vmatprep.subr.bf16.mxu0 %v1559
    %2548 = vmatpush1.bf16.msra.mxu0 %v1558
    %2549 = vmatprep.subr.bf16.mxu0 %v1564
    %2550 = vmatpush1.bf16.msra.mxu0 %v1563
    %2551 = vmatprep.mubr.bf16.mxu0 %v170
    %2552 = vmatmul.mubr.bf16.gmra.mrb[0].mxu0 %v169
    %v2553 = vpop.f32.mrb[0].mxu0
    %v2554 = vadd.f32 %v2441, %v2553
    %v2555 = vpop.f32.mrb[0].mxu0
    %v2556 = vadd.f32 %v2443, %v2555
    %v2557 = vpop.f32.mrb[0].mxu0
    %v2558 = vadd.f32 %v2445, %v2557
    %v2559 = vpop.f32.mrb[0].mxu0
    %v2560 = vadd.f32 %v2447, %v2559
    %2561 = vmatprep.mubr.bf16.mxu0 %v177
    %2562 = vmatmul.mubr.bf16.gmra.mrb[0].mxu0 %v176
    %v2563 = vpop.f32.mrb[0].mxu0
    %v2564 = vadd.f32 %v2451, %v2563
    %v2565 = vpop.f32.mrb[0].mxu0
    %v2566 = vadd.f32 %v2453, %v2565
    %v2567 = vpop.f32.mrb[0].mxu0
    %v2568 = vadd.f32 %v2455, %v2567
    %v2569 = vpop.f32.mrb[0].mxu0
    %v2570 = vadd.f32 %v2457, %v2569
    %2571 = vmatprep.mubr.bf16.mxu0 %v184
    %2572 = vmatmul.mubr.bf16.gmra.mrb[0].mxu0 %v183
    %v2573 = vpop.f32.mrb[0].mxu0
    %v2574 = vadd.f32 %v2461, %v2573
    %v2575 = vpop.f32.mrb[0].mxu0
    %v2576 = vadd.f32 %v2463, %v2575
    %v2577 = vpop.f32.mrb[0].mxu0
    %v2578 = vadd.f32 %v2465, %v2577
    %v2579 = vpop.f32.mrb[0].mxu0
    %v2580 = vadd.f32 %v2467, %v2579
    %2581 = vmatprep.mubr.bf16.mxu0 %v191
    %2582 = vmatmul.mubr.bf16.gmra.mrb[0].mxu0 %v190
    %v2583 = vpop.f32.mrb[0].mxu0
    %v2584 = vadd.f32 %v2471, %v2583
    %v2585 = vpop.f32.mrb[0].mxu0
    %v2586 = vadd.f32 %v2473, %v2585
    %v2587 = vpop.f32.mrb[0].mxu0
    %v2588 = vadd.f32 %v2475, %v2587
    %v2589 = vpop.f32.mrb[0].mxu0
    %v2590 = vadd.f32 %v2477, %v2589
    %2591 = vmatprep.mubr.bf16.mxu0 %v198
    %2592 = vmatmul.mubr.bf16.gmra.mrb[0].mxu0 %v197
    %v2593 = vpop.f32.mrb[0].mxu0
    %v2594 = vadd.f32 %v2481, %v2593
    %v2595 = vpop.f32.mrb[0].mxu0
    %v2596 = vadd.f32 %v2483, %v2595
    %v2597 = vpop.f32.mrb[0].mxu0
    %v2598 = vadd.f32 %v2485, %v2597
    %v2599 = vpop.f32.mrb[0].mxu0
    %v2600 = vadd.f32 %v2487, %v2599
    %2601 = vmatprep.mubr.bf16.mxu0 %v205
    %2602 = vmatmul.mubr.bf16.gmra.mrb[0].mxu0 %v204
    %v2603 = vpop.f32.mrb[0].mxu0
    %v2604 = vadd.f32 %v2491, %v2603
    %v2605 = vpop.f32.mrb[0].mxu0
    %v2606 = vadd.f32 %v2493, %v2605
    %v2607 = vpop.f32.mrb[0].mxu0
    %v2608 = vadd.f32 %v2495, %v2607
    %v2609 = vpop.f32.mrb[0].mxu0
    %v2610 = vadd.f32 %v2497, %v2609
    %2611 = vmatprep.mubr.bf16.mxu0 %v212
    %2612 = vmatmul.mubr.bf16.gmra.mrb[0].mxu0 %v211
    %v2613 = vpop.f32.mrb[0].mxu0
    %v2614 = vadd.f32 %v2501, %v2613
    %v2615 = vpop.f32.mrb[0].mxu0
    %v2616 = vadd.f32 %v2503, %v2615
    %v2617 = vpop.f32.mrb[0].mxu0
    %v2618 = vadd.f32 %v2505, %v2617
    %v2619 = vpop.f32.mrb[0].mxu0
    %v2620 = vadd.f32 %v2507, %v2619
    %2621 = vmatprep.mubr.bf16.mxu0 %v219
    %2622 = vmatmul.mubr.bf16.gmra.mrb[0].mxu0 %v218
    %v2623 = vpop.f32.mrb[0].mxu0
    %v2624 = vadd.f32 %v2511, %v2623
    %v2625 = vpop.f32.mrb[0].mxu0
    %v2626 = vadd.f32 %v2513, %v2625
    %v2627 = vpop.f32.mrb[0].mxu0
    %v2628 = vadd.f32 %v2515, %v2627
    %v2629 = vpop.f32.mrb[0].mxu0
    %v2630 = vadd.f32 %v2517, %v2629
    %2631 = vdwg.mxu0
    %2632 = vmatprep.subr.bf16.mxu0 %v1569
    %2633 = vmatpush1.bf16.msra.mxu0 %v1568
    %2634 = vmatprep.subr.bf16.mxu0 0
    %2635 = vmatpush1.bf16.msra.mxu0 0
    %2636 = vmatprep.subr.bf16.mxu0 0
    %2637 = vmatpush1.bf16.msra.mxu0 0
    %2638 = vmatprep.subr.bf16.mxu0 0
    %2639 = vmatpush1.bf16.msra.mxu0 0
    %2640 = vmatprep.subr.bf16.mxu0 0
    %2641 = vmatpush1.bf16.msra.mxu0 0
    %2642 = vmatprep.subr.bf16.mxu0 0
    %2643 = vmatpush1.bf16.msra.mxu0 0
    %2644 = vmatprep.subr.bf16.mxu0 0
    %2645 = vmatpush1.bf16.msra.mxu0 0
    %2646 = vmatprep.subr.bf16.mxu0 0
    %2647 = vmatpush1.bf16.msra.mxu0 0
    %2648 = vmatprep.subr.bf16.mxu0 0
    %2649 = vmatpush1.bf16.msra.mxu0 0
    %2650 = vmatprep.subr.bf16.mxu0 0
    %2651 = vmatpush1.bf16.msra.mxu0 0
    %2652 = vmatprep.subr.bf16.mxu0 0
    %2653 = vmatpush1.bf16.msra.mxu0 0
    %2654 = vmatprep.subr.bf16.mxu0 0
    %2655 = vmatpush1.bf16.msra.mxu0 0
    %2656 = vmatprep.subr.bf16.mxu0 0
    %2657 = vmatpush1.bf16.msra.mxu0 0
    %2658 = vmatprep.subr.bf16.mxu0 0
    %2659 = vmatpush1.bf16.msra.mxu0 0
    %2660 = vmatprep.subr.bf16.mxu0 0
    %2661 = vmatpush1.bf16.msra.mxu0 0
    %2662 = vmatprep.subr.bf16.mxu0 0
    %2663 = vmatpush1.bf16.msra.mxu0 0
    %2664 = vmatprep.mubr.bf16.mxu0 0
    %2665 = vmatmul.mubr.bf16.gmra.mrb[0].mxu0 %v1818
    %v2666 = vpop.f32.mrb[0].mxu0
    %v2667 = vadd.f32 %v2554, %v2666
    %v2668 = vpop.f32.mrb[0].mxu0
    %v2669 = vadd.f32 %v2556, %v2668
    %v2670 = vpop.f32.mrb[0].mxu0
    %v2671 = vadd.f32 %v2558, %v2670
    %v2672 = vpop.f32.mrb[0].mxu0
    %v2673 = vadd.f32 %v2560, %v2672
    %2674 = vmatprep.mubr.bf16.mxu0 0
    %2675 = vmatmul.mubr.bf16.gmra.mrb[0].mxu0 %v1821
    %v2676 = vpop.f32.mrb[0].mxu0
    %v2677 = vadd.f32 %v2564, %v2676
    %v2678 = vpop.f32.mrb[0].mxu0
    %v2679 = vadd.f32 %v2566, %v2678
    %v2680 = vpop.f32.mrb[0].mxu0
    %v2681 = vadd.f32 %v2568, %v2680
    %v2682 = vpop.f32.mrb[0].mxu0
    %v2683 = vadd.f32 %v2570, %v2682
    %2684 = vmatprep.mubr.bf16.mxu0 0
    %2685 = vmatmul.mubr.bf16.gmra.mrb[0].mxu0 %v1824
    %v2686 = vpop.f32.mrb[0].mxu0
    %v2687 = vadd.f32 %v2574, %v2686
    %v2688 = vpop.f32.mrb[0].mxu0
    %v2689 = vadd.f32 %v2576, %v2688
    %v2690 = vpop.f32.mrb[0].mxu0
    %v2691 = vadd.f32 %v2578, %v2690
    %v2692 = vpop.f32.mrb[0].mxu0
    %v2693 = vadd.f32 %v2580, %v2692
    %2694 = vmatprep.mubr.bf16.mxu0 0
    %2695 = vmatmul.mubr.bf16.gmra.mrb[0].mxu0 %v1827
    %v2696 = vpop.f32.mrb[0].mxu0
    %v2697 = vadd.f32 %v2584, %v2696
    %v2698 = vpop.f32.mrb[0].mxu0
    %v2699 = vadd.f32 %v2586, %v2698
    %v2700 = vpop.f32.mrb[0].mxu0
    %v2701 = vadd.f32 %v2588, %v2700
    %v2702 = vpop.f32.mrb[0].mxu0
    %v2703 = vadd.f32 %v2590, %v2702
    %2704 = vmatprep.mubr.bf16.mxu0 0
    %2705 = vmatmul.mubr.bf16.gmra.mrb[0].mxu0 %v1830
    %v2706 = vpop.f32.mrb[0].mxu0
    %v2707 = vadd.f32 %v2594, %v2706
    %v2708 = vpop.f32.mrb[0].mxu0
    %v2709 = vadd.f32 %v2596, %v2708
    %v2710 = vpop.f32.mrb[0].mxu0
    %v2711 = vadd.f32 %v2598, %v2710
    %v2712 = vpop.f32.mrb[0].mxu0
    %v2713 = vadd.f32 %v2600, %v2712
    %2714 = vmatprep.mubr.bf16.mxu0 0
    %2715 = vmatmul.mubr.bf16.gmra.mrb[0].mxu0 %v1833
    %v2716 = vpop.f32.mrb[0].mxu0
    %v2717 = vadd.f32 %v2604, %v2716
    %v2718 = vpop.f32.mrb[0].mxu0
    %v2719 = vadd.f32 %v2606, %v2718
    %v2720 = vpop.f32.mrb[0].mxu0
    %v2721 = vadd.f32 %v2608, %v2720
    %v2722 = vpop.f32.mrb[0].mxu0
    %v2723 = vadd.f32 %v2610, %v2722
    %2724 = vmatprep.mubr.bf16.mxu0 0
    %2725 = vmatmul.mubr.bf16.gmra.mrb[0].mxu0 %v1836
    %v2726 = vpop.f32.mrb[0].mxu0
    %v2727 = vadd.f32 %v2614, %v2726
    %v2728 = vpop.f32.mrb[0].mxu0
    %v2729 = vadd.f32 %v2616, %v2728
    %v2730 = vpop.f32.mrb[0].mxu0
    %v2731 = vadd.f32 %v2618, %v2730
    %v2732 = vpop.f32.mrb[0].mxu0
    %v2733 = vadd.f32 %v2620, %v2732
    %2734 = vmatprep.mubr.bf16.mxu0 0
    %2735 = vmatmul.mubr.bf16.gmra.mrb[0].mxu0 %v1839
    %v2736 = vpop.f32.mrb[0].mxu0
    %v2737 = vadd.f32 %v2624, %v2736
    %v2738 = vpop.f32.mrb[0].mxu0
    %v2739 = vadd.f32 %v2626, %v2738
    %v2740 = vpop.f32.mrb[0].mxu0
    %v2741 = vadd.f32 %v2628, %v2740
    %v2742 = vpop.f32.mrb[0].mxu0
    %v2743 = vadd.f32 %v2630, %v2742
    %2744 = vdwg.mxu0
    %2745 = vmatprep.subr.bf16.mxu0 0
    %2746 = vmatpush1.bf16.msra.mxu0 %v1330
    %2747 = vmatprep.subr.bf16.mxu0 0
    %2748 = vmatpush1.bf16.msra.mxu0 %v1335
    %2749 = vmatprep.subr.bf16.mxu0 0
    %2750 = vmatpush1.bf16.msra.mxu0 %v1340
    %2751 = vmatprep.subr.bf16.mxu0 0
    %2752 = vmatpush1.bf16.msra.mxu0 %v1345
    %2753 = vmatprep.subr.bf16.mxu0 0
    %2754 = vmatpush1.bf16.msra.mxu0 %v1350
    %2755 = vmatprep.subr.bf16.mxu0 0
    %2756 = vmatpush1.bf16.msra.mxu0 %v1355
    %2757 = vmatprep.subr.bf16.mxu0 0
    %2758 = vmatpush1.bf16.msra.mxu0 %v1360
    %2759 = vmatprep.subr.bf16.mxu0 0
    %2760 = vmatpush1.bf16.msra.mxu0 %v1365
    %2761 = vmatprep.subr.bf16.mxu0 0
    %2762 = vmatpush1.bf16.msra.mxu0 %v1370
    %2763 = vmatprep.subr.bf16.mxu0 0
    %2764 = vmatpush1.bf16.msra.mxu0 %v1375
    %2765 = vmatprep.subr.bf16.mxu0 0
    %2766 = vmatpush1.bf16.msra.mxu0 %v1380
    %2767 = vmatprep.subr.bf16.mxu0 0
    %2768 = vmatpush1.bf16.msra.mxu0 %v1385
    %2769 = vmatprep.subr.bf16.mxu0 0
    %2770 = vmatpush1.bf16.msra.mxu0 %v1390
    %2771 = vmatprep.subr.bf16.mxu0 0
    %2772 = vmatpush1.bf16.msra.mxu0 %v1395
    %2773 = vmatprep.subr.bf16.mxu0 0
    %2774 = vmatpush1.bf16.msra.mxu0 %v1400
    %2775 = vmatprep.subr.bf16.mxu0 0
    %2776 = vmatpush1.bf16.msra.mxu0 %v1405
    %2777 = vmatprep.mubr.bf16.mxu0 %v166
    %2778 = vmatmul.mubr.bf16.gmra.mrb[0].mxu0 %v165
    %v2779 = vpop.f32.mrb[0].mxu0
    %v2780 = vadd.f32 %v536, %v2779
    %v2781 = vpop.f32.mrb[0].mxu0
    %v2782 = vpop.f32.mrb[0].mxu0
    %v2783 = vadd.f32 %v536, %v2782
    %v2784 = vpop.f32.mrb[0].mxu0
    %2785 = vmatprep.mubr.bf16.mxu0 %v173
    %2786 = vmatmul.mubr.bf16.gmra.mrb[0].mxu0 %v172
    %v2787 = vpop.f32.mrb[0].mxu0
    %v2788 = vadd.f32 %v536, %v2787
    %v2789 = vpop.f32.mrb[0].mxu0
    %v2790 = vpop.f32.mrb[0].mxu0
    %v2791 = vadd.f32 %v536, %v2790
    %v2792 = vpop.f32.mrb[0].mxu0
    %2793 = vmatprep.mubr.bf16.mxu0 %v180
    %2794 = vmatmul.mubr.bf16.gmra.mrb[0].mxu0 %v179
    %v2795 = vpop.f32.mrb[0].mxu0
    %v2796 = vadd.f32 %v536, %v2795
    %v2797 = vpop.f32.mrb[0].mxu0
    %v2798 = vpop.f32.mrb[0].mxu0
    %v2799 = vadd.f32 %v536, %v2798
    %v2800 = vpop.f32.mrb[0].mxu0
    %2801 = vmatprep.mubr.bf16.mxu0 %v187
    %2802 = vmatmul.mubr.bf16.gmra.mrb[0].mxu0 %v186
    %v2803 = vpop.f32.mrb[0].mxu0
    %v2804 = vadd.f32 %v536, %v2803
    %v2805 = vpop.f32.mrb[0].mxu0
    %v2806 = vpop.f32.mrb[0].mxu0
    %v2807 = vadd.f32 %v536, %v2806
    %v2808 = vpop.f32.mrb[0].mxu0
    %2809 = vmatprep.mubr.bf16.mxu0 %v194
    %2810 = vmatmul.mubr.bf16.gmra.mrb[0].mxu0 %v193
    %v2811 = vpop.f32.mrb[0].mxu0
    %v2812 = vadd.f32 %v536, %v2811
    %v2813 = vpop.f32.mrb[0].mxu0
    %v2814 = vpop.f32.mrb[0].mxu0
    %v2815 = vadd.f32 %v536, %v2814
    %v2816 = vpop.f32.mrb[0].mxu0
    %2817 = vmatprep.mubr.bf16.mxu0 %v201
    %2818 = vmatmul.mubr.bf16.gmra.mrb[0].mxu0 %v200
    %v2819 = vpop.f32.mrb[0].mxu0
    %v2820 = vadd.f32 %v536, %v2819
    %v2821 = vpop.f32.mrb[0].mxu0
    %v2822 = vpop.f32.mrb[0].mxu0
    %v2823 = vadd.f32 %v536, %v2822
    %v2824 = vpop.f32.mrb[0].mxu0
    %2825 = vmatprep.mubr.bf16.mxu0 %v208
    %2826 = vmatmul.mubr.bf16.gmra.mrb[0].mxu0 %v207
    %v2827 = vpop.f32.mrb[0].mxu0
    %v2828 = vadd.f32 %v536, %v2827
    %v2829 = vpop.f32.mrb[0].mxu0
    %v2830 = vpop.f32.mrb[0].mxu0
    %v2831 = vadd.f32 %v536, %v2830
    %v2832 = vpop.f32.mrb[0].mxu0
    %2833 = vmatprep.mubr.bf16.mxu0 %v215
    %2834 = vmatmul.mubr.bf16.gmra.mrb[0].mxu0 %v214
    %v2835 = vpop.f32.mrb[0].mxu0
    %v2836 = vadd.f32 %v536, %v2835
    %v2837 = vpop.f32.mrb[0].mxu0
    %v2838 = vpop.f32.mrb[0].mxu0
    %v2839 = vadd.f32 %v536, %v2838
    %v2840 = vpop.f32.mrb[0].mxu0
    %2841 = vdwg.mxu0
    %2842 = vmatprep.subr.bf16.mxu0 0
    %2843 = vmatpush1.bf16.msra.mxu0 %v1410
    %2844 = vmatprep.subr.bf16.mxu0 0
    %2845 = vmatpush1.bf16.msra.mxu0 %v1415
    %2846 = vmatprep.subr.bf16.mxu0 0
    %2847 = vmatpush1.bf16.msra.mxu0 %v1420
    %2848 = vmatprep.subr.bf16.mxu0 0
    %2849 = vmatpush1.bf16.msra.mxu0 %v1425
    %2850 = vmatprep.subr.bf16.mxu0 0
    %2851 = vmatpush1.bf16.msra.mxu0 %v1430
    %2852 = vmatprep.subr.bf16.mxu0 0
    %2853 = vmatpush1.bf16.msra.mxu0 %v1435
    %2854 = vmatprep.subr.bf16.mxu0 0
    %2855 = vmatpush1.bf16.msra.mxu0 %v1440
    %2856 = vmatprep.subr.bf16.mxu0 0
    %2857 = vmatpush1.bf16.msra.mxu0 %v1445
    %2858 = vmatprep.subr.bf16.mxu0 0
    %2859 = vmatpush1.bf16.msra.mxu0 %v1450
    %2860 = vmatprep.subr.bf16.mxu0 0
    %2861 = vmatpush1.bf16.msra.mxu0 %v1455
    %2862 = vmatprep.subr.bf16.mxu0 0
    %2863 = vmatpush1.bf16.msra.mxu0 %v1460
    %2864 = vmatprep.subr.bf16.mxu0 0
    %2865 = vmatpush1.bf16.msra.mxu0 %v1465
    %2866 = vmatprep.subr.bf16.mxu0 0
    %2867 = vmatpush1.bf16.msra.mxu0 %v1470
    %2868 = vmatprep.subr.bf16.mxu0 0
    %2869 = vmatpush1.bf16.msra.mxu0 %v1475
    %2870 = vmatprep.subr.bf16.mxu0 0
    %2871 = vmatpush1.bf16.msra.mxu0 %v1480
    %2872 = vmatprep.subr.bf16.mxu0 0
    %2873 = vmatpush1.bf16.msra.mxu0 %v1485
    %2874 = vmatprep.mubr.bf16.mxu0 %v168
    %2875 = vmatmul.mubr.bf16.gmra.mrb[0].mxu0 %v167
    %v2876 = vpop.f32.mrb[0].mxu0
    %v2877 = vadd.f32 %v2780, %v2876
    %v2878 = vpop.f32.mrb[0].mxu0
    %v2879 = vpop.f32.mrb[0].mxu0
    %v2880 = vadd.f32 %v2783, %v2879
    %v2881 = vpop.f32.mrb[0].mxu0
    %2882 = vmatprep.mubr.bf16.mxu0 %v175
    %2883 = vmatmul.mubr.bf16.gmra.mrb[0].mxu0 %v174
    %v2884 = vpop.f32.mrb[0].mxu0
    %v2885 = vadd.f32 %v2788, %v2884
    %v2886 = vpop.f32.mrb[0].mxu0
    %v2887 = vpop.f32.mrb[0].mxu0
    %v2888 = vadd.f32 %v2791, %v2887
    %v2889 = vpop.f32.mrb[0].mxu0
    %2890 = vmatprep.mubr.bf16.mxu0 %v182
    %2891 = vmatmul.mubr.bf16.gmra.mrb[0].mxu0 %v181
    %v2892 = vpop.f32.mrb[0].mxu0
    %v2893 = vadd.f32 %v2796, %v2892
    %v2894 = vpop.f32.mrb[0].mxu0
    %v2895 = vpop.f32.mrb[0].mxu0
    %v2896 = vadd.f32 %v2799, %v2895
    %v2897 = vpop.f32.mrb[0].mxu0
    %2898 = vmatprep.mubr.bf16.mxu0 %v189
    %2899 = vmatmul.mubr.bf16.gmra.mrb[0].mxu0 %v188
    %v2900 = vpop.f32.mrb[0].mxu0
    %v2901 = vadd.f32 %v2804, %v2900
    %v2902 = vpop.f32.mrb[0].mxu0
    %v2903 = vpop.f32.mrb[0].mxu0
    %v2904 = vadd.f32 %v2807, %v2903
    %v2905 = vpop.f32.mrb[0].mxu0
    %2906 = vmatprep.mubr.bf16.mxu0 %v196
    %2907 = vmatmul.mubr.bf16.gmra.mrb[0].mxu0 %v195
    %v2908 = vpop.f32.mrb[0].mxu0
    %v2909 = vadd.f32 %v2812, %v2908
    %v2910 = vpop.f32.mrb[0].mxu0
    %v2911 = vpop.f32.mrb[0].mxu0
    %v2912 = vadd.f32 %v2815, %v2911
    %v2913 = vpop.f32.mrb[0].mxu0
    %2914 = vmatprep.mubr.bf16.mxu0 %v203
    %2915 = vmatmul.mubr.bf16.gmra.mrb[0].mxu0 %v202
    %v2916 = vpop.f32.mrb[0].mxu0
    %v2917 = vadd.f32 %v2820, %v2916
    %v2918 = vpop.f32.mrb[0].mxu0
    %v2919 = vpop.f32.mrb[0].mxu0
    %v2920 = vadd.f32 %v2823, %v2919
    %v2921 = vpop.f32.mrb[0].mxu0
    %2922 = vmatprep.mubr.bf16.mxu0 %v210
    %2923 = vmatmul.mubr.bf16.gmra.mrb[0].mxu0 %v209
    %v2924 = vpop.f32.mrb[0].mxu0
    %v2925 = vadd.f32 %v2828, %v2924
    %v2926 = vpop.f32.mrb[0].mxu0
    %v2927 = vpop.f32.mrb[0].mxu0
    %v2928 = vadd.f32 %v2831, %v2927
    %v2929 = vpop.f32.mrb[0].mxu0
    %2930 = vmatprep.mubr.bf16.mxu0 %v217
    %2931 = vmatmul.mubr.bf16.gmra.mrb[0].mxu0 %v216
    %v2932 = vpop.f32.mrb[0].mxu0
    %v2933 = vadd.f32 %v2836, %v2932
    %v2934 = vpop.f32.mrb[0].mxu0
    %v2935 = vpop.f32.mrb[0].mxu0
    %v2936 = vadd.f32 %v2839, %v2935
    %v2937 = vpop.f32.mrb[0].mxu0
    %2938 = vdwg.mxu0
    %2939 = vmatprep.subr.bf16.mxu0 0
    %2940 = vmatpush1.bf16.msra.mxu0 %v1490
    %2941 = vmatprep.subr.bf16.mxu0 0
    %2942 = vmatpush1.bf16.msra.mxu0 %v1495
    %2943 = vmatprep.subr.bf16.mxu0 0
    %2944 = vmatpush1.bf16.msra.mxu0 %v1500
    %2945 = vmatprep.subr.bf16.mxu0 0
    %2946 = vmatpush1.bf16.msra.mxu0 %v1505
    %2947 = vmatprep.subr.bf16.mxu0 0
    %2948 = vmatpush1.bf16.msra.mxu0 %v1510
    %2949 = vmatprep.subr.bf16.mxu0 0
    %2950 = vmatpush1.bf16.msra.mxu0 %v1515
    %2951 = vmatprep.subr.bf16.mxu0 0
    %2952 = vmatpush1.bf16.msra.mxu0 %v1520
    %2953 = vmatprep.subr.bf16.mxu0 0
    %2954 = vmatpush1.bf16.msra.mxu0 %v1525
    %2955 = vmatprep.subr.bf16.mxu0 0
    %2956 = vmatpush1.bf16.msra.mxu0 %v1530
    %2957 = vmatprep.subr.bf16.mxu0 0
    %2958 = vmatpush1.bf16.msra.mxu0 %v1535
    %2959 = vmatprep.subr.bf16.mxu0 0
    %2960 = vmatpush1.bf16.msra.mxu0 %v1540
    %2961 = vmatprep.subr.bf16.mxu0 0
    %2962 = vmatpush1.bf16.msra.mxu0 %v1545
    %2963 = vmatprep.subr.bf16.mxu0 0
    %2964 = vmatpush1.bf16.msra.mxu0 %v1550
    %2965 = vmatprep.subr.bf16.mxu0 0
    %2966 = vmatpush1.bf16.msra.mxu0 %v1555
    %2967 = vmatprep.subr.bf16.mxu0 0
    %2968 = vmatpush1.bf16.msra.mxu0 %v1560
    %2969 = vmatprep.subr.bf16.mxu0 0
    %2970 = vmatpush1.bf16.msra.mxu0 %v1565
    %2971 = vmatprep.mubr.bf16.mxu0 %v170
    %2972 = vmatmul.mubr.bf16.gmra.mrb[0].mxu0 %v169
    %v2973 = vpop.f32.mrb[0].mxu0
    %v2974 = vadd.f32 %v2877, %v2973
    %v2975 = vpop.f32.mrb[0].mxu0
    %v2976 = vpop.f32.mrb[0].mxu0
    %v2977 = vadd.f32 %v2880, %v2976
    %v2978 = vpop.f32.mrb[0].mxu0
    %2979 = vmatprep.mubr.bf16.mxu0 %v177
    %2980 = vmatmul.mubr.bf16.gmra.mrb[0].mxu0 %v176
    %v2981 = vpop.f32.mrb[0].mxu0
    %v2982 = vadd.f32 %v2885, %v2981
    %v2983 = vpop.f32.mrb[0].mxu0
    %v2984 = vpop.f32.mrb[0].mxu0
    %v2985 = vadd.f32 %v2888, %v2984
    %v2986 = vpop.f32.mrb[0].mxu0
    %2987 = vmatprep.mubr.bf16.mxu0 %v184
    %2988 = vmatmul.mubr.bf16.gmra.mrb[0].mxu0 %v183
    %v2989 = vpop.f32.mrb[0].mxu0
    %v2990 = vadd.f32 %v2893, %v2989
    %v2991 = vpop.f32.mrb[0].mxu0
    %v2992 = vpop.f32.mrb[0].mxu0
    %v2993 = vadd.f32 %v2896, %v2992
    %v2994 = vpop.f32.mrb[0].mxu0
    %2995 = vmatprep.mubr.bf16.mxu0 %v191
    %2996 = vmatmul.mubr.bf16.gmra.mrb[0].mxu0 %v190
    %v2997 = vpop.f32.mrb[0].mxu0
    %v2998 = vadd.f32 %v2901, %v2997
    %v2999 = vpop.f32.mrb[0].mxu0
    %v3000 = vpop.f32.mrb[0].mxu0
    %v3001 = vadd.f32 %v2904, %v3000
    %v3002 = vpop.f32.mrb[0].mxu0
    %3003 = vmatprep.mubr.bf16.mxu0 %v198
    %3004 = vmatmul.mubr.bf16.gmra.mrb[0].mxu0 %v197
    %v3005 = vpop.f32.mrb[0].mxu0
    %v3006 = vadd.f32 %v2909, %v3005
    %v3007 = vpop.f32.mrb[0].mxu0
    %v3008 = vpop.f32.mrb[0].mxu0
    %v3009 = vadd.f32 %v2912, %v3008
    %v3010 = vpop.f32.mrb[0].mxu0
    %3011 = vmatprep.mubr.bf16.mxu0 %v205
    %3012 = vmatmul.mubr.bf16.gmra.mrb[0].mxu0 %v204
    %v3013 = vpop.f32.mrb[0].mxu0
    %v3014 = vadd.f32 %v2917, %v3013
    %v3015 = vpop.f32.mrb[0].mxu0
    %v3016 = vpop.f32.mrb[0].mxu0
    %v3017 = vadd.f32 %v2920, %v3016
    %v3018 = vpop.f32.mrb[0].mxu0
    %3019 = vmatprep.mubr.bf16.mxu0 %v212
    %3020 = vmatmul.mubr.bf16.gmra.mrb[0].mxu0 %v211
    %v3021 = vpop.f32.mrb[0].mxu0
    %v3022 = vadd.f32 %v2925, %v3021
    %v3023 = vpop.f32.mrb[0].mxu0
    %v3024 = vpop.f32.mrb[0].mxu0
    %v3025 = vadd.f32 %v2928, %v3024
    %v3026 = vpop.f32.mrb[0].mxu0
    %3027 = vmatprep.mubr.bf16.mxu0 %v219
    %3028 = vmatmul.mubr.bf16.gmra.mrb[0].mxu0 %v218
    %v3029 = vpop.f32.mrb[0].mxu0
    %v3030 = vadd.f32 %v2933, %v3029
    %v3031 = vpop.f32.mrb[0].mxu0
    %v3032 = vpop.f32.mrb[0].mxu0
    %v3033 = vadd.f32 %v2936, %v3032
    %v3034 = vpop.f32.mrb[0].mxu0
    %3035 = vdwg.mxu0
    %3036 = vmatprep.subr.bf16.mxu0 0
    %3037 = vmatpush1.bf16.msra.mxu0 %v1570
    %3038 = vmatprep.subr.bf16.mxu0 0
    %3039 = vmatpush1.bf16.msra.mxu0 0
    %3040 = vmatprep.subr.bf16.mxu0 0
    %3041 = vmatpush1.bf16.msra.mxu0 0
    %3042 = vmatprep.subr.bf16.mxu0 0
    %3043 = vmatpush1.bf16.msra.mxu0 0
    %3044 = vmatprep.subr.bf16.mxu0 0
    %3045 = vmatpush1.bf16.msra.mxu0 0
    %3046 = vmatprep.subr.bf16.mxu0 0
    %3047 = vmatpush1.bf16.msra.mxu0 0
    %3048 = vmatprep.subr.bf16.mxu0 0
    %3049 = vmatpush1.bf16.msra.mxu0 0
    %3050 = vmatprep.subr.bf16.mxu0 0
    %3051 = vmatpush1.bf16.msra.mxu0 0
    %3052 = vmatprep.subr.bf16.mxu0 0
    %3053 = vmatpush1.bf16.msra.mxu0 0
    %3054 = vmatprep.subr.bf16.mxu0 0
    %3055 = vmatpush1.bf16.msra.mxu0 0
    %3056 = vmatprep.subr.bf16.mxu0 0
    %3057 = vmatpush1.bf16.msra.mxu0 0
    %3058 = vmatprep.subr.bf16.mxu0 0
    %3059 = vmatpush1.bf16.msra.mxu0 0
    %3060 = vmatprep.subr.bf16.mxu0 0
    %3061 = vmatpush1.bf16.msra.mxu0 0
    %3062 = vmatprep.subr.bf16.mxu0 0
    %3063 = vmatpush1.bf16.msra.mxu0 0
    %3064 = vmatprep.subr.bf16.mxu0 0
    %3065 = vmatpush1.bf16.msra.mxu0 0
    %3066 = vmatprep.subr.bf16.mxu0 0
    %3067 = vmatpush1.bf16.msra.mxu0 0
    %3068 = vmatprep.mubr.bf16.mxu0 0
    %3069 = vmatmul.mubr.bf16.gmra.mrb[0].mxu0 %v1818
    %v3070 = vpop.f32.mrb[0].mxu0
    %v3071 = vadd.f32 %v2974, %v3070
    %v3072 = vpop.f32.mrb[0].mxu0
    %v3073 = vpop.f32.mrb[0].mxu0
    %v3074 = vadd.f32 %v2977, %v3073
    %v3075 = vpop.f32.mrb[0].mxu0
    %3076 = vmatprep.mubr.bf16.mxu0 0
    %3077 = vmatmul.mubr.bf16.gmra.mrb[0].mxu0 %v1821
    %v3078 = vpop.f32.mrb[0].mxu0
    %v3079 = vadd.f32 %v2982, %v3078
    %v3080 = vpop.f32.mrb[0].mxu0
    %v3081 = vpop.f32.mrb[0].mxu0
    %v3082 = vadd.f32 %v2985, %v3081
    %v3083 = vpop.f32.mrb[0].mxu0
    %3084 = vmatprep.mubr.bf16.mxu0 0
    %3085 = vmatmul.mubr.bf16.gmra.mrb[0].mxu0 %v1824
    %v3086 = vpop.f32.mrb[0].mxu0
    %v3087 = vadd.f32 %v2990, %v3086
    %v3088 = vpop.f32.mrb[0].mxu0
    %v3089 = vpop.f32.mrb[0].mxu0
    %v3090 = vadd.f32 %v2993, %v3089
    %v3091 = vpop.f32.mrb[0].mxu0
    %3092 = vmatprep.mubr.bf16.mxu0 0
    %3093 = vmatmul.mubr.bf16.gmra.mrb[0].mxu0 %v1827
    %v3094 = vpop.f32.mrb[0].mxu0
    %v3095 = vadd.f32 %v2998, %v3094
    %v3096 = vpop.f32.mrb[0].mxu0
    %v3097 = vpop.f32.mrb[0].mxu0
    %v3098 = vadd.f32 %v3001, %v3097
    %v3099 = vpop.f32.mrb[0].mxu0
    %3100 = vmatprep.mubr.bf16.mxu0 0
    %3101 = vmatmul.mubr.bf16.gmra.mrb[0].mxu0 %v1830
    %v3102 = vpop.f32.mrb[0].mxu0
    %v3103 = vadd.f32 %v3006, %v3102
    %v3104 = vpop.f32.mrb[0].mxu0
    %v3105 = vpop.f32.mrb[0].mxu0
    %v3106 = vadd.f32 %v3009, %v3105
    %v3107 = vpop.f32.mrb[0].mxu0
    %3108 = vmatprep.mubr.bf16.mxu0 0
    %3109 = vmatmul.mubr.bf16.gmra.mrb[0].mxu0 %v1833
    %v3110 = vpop.f32.mrb[0].mxu0
    %v3111 = vadd.f32 %v3014, %v3110
    %v3112 = vpop.f32.mrb[0].mxu0
    %v3113 = vpop.f32.mrb[0].mxu0
    %v3114 = vadd.f32 %v3017, %v3113
    %v3115 = vpop.f32.mrb[0].mxu0
    %3116 = vmatprep.mubr.bf16.mxu0 0
    %3117 = vmatmul.mubr.bf16.gmra.mrb[0].mxu0 %v1836
    %v3118 = vpop.f32.mrb[0].mxu0
    %v3119 = vadd.f32 %v3022, %v3118
    %v3120 = vpop.f32.mrb[0].mxu0
    %v3121 = vpop.f32.mrb[0].mxu0
    %v3122 = vadd.f32 %v3025, %v3121
    %v3123 = vpop.f32.mrb[0].mxu0
    %3124 = vmatprep.mubr.bf16.mxu0 0
    %3125 = vmatmul.mubr.bf16.gmra.mrb[0].mxu0 %v1839
    %v3126 = vpop.f32.mrb[0].mxu0
    %v3127 = vadd.f32 %v3030, %v3126
    %v3128 = vpop.f32.mrb[0].mxu0
    %v3129 = vpop.f32.mrb[0].mxu0
    %v3130 = vadd.f32 %v3033, %v3129
    %v3131 = vpop.f32.mrb[0].mxu0
    %3132 = vdwg.mxu0
    %v3133 = vmax.f32 %v2215, 0.0
    %v3134 = vmax.f32 %v2217, 0.0
    %v3135 = vmax.f32 %v2667, 0.0
    %v3136 = vmax.f32 %v2669, 0.0
    %v3137 = vmax.f32 %v3071, 0.0
    %v3138 = vmax.f32 %v2219, 0.0
    %v3139 = vmax.f32 %v2221, 0.0
    %v3140 = vmax.f32 %v2671, 0.0
    %v3141 = vmax.f32 %v2673, 0.0
    %v3142 = vmax.f32 %v3074, 0.0
    %v3143 = vmax.f32 %v2225, 0.0
    %v3144 = vmax.f32 %v2227, 0.0
    %v3145 = vmax.f32 %v2677, 0.0
    %v3146 = vmax.f32 %v2679, 0.0
    %v3147 = vmax.f32 %v3079, 0.0
    %v3148 = vmax.f32 %v2229, 0.0
    %v3149 = vmax.f32 %v2231, 0.0
    %v3150 = vmax.f32 %v2681, 0.0
    %v3151 = vmax.f32 %v2683, 0.0
    %v3152 = vmax.f32 %v3082, 0.0
    %v3153 = vmax.f32 %v2235, 0.0
    %v3154 = vmax.f32 %v2237, 0.0
    %v3155 = vmax.f32 %v2687, 0.0
    %v3156 = vmax.f32 %v2689, 0.0
    %v3157 = vmax.f32 %v3087, 0.0
    %v3158 = vmax.f32 %v2239, 0.0
    %v3159 = vmax.f32 %v2241, 0.0
    %v3160 = vmax.f32 %v2691, 0.0
    %v3161 = vmax.f32 %v2693, 0.0
    %v3162 = vmax.f32 %v3090, 0.0
    %v3163 = vmax.f32 %v2245, 0.0
    %v3164 = vmax.f32 %v2247, 0.0
    %v3165 = vmax.f32 %v2697, 0.0
    %v3166 = vmax.f32 %v2699, 0.0
    %v3167 = vmax.f32 %v3095, 0.0
    %v3168 = vmax.f32 %v2249, 0.0
    %v3169 = vmax.f32 %v2251, 0.0
    %v3170 = vmax.f32 %v2701, 0.0
    %v3171 = vmax.f32 %v2703, 0.0
    %v3172 = vmax.f32 %v3098, 0.0
    %v3173 = vmax.f32 %v2255, 0.0
    %v3174 = vmax.f32 %v2257, 0.0
    %v3175 = vmax.f32 %v2707, 0.0
    %v3176 = vmax.f32 %v2709, 0.0
    %v3177 = vmax.f32 %v3103, 0.0
    %v3178 = vmax.f32 %v2259, 0.0
    %v3179 = vmax.f32 %v2261, 0.0
    %v3180 = vmax.f32 %v2711, 0.0
    %v3181 = vmax.f32 %v2713, 0.0
    %v3182 = vmax.f32 %v3106, 0.0
    %v3183 = vmax.f32 %v2265, 0.0
    %v3184 = vmax.f32 %v2267, 0.0
    %v3185 = vmax.f32 %v2717, 0.0
    %v3186 = vmax.f32 %v2719, 0.0
    %v3187 = vmax.f32 %v3111, 0.0
    %v3188 = vmax.f32 %v2269, 0.0
    %v3189 = vmax.f32 %v2271, 0.0
    %v3190 = vmax.f32 %v2721, 0.0
    %v3191 = vmax.f32 %v2723, 0.0
    %v3192 = vmax.f32 %v3114, 0.0
    %v3193 = vmax.f32 %v2275, 0.0
    %v3194 = vmax.f32 %v2277, 0.0
    %v3195 = vmax.f32 %v2727, 0.0
    %v3196 = vmax.f32 %v2729, 0.0
    %v3197 = vmax.f32 %v3119, 0.0
    %v3198 = vmax.f32 %v2279, 0.0
    %v3199 = vmax.f32 %v2281, 0.0
    %v3200 = vmax.f32 %v2731, 0.0
    %v3201 = vmax.f32 %v2733, 0.0
    %v3202 = vmax.f32 %v3122, 0.0
    %v3203 = vmax.f32 %v2285, 0.0
    %v3204 = vmax.f32 %v2287, 0.0
    %v3205 = vmax.f32 %v2737, 0.0
    %v3206 = vmax.f32 %v2739, 0.0
    %v3207 = vmax.f32 %v3127, 0.0
    %v3208 = vmax.f32 %v2289, 0.0
    %v3209 = vmax.f32 %v2291, 0.0
    %v3210 = vmax.f32 %v2741, 0.0
    %v3211 = vmax.f32 %v2743, 0.0
    %v3212 = vmax.f32 %v3130, 0.0
    %v3213 = vpack.c.bf16 %v3138, %v3133
    %v3214 = vpack.c.bf16 %v3139, %v3134
    %v3215 = vpack.c.bf16 %v3140, %v3135
    %v3216 = vpack.c.bf16 %v3141, %v3136
    %v3217 = vpack.c.bf16 %v3142, %v3137
    %v3218 = vpack.c.bf16 %v3148, %v3143
    %v3219 = vpack.c.bf16 %v3149, %v3144
    %v3220 = vpack.c.bf16 %v3150, %v3145
    %v3221 = vpack.c.bf16 %v3151, %v3146
    %v3222 = vpack.c.bf16 %v3152, %v3147
    %v3223 = vpack.c.bf16 %v3158, %v3153
    %v3224 = vpack.c.bf16 %v3159, %v3154
    %v3225 = vpack.c.bf16 %v3160, %v3155
    %v3226 = vpack.c.bf16 %v3161, %v3156
    %v3227 = vpack.c.bf16 %v3162, %v3157
    %v3228 = vpack.c.bf16 %v3168, %v3163
    %v3229 = vpack.c.bf16 %v3169, %v3164
    %v3230 = vpack.c.bf16 %v3170, %v3165
    %v3231 = vpack.c.bf16 %v3171, %v3166
    %v3232 = vpack.c.bf16 %v3172, %v3167
    %v3233 = vpack.c.bf16 %v3178, %v3173
    %v3234 = vpack.c.bf16 %v3179, %v3174
    %v3235 = vpack.c.bf16 %v3180, %v3175
    %v3236 = vpack.c.bf16 %v3181, %v3176
    %v3237 = vpack.c.bf16 %v3182, %v3177
    %v3238 = vpack.c.bf16 %v3188, %v3183
    %v3239 = vpack.c.bf16 %v3189, %v3184
    %v3240 = vpack.c.bf16 %v3190, %v3185
    %v3241 = vpack.c.bf16 %v3191, %v3186
    %v3242 = vpack.c.bf16 %v3192, %v3187
    %v3243 = vpack.c.bf16 %v3198, %v3193
    %v3244 = vpack.c.bf16 %v3199, %v3194
    %v3245 = vpack.c.bf16 %v3200, %v3195
    %v3246 = vpack.c.bf16 %v3201, %v3196
    %v3247 = vpack.c.bf16 %v3202, %v3197
    %v3248 = vpack.c.bf16 %v3208, %v3203
    %v3249 = vpack.c.bf16 %v3209, %v3204
    %v3250 = vpack.c.bf16 %v3210, %v3205
    %v3251 = vpack.c.bf16 %v3211, %v3206
    %v3252 = vpack.c.bf16 %v3212, %v3207
    %v3253 = vld [vmem:[%s3] sm:$0xff]
    %v3254 = vld [vmem:[%s3 + $0x8] sm:$0xf]
    %v3255 = vld [vmem:[%s3 + $0xc] sm:$0xff]
    %v3256 = vld [vmem:[%s3 + $0x14] sm:$0xf]
    %v3257 = vld [vmem:[%s3 + $0x18] sm:$0xff]
    %v3258 = vld [vmem:[%s3 + $0x20] sm:$0xf]
    %v3259 = vld [vmem:[%s3 + $0x24] sm:$0xff]
    %v3260 = vld [vmem:[%s3 + $0x2c] sm:$0xf]
    %v3261 = vld [vmem:[%s3 + $0x30] sm:$0xff]
    %v3262 = vld [vmem:[%s3 + $0x38] sm:$0xf]
    %v3263 = vld [vmem:[%s3 + $0x3c] sm:$0xff]
    %v3264 = vld [vmem:[%s3 + $0x44] sm:$0xf]
    %v3265 = vld [vmem:[%s3 + $0x48] sm:$0xff]
    %v3266 = vld [vmem:[%s3 + $0x50] sm:$0xf]
    %v3267 = vld [vmem:[%s3 + $0x54] sm:$0xff]
    %v3268 = vld [vmem:[%s3 + $0x5c] sm:$0xf]
    %v3269 = vld [vmem:[%s3 + $0x60] sm:$0xff]
    %v3270 = vld [vmem:[%s3 + $0x68] sm:$0xf]
    %v3271 = vld [vmem:[%s3 + $0x6c] sm:$0xff]
    %v3272 = vld [vmem:[%s3 + $0x74] sm:$0xf]
    %v3273 = vld [vmem:[%s3 + $0x78] sm:$0xff]
    %v3274 = vld [vmem:[%s3 + $0x80] sm:$0xf]
    %v3275 = vld [vmem:[%s3 + $0x84] sm:$0xff]
    %v3276 = vld [vmem:[%s3 + $0x8c] sm:$0xf]
    %v3277 = vld [vmem:[%s3 + $0x90] sm:$0xff]
    %v3278 = vld [vmem:[%s3 + $0x98] sm:$0xf]
    %v3279 = vld [vmem:[%s3 + $0x9c] sm:$0xff]
    %v3280 = vld [vmem:[%s3 + $0xa4] sm:$0xf]
    %v3281 = vld [vmem:[%s3 + $0xa8] sm:$0xff]
    %v3282 = vld [vmem:[%s3 + $0xb0] sm:$0xf]
    %v3283 = vld [vmem:[%s3 + $0xb4] sm:$0xff]
    %v3284 = vld [vmem:[%s3 + $0xbc] sm:$0xf]
    %v3285 = vld [vmem:[%s3 + $0xc0] sm:$0xff]
    %v3286 = vld [vmem:[%s3 + $0xc8] sm:$0xf]
    %v3287 = vld [vmem:[%s3 + $0xcc] sm:$0xff]
    %v3288 = vld [vmem:[%s3 + $0xd4] sm:$0xf]
    %v3289 = vld [vmem:[%s3 + $0xd8] sm:$0xff]
    %v3290 = vld [vmem:[%s3 + $0xe0] sm:$0xf]
    %v3291 = vld [vmem:[%s3 + $0xe4] sm:$0xff]
    %v3292 = vld [vmem:[%s3 + $0xec] sm:$0xf]
    %v3293 = vld [vmem:[%s3 + $0xf0] sm:$0xff]
    %v3294 = vld [vmem:[%s3 + $0xf8] sm:$0xf]
    %v3295 = vld [vmem:[%s3 + $0xfc] sm:$0xff]
    %v3296 = vld [vmem:[%s3 + $0x104] sm:$0xf]
    %v3297 = vld [vmem:[%s3 + $0x108] sm:$0xff]
    %v3298 = vld [vmem:[%s3 + $0x110] sm:$0xf]
    %v3299 = vld [vmem:[%s3 + $0x114] sm:$0xff]
    %v3300 = vld [vmem:[%s3 + $0x11c] sm:$0xf]
    %v3301 = vld [vmem:[%s3 + $0x120] sm:$0xff]
    %v3302 = vld [vmem:[%s3 + $0x128] sm:$0xf]
    %v3303 = vld [vmem:[%s3 + $0x12c] sm:$0xff]
    %v3304 = vld [vmem:[%s3 + $0x134] sm:$0xf]
    %v3305 = vld [vmem:[%s3 + $0x138] sm:$0xff]
    %v3306 = vld [vmem:[%s3 + $0x140] sm:$0xf]
    %v3307 = vld [vmem:[%s3 + $0x144] sm:$0xff]
    %v3308 = vld [vmem:[%s3 + $0x14c] sm:$0xf]
    %v3309 = vld [vmem:[%s3 + $0x150] sm:$0xff]
    %v3310 = vld [vmem:[%s3 + $0x158] sm:$0xf]
    %v3311 = vld [vmem:[%s3 + $0x15c] sm:$0xff]
    %v3312 = vld [vmem:[%s3 + $0x164] sm:$0xf]
    %v3313 = vld [vmem:[%s3 + $0x168] sm:$0xff]
    %v3314 = vld [vmem:[%s3 + $0x170] sm:$0xf]
    %v3315 = vld [vmem:[%s3 + $0x174] sm:$0xff]
    %v3316 = vld [vmem:[%s3 + $0x17c] sm:$0xf]
    %v3317 = vld [vmem:[%s3 + $0x180] sm:$0xff]
    %v3318 = vld [vmem:[%s3 + $0x188] sm:$0xf]
    %v3319 = vld [vmem:[%s3 + $0x18c] sm:$0xff]
    %v3320 = vld [vmem:[%s3 + $0x194] sm:$0xf]
    %v3321 = vld [vmem:[%s3 + $0x198] sm:$0xff]
    %v3322 = vld [vmem:[%s3 + $0x1a0] sm:$0xf]
    %v3323 = vld [vmem:[%s3 + $0x1a4] sm:$0xff]
    %v3324 = vld [vmem:[%s3 + $0x1ac] sm:$0xf]
    %v3325 = vld [vmem:[%s3 + $0x1b0] sm:$0xff]
    %v3326 = vld [vmem:[%s3 + $0x1b8] sm:$0xf]
    %v3327 = vld [vmem:[%s3 + $0x1bc] sm:$0xff]
    %v3328 = vld [vmem:[%s3 + $0x1c4] sm:$0xf]
    %v3329 = vld [vmem:[%s3 + $0x1c8] sm:$0xff]
    %v3330 = vld [vmem:[%s3 + $0x1d0] sm:$0xf]
    %v3331 = vld [vmem:[%s3 + $0x1d4] sm:$0xff]
    %v3332 = vld [vmem:[%s3 + $0x1dc] sm:$0xf]
    %v3333 = vld [vmem:[%s3 + $0x1e0] sm:$0xff]
    %v3334 = vld [vmem:[%s3 + $0x1e8] sm:$0xf]
    %v3335 = vld [vmem:[%s3 + $0x1ec] sm:$0xff]
    %v3336 = vld [vmem:[%s3 + $0x1f4] sm:$0xf]
    %v3337 = vld [vmem:[%s3 + $0x1f8] sm:$0xff]
    %v3338 = vld [vmem:[%s3 + $0x200] sm:$0xf]
    %v3339 = vld [vmem:[%s3 + $0x204] sm:$0xff]
    %v3340 = vld [vmem:[%s3 + $0x20c] sm:$0xf]
    %v3341 = vld [vmem:[%s3 + $0x210] sm:$0xff]
    %v3342 = vld [vmem:[%s3 + $0x218] sm:$0xf]
    %v3343 = vld [vmem:[%s3 + $0x21c] sm:$0xff]
    %v3344 = vld [vmem:[%s3 + $0x224] sm:$0xf]
    %v3345 = vld [vmem:[%s3 + $0x228] sm:$0xff]
    %v3346 = vld [vmem:[%s3 + $0x230] sm:$0xf]
    %v3347 = vld [vmem:[%s3 + $0x234] sm:$0xff]
    %v3348 = vld [vmem:[%s3 + $0x23c] sm:$0xf]
    %v3349 = vld [vmem:[%s3 + $0x240] sm:$0xff]
    %v3350 = vld [vmem:[%s3 + $0x248] sm:$0xf]
    %v3351 = vld [vmem:[%s3 + $0x24c] sm:$0xff]
    %v3352 = vld [vmem:[%s3 + $0x254] sm:$0xf]
    %v3353 = vld [vmem:[%s3 + $0x258] sm:$0xff]
    %v3354 = vld [vmem:[%s3 + $0x260] sm:$0xf]
    %v3355 = vld [vmem:[%s3 + $0x264] sm:$0xff]
    %v3356 = vld [vmem:[%s3 + $0x26c] sm:$0xf]
    %v3357 = vld [vmem:[%s3 + $0x270] sm:$0xff]
    %v3358 = vld [vmem:[%s3 + $0x278] sm:$0xf]
    %v3359 = vld [vmem:[%s3 + $0x27c] sm:$0xff]
    %v3360 = vld [vmem:[%s3 + $0x284] sm:$0xf]
    %v3361 = vld [vmem:[%s3 + $0x288] sm:$0xff]
    %v3362 = vld [vmem:[%s3 + $0x290] sm:$0xf]
    %v3363 = vld [vmem:[%s3 + $0x294] sm:$0xff]
    %v3364 = vld [vmem:[%s3 + $0x29c] sm:$0xf]
    %v3365 = vld [vmem:[%s3 + $0x2a0] sm:$0xff]
    %v3366 = vld [vmem:[%s3 + $0x2a8] sm:$0xf]
    %v3367 = vld [vmem:[%s3 + $0x2ac] sm:$0xff]
    %v3368 = vld [vmem:[%s3 + $0x2b4] sm:$0xf]
    %v3369 = vld [vmem:[%s3 + $0x2b8] sm:$0xff]
    %v3370 = vld [vmem:[%s3 + $0x2c0] sm:$0xf]
    %v3371 = vld [vmem:[%s3 + $0x2c4] sm:$0xff]
    %v3372 = vld [vmem:[%s3 + $0x2cc] sm:$0xf]
    %v3373 = vld [vmem:[%s3 + $0x2d0] sm:$0xff]
    %v3374 = vld [vmem:[%s3 + $0x2d8] sm:$0xf]
    %v3375 = vld [vmem:[%s3 + $0x2dc] sm:$0xff]
    %v3376 = vld [vmem:[%s3 + $0x2e4] sm:$0xf]
    %v3377 = vld [vmem:[%s3 + $0x2e8] sm:$0xff]
    %v3378 = vld [vmem:[%s3 + $0x2f0] sm:$0xf]
    %v3379 = vld [vmem:[%s3 + $0x2f4] sm:$0xff]
    %v3380 = vld [vmem:[%s3 + $0x2fc] sm:$0xf]
    %v3381 = vld [vmem:[%s3 + $0x300] sm:$0xff]
    %v3382 = vld [vmem:[%s3 + $0x308] sm:$0xf]
    %v3383 = vld [vmem:[%s3 + $0x30c] sm:$0xff]
    %v3384 = vld [vmem:[%s3 + $0x314] sm:$0xf]
    %v3385 = vld [vmem:[%s3 + $0x318] sm:$0xff]
    %v3386 = vld [vmem:[%s3 + $0x320] sm:$0xf]
    %v3387 = vld [vmem:[%s3 + $0x324] sm:$0xff]
    %v3388 = vld [vmem:[%s3 + $0x32c] sm:$0xf]
    %v3389 = vld [vmem:[%s3 + $0x330] sm:$0xff]
    %v3390 = vld [vmem:[%s3 + $0x338] sm:$0xf]
    %v3391 = vld [vmem:[%s3 + $0x33c] sm:$0xff]
    %v3392 = vld [vmem:[%s3 + $0x344] sm:$0xf]
    %v3393 = vld [vmem:[%s3 + $0x348] sm:$0xff]
    %v3394 = vld [vmem:[%s3 + $0x350] sm:$0xf]
    %v3395 = vld [vmem:[%s3 + $0x354] sm:$0xff]
    %v3396 = vld [vmem:[%s3 + $0x35c] sm:$0xf]
    %v3397 = vld [vmem:[%s3 + $0x360] sm:$0xff]
    %v3398 = vld [vmem:[%s3 + $0x368] sm:$0xf]
    %v3399 = vld [vmem:[%s3 + $0x36c] sm:$0xff]
    %v3400 = vld [vmem:[%s3 + $0x374] sm:$0xf]
    %v3401 = vld [vmem:[%s3 + $0x378] sm:$0xff]
    %v3402 = vld [vmem:[%s3 + $0x380] sm:$0xf]
    %v3403 = vld [vmem:[%s3 + $0x384] sm:$0xff]
    %v3404 = vld [vmem:[%s3 + $0x38c] sm:$0xf]
    %v3405 = vld [vmem:[%s3 + $0x390] sm:$0xff]
    %v3406 = vld [vmem:[%s3 + $0x398] sm:$0xf]
    %v3407 = vld [vmem:[%s3 + $0x39c] sm:$0xff]
    %v3408 = vld [vmem:[%s3 + $0x3a4] sm:$0xf]
    %v3409 = vld [vmem:[%s3 + $0x3a8] sm:$0xff]
    %v3410 = vld [vmem:[%s3 + $0x3b0] sm:$0xf]
    %v3411 = vld [vmem:[%s3 + $0x3b4] sm:$0xff]
    %v3412 = vld [vmem:[%s3 + $0x3bc] sm:$0xf]
    %v3413 = vld [vmem:[%s4] sm:$0x7]
    %v3415 = vlaneseq
    %v3416 = vshrl.u32 %v3415, 7
    %v3417 = vsub.s32 0, %v3416
    %v3418 = vrot.slane %v3413, %v3417
    %v3419 = vlaneseq
    %v3420 = vshrl.u32 %v3419, 7
    %v3421 = vsub.s32 1, %v3420
    %v3422 = vrot.slane %v3413, %v3421
    %v3423 = vlaneseq
    %v3424 = vshrl.u32 %v3423, 7
    %v3425 = vsub.s32 2, %v3424
    %v3426 = vrot.slane %v3413, %v3425
    %v3590 = vunpack.c.l.b16 %v3253
    %v3591 = vunpack.c.h.b16 %v3253
    %v3592 = vunpack.c.l.b16 %v3254
    %v3593 = vunpack.c.l.b16 %v3255
    %v3594 = vunpack.c.h.b16 %v3255
    %v3595 = vunpack.c.l.b16 %v3256
    %v3596 = vunpack.c.l.b16 %v3257
    %v3597 = vunpack.c.h.b16 %v3257
    %v3598 = vunpack.c.l.b16 %v3258
    %v3599 = vunpack.c.l.b16 %v3259
    %v3600 = vunpack.c.h.b16 %v3259
    %v3601 = vunpack.c.l.b16 %v3260
    %v3602 = vunpack.c.l.b16 %v3261
    %v3603 = vunpack.c.h.b16 %v3261
    %v3604 = vunpack.c.l.b16 %v3262
    %v3605 = vunpack.c.l.b16 %v3263
    %v3606 = vunpack.c.h.b16 %v3263
    %v3607 = vunpack.c.l.b16 %v3264
    %v3608 = vunpack.c.l.b16 %v3265
    %v3609 = vunpack.c.h.b16 %v3265
    %v3610 = vunpack.c.l.b16 %v3266
    %v3611 = vunpack.c.l.b16 %v3267
    %v3612 = vunpack.c.h.b16 %v3267
    %v3613 = vunpack.c.l.b16 %v3268
    %v3614 = vunpack.c.l.b16 %v3269
    %v3615 = vunpack.c.h.b16 %v3269
    %v3616 = vunpack.c.l.b16 %v3270
    %v3617 = vunpack.c.l.b16 %v3271
    %v3618 = vunpack.c.h.b16 %v3271
    %v3619 = vunpack.c.l.b16 %v3272
    %v3620 = vunpack.c.l.b16 %v3273
    %v3621 = vunpack.c.h.b16 %v3273
    %v3622 = vunpack.c.l.b16 %v3274
    %v3623 = vunpack.c.l.b16 %v3275
    %v3624 = vunpack.c.h.b16 %v3275
    %v3625 = vunpack.c.l.b16 %v3276
    %v3626 = vunpack.c.l.b16 %v3277
    %v3627 = vunpack.c.h.b16 %v3277
    %v3628 = vunpack.c.l.b16 %v3278
    %v3629 = vunpack.c.l.b16 %v3279
    %v3630 = vunpack.c.h.b16 %v3279
    %v3631 = vunpack.c.l.b16 %v3280
    %v3632 = vunpack.c.l.b16 %v3281
    %v3633 = vunpack.c.h.b16 %v3281
    %v3634 = vunpack.c.l.b16 %v3282
    %v3635 = vunpack.c.l.b16 %v3283
    %v3636 = vunpack.c.h.b16 %v3283
    %v3637 = vunpack.c.l.b16 %v3284
    %v3638 = vunpack.c.l.b16 %v3285
    %v3639 = vunpack.c.h.b16 %v3285
    %v3640 = vunpack.c.l.b16 %v3286
    %v3641 = vunpack.c.l.b16 %v3287
    %v3642 = vunpack.c.h.b16 %v3287
    %v3643 = vunpack.c.l.b16 %v3288
    %v3644 = vunpack.c.l.b16 %v3289
    %v3645 = vunpack.c.h.b16 %v3289
    %v3646 = vunpack.c.l.b16 %v3290
    %v3647 = vunpack.c.l.b16 %v3291
    %v3648 = vunpack.c.h.b16 %v3291
    %v3649 = vunpack.c.l.b16 %v3292
    %v3650 = vunpack.c.l.b16 %v3293
    %v3651 = vunpack.c.h.b16 %v3293
    %v3652 = vunpack.c.l.b16 %v3294
    %v3653 = vunpack.c.l.b16 %v3295
    %v3654 = vunpack.c.h.b16 %v3295
    %v3655 = vunpack.c.l.b16 %v3296
    %v3656 = vunpack.c.l.b16 %v3297
    %v3657 = vunpack.c.h.b16 %v3297
    %v3658 = vunpack.c.l.b16 %v3298
    %v3659 = vunpack.c.l.b16 %v3299
    %v3660 = vunpack.c.h.b16 %v3299
    %v3661 = vunpack.c.l.b16 %v3300
    %v3662 = vunpack.c.l.b16 %v3301
    %v3663 = vunpack.c.h.b16 %v3301
    %v3664 = vunpack.c.l.b16 %v3302
    %v3665 = vunpack.c.l.b16 %v3303
    %v3666 = vunpack.c.h.b16 %v3303
    %v3667 = vunpack.c.l.b16 %v3304
    %v3668 = vunpack.c.l.b16 %v3305
    %v3669 = vunpack.c.h.b16 %v3305
    %v3670 = vunpack.c.l.b16 %v3306
    %v3671 = vunpack.c.l.b16 %v3307
    %v3672 = vunpack.c.h.b16 %v3307
    %v3673 = vunpack.c.l.b16 %v3308
    %v3674 = vunpack.c.l.b16 %v3309
    %v3675 = vunpack.c.h.b16 %v3309
    %v3676 = vunpack.c.l.b16 %v3310
    %v3677 = vunpack.c.l.b16 %v3311
    %v3678 = vunpack.c.h.b16 %v3311
    %v3679 = vunpack.c.l.b16 %v3312
    %v3680 = vunpack.c.l.b16 %v3313
    %v3681 = vunpack.c.h.b16 %v3313
    %v3682 = vunpack.c.l.b16 %v3314
    %v3683 = vunpack.c.l.b16 %v3315
    %v3684 = vunpack.c.h.b16 %v3315
    %v3685 = vunpack.c.l.b16 %v3316
    %v3686 = vunpack.c.l.b16 %v3317
    %v3687 = vunpack.c.h.b16 %v3317
    %v3688 = vunpack.c.l.b16 %v3318
    %v3689 = vunpack.c.l.b16 %v3319
    %v3690 = vunpack.c.h.b16 %v3319
    %v3691 = vunpack.c.l.b16 %v3320
    %v3692 = vunpack.c.l.b16 %v3321
    %v3693 = vunpack.c.h.b16 %v3321
    %v3694 = vunpack.c.l.b16 %v3322
    %v3695 = vunpack.c.l.b16 %v3323
    %v3696 = vunpack.c.h.b16 %v3323
    %v3697 = vunpack.c.l.b16 %v3324
    %v3698 = vunpack.c.l.b16 %v3325
    %v3699 = vunpack.c.h.b16 %v3325
    %v3700 = vunpack.c.l.b16 %v3326
    %v3701 = vunpack.c.l.b16 %v3327
    %v3702 = vunpack.c.h.b16 %v3327
    %v3703 = vunpack.c.l.b16 %v3328
    %v3704 = vunpack.c.l.b16 %v3329
    %v3705 = vunpack.c.h.b16 %v3329
    %v3706 = vunpack.c.l.b16 %v3330
    %v3707 = vunpack.c.l.b16 %v3331
    %v3708 = vunpack.c.h.b16 %v3331
    %v3709 = vunpack.c.l.b16 %v3332
    %v3710 = vunpack.c.l.b16 %v3333
    %v3711 = vunpack.c.h.b16 %v3333
    %v3712 = vunpack.c.l.b16 %v3334
    %v3713 = vunpack.c.l.b16 %v3335
    %v3714 = vunpack.c.h.b16 %v3335
    %v3715 = vunpack.c.l.b16 %v3336
    %v3716 = vunpack.c.l.b16 %v3337
    %v3717 = vunpack.c.h.b16 %v3337
    %v3718 = vunpack.c.l.b16 %v3338
    %v3719 = vunpack.c.l.b16 %v3339
    %v3720 = vunpack.c.h.b16 %v3339
    %v3721 = vunpack.c.l.b16 %v3340
    %v3722 = vunpack.c.l.b16 %v3341
    %v3723 = vunpack.c.h.b16 %v3341
    %v3724 = vunpack.c.l.b16 %v3342
    %v3725 = vunpack.c.l.b16 %v3343
    %v3726 = vunpack.c.h.b16 %v3343
    %v3727 = vunpack.c.l.b16 %v3344
    %v3728 = vunpack.c.l.b16 %v3345
    %v3729 = vunpack.c.h.b16 %v3345
    %v3730 = vunpack.c.l.b16 %v3346
    %v3731 = vunpack.c.l.b16 %v3347
    %v3732 = vunpack.c.h.b16 %v3347
    %v3733 = vunpack.c.l.b16 %v3348
    %v3734 = vunpack.c.l.b16 %v3349
    %v3735 = vunpack.c.h.b16 %v3349
    %v3736 = vunpack.c.l.b16 %v3350
    %v3737 = vunpack.c.l.b16 %v3351
    %v3738 = vunpack.c.h.b16 %v3351
    %v3739 = vunpack.c.l.b16 %v3352
    %v3740 = vunpack.c.l.b16 %v3353
    %v3741 = vunpack.c.h.b16 %v3353
    %v3742 = vunpack.c.l.b16 %v3354
    %v3743 = vunpack.c.l.b16 %v3355
    %v3744 = vunpack.c.h.b16 %v3355
    %v3745 = vunpack.c.l.b16 %v3356
    %v3746 = vunpack.c.l.b16 %v3357
    %v3747 = vunpack.c.h.b16 %v3357
    %v3748 = vunpack.c.l.b16 %v3358
    %v3749 = vunpack.c.l.b16 %v3359
    %v3750 = vunpack.c.h.b16 %v3359
    %v3751 = vunpack.c.l.b16 %v3360
    %v3752 = vunpack.c.l.b16 %v3361
    %v3753 = vunpack.c.h.b16 %v3361
    %v3754 = vunpack.c.l.b16 %v3362
    %v3755 = vunpack.c.l.b16 %v3363
    %v3756 = vunpack.c.h.b16 %v3363
    %v3757 = vunpack.c.l.b16 %v3364
    %v3758 = vunpack.c.l.b16 %v3365
    %v3759 = vunpack.c.h.b16 %v3365
    %v3760 = vunpack.c.l.b16 %v3366
    %v3761 = vunpack.c.l.b16 %v3367
    %v3762 = vunpack.c.h.b16 %v3367
    %v3763 = vunpack.c.l.b16 %v3368
    %v3764 = vunpack.c.l.b16 %v3369
    %v3765 = vunpack.c.h.b16 %v3369
    %v3766 = vunpack.c.l.b16 %v3370
    %v3767 = vunpack.c.l.b16 %v3371
    %v3768 = vunpack.c.h.b16 %v3371
    %v3769 = vunpack.c.l.b16 %v3372
    %v3770 = vunpack.c.l.b16 %v3373
    %v3771 = vunpack.c.h.b16 %v3373
    %v3772 = vunpack.c.l.b16 %v3374
    %v3773 = vunpack.c.l.b16 %v3375
    %v3774 = vunpack.c.h.b16 %v3375
    %v3775 = vunpack.c.l.b16 %v3376
    %v3776 = vunpack.c.l.b16 %v3377
    %v3777 = vunpack.c.h.b16 %v3377
    %v3778 = vunpack.c.l.b16 %v3378
    %v3779 = vunpack.c.l.b16 %v3379
    %v3780 = vunpack.c.h.b16 %v3379
    %v3781 = vunpack.c.l.b16 %v3380
    %v3782 = vunpack.c.l.b16 %v3381
    %v3783 = vunpack.c.h.b16 %v3381
    %v3784 = vunpack.c.l.b16 %v3382
    %v3785 = vunpack.c.l.b16 %v3383
    %v3786 = vunpack.c.h.b16 %v3383
    %v3787 = vunpack.c.l.b16 %v3384
    %v3788 = vunpack.c.l.b16 %v3385
    %v3789 = vunpack.c.h.b16 %v3385
    %v3790 = vunpack.c.l.b16 %v3386
    %v3791 = vunpack.c.l.b16 %v3387
    %v3792 = vunpack.c.h.b16 %v3387
    %v3793 = vunpack.c.l.b16 %v3388
    %v3794 = vunpack.c.l.b16 %v3389
    %v3795 = vunpack.c.h.b16 %v3389
    %v3796 = vunpack.c.l.b16 %v3390
    %v3797 = vunpack.c.l.b16 %v3391
    %v3798 = vunpack.c.h.b16 %v3391
    %v3799 = vunpack.c.l.b16 %v3392
    %v3800 = vunpack.c.l.b16 %v3393
    %v3801 = vunpack.c.h.b16 %v3393
    %v3802 = vunpack.c.l.b16 %v3394
    %v3803 = vunpack.c.l.b16 %v3395
    %v3804 = vunpack.c.h.b16 %v3395
    %v3805 = vunpack.c.l.b16 %v3396
    %v3806 = vunpack.c.l.b16 %v3397
    %v3807 = vunpack.c.h.b16 %v3397
    %v3808 = vunpack.c.l.b16 %v3398
    %v3809 = vunpack.c.l.b16 %v3399
    %v3810 = vunpack.c.h.b16 %v3399
    %v3811 = vunpack.c.l.b16 %v3400
    %v3812 = vunpack.c.l.b16 %v3401
    %v3813 = vunpack.c.h.b16 %v3401
    %v3814 = vunpack.c.l.b16 %v3402
    %v3815 = vunpack.c.l.b16 %v3403
    %v3816 = vunpack.c.h.b16 %v3403
    %v3817 = vunpack.c.l.b16 %v3404
    %v3818 = vunpack.c.l.b16 %v3405
    %v3819 = vunpack.c.h.b16 %v3405
    %v3820 = vunpack.c.l.b16 %v3406
    %v3821 = vunpack.c.l.b16 %v3407
    %v3822 = vunpack.c.h.b16 %v3407
    %v3823 = vunpack.c.l.b16 %v3408
    %v3824 = vunpack.c.l.b16 %v3409
    %v3825 = vunpack.c.h.b16 %v3409
    %v3826 = vunpack.c.l.b16 %v3410
    %v3827 = vunpack.c.l.b16 %v3411
    %v3828 = vunpack.c.h.b16 %v3411
    %v3829 = vunpack.c.l.b16 %v3412
    %v3830 = vpack.c.b16 %v3593, %v3590
    %v3831 = vpack.c.b16 %v3594, %v3591
    %v3832 = vpack.c.b16 %v3595, %v3592
    %v3833 = vpack.c.b16 %v3599, %v3596
    %v3834 = vpack.c.b16 %v3600, %v3597
    %v3835 = vpack.c.b16 %v3601, %v3598
    %v3836 = vpack.c.b16 %v3605, %v3602
    %v3837 = vpack.c.b16 %v3606, %v3603
    %v3838 = vpack.c.b16 %v3607, %v3604
    %v3839 = vpack.c.b16 %v3611, %v3608
    %v3840 = vpack.c.b16 %v3612, %v3609
    %v3841 = vpack.c.b16 %v3613, %v3610
    %v3842 = vpack.c.b16 %v3617, %v3614
    %v3843 = vpack.c.b16 %v3618, %v3615
    %v3844 = vpack.c.b16 %v3619, %v3616
    %v3845 = vpack.c.b16 %v3623, %v3620
    %v3846 = vpack.c.b16 %v3624, %v3621
    %v3847 = vpack.c.b16 %v3625, %v3622
    %v3848 = vpack.c.b16 %v3629, %v3626
    %v3849 = vpack.c.b16 %v3630, %v3627
    %v3850 = vpack.c.b16 %v3631, %v3628
    %v3851 = vpack.c.b16 %v3635, %v3632
    %v3852 = vpack.c.b16 %v3636, %v3633
    %v3853 = vpack.c.b16 %v3637, %v3634
    %v3854 = vpack.c.b16 %v3641, %v3638
    %v3855 = vpack.c.b16 %v3642, %v3639
    %v3856 = vpack.c.b16 %v3643, %v3640
    %v3857 = vpack.c.b16 %v3647, %v3644
    %v3858 = vpack.c.b16 %v3648, %v3645
    %v3859 = vpack.c.b16 %v3649, %v3646
    %v3860 = vpack.c.b16 %v3653, %v3650
    %v3861 = vpack.c.b16 %v3654, %v3651
    %v3862 = vpack.c.b16 %v3655, %v3652
    %v3863 = vpack.c.b16 %v3659, %v3656
    %v3864 = vpack.c.b16 %v3660, %v3657
    %v3865 = vpack.c.b16 %v3661, %v3658
    %v3866 = vpack.c.b16 %v3665, %v3662
    %v3867 = vpack.c.b16 %v3666, %v3663
    %v3868 = vpack.c.b16 %v3667, %v3664
    %v3869 = vpack.c.b16 %v3671, %v3668
    %v3870 = vpack.c.b16 %v3672, %v3669
    %v3871 = vpack.c.b16 %v3673, %v3670
    %v3872 = vpack.c.b16 %v3677, %v3674
    %v3873 = vpack.c.b16 %v3678, %v3675
    %v3874 = vpack.c.b16 %v3679, %v3676
    %v3875 = vpack.c.b16 %v3683, %v3680
    %v3876 = vpack.c.b16 %v3684, %v3681
    %v3877 = vpack.c.b16 %v3685, %v3682
    %v3878 = vpack.c.b16 %v3689, %v3686
    %v3879 = vpack.c.b16 %v3690, %v3687
    %v3880 = vpack.c.b16 %v3691, %v3688
    %v3881 = vpack.c.b16 %v3695, %v3692
    %v3882 = vpack.c.b16 %v3696, %v3693
    %v3883 = vpack.c.b16 %v3697, %v3694
    %v3884 = vpack.c.b16 %v3701, %v3698
    %v3885 = vpack.c.b16 %v3702, %v3699
    %v3886 = vpack.c.b16 %v3703, %v3700
    %v3887 = vpack.c.b16 %v3707, %v3704
    %v3888 = vpack.c.b16 %v3708, %v3705
    %v3889 = vpack.c.b16 %v3709, %v3706
    %v3890 = vpack.c.b16 %v3713, %v3710
    %v3891 = vpack.c.b16 %v3714, %v3711
    %v3892 = vpack.c.b16 %v3715, %v3712
    %v3893 = vpack.c.b16 %v3719, %v3716
    %v3894 = vpack.c.b16 %v3720, %v3717
    %v3895 = vpack.c.b16 %v3721, %v3718
    %v3896 = vpack.c.b16 %v3725, %v3722
    %v3897 = vpack.c.b16 %v3726, %v3723
    %v3898 = vpack.c.b16 %v3727, %v3724
    %v3899 = vpack.c.b16 %v3731, %v3728
    %v3900 = vpack.c.b16 %v3732, %v3729
    %v3901 = vpack.c.b16 %v3733, %v3730
    %v3902 = vpack.c.b16 %v3737, %v3734
    %v3903 = vpack.c.b16 %v3738, %v3735
    %v3904 = vpack.c.b16 %v3739, %v3736
    %v3905 = vpack.c.b16 %v3743, %v3740
    %v3906 = vpack.c.b16 %v3744, %v3741
    %v3907 = vpack.c.b16 %v3745, %v3742
    %v3908 = vpack.c.b16 %v3749, %v3746
    %v3909 = vpack.c.b16 %v3750, %v3747
    %v3910 = vpack.c.b16 %v3751, %v3748
    %v3911 = vpack.c.b16 %v3755, %v3752
    %v3912 = vpack.c.b16 %v3756, %v3753
    %v3913 = vpack.c.b16 %v3757, %v3754
    %v3914 = vpack.c.b16 %v3761, %v3758
    %v3915 = vpack.c.b16 %v3762, %v3759
    %v3916 = vpack.c.b16 %v3763, %v3760
    %v3917 = vpack.c.b16 %v3767, %v3764
    %v3918 = vpack.c.b16 %v3768, %v3765
    %v3919 = vpack.c.b16 %v3769, %v3766
    %v3920 = vpack.c.b16 %v3773, %v3770
    %v3921 = vpack.c.b16 %v3774, %v3771
    %v3922 = vpack.c.b16 %v3775, %v3772
    %v3923 = vpack.c.b16 %v3779, %v3776
    %v3924 = vpack.c.b16 %v3780, %v3777
    %v3925 = vpack.c.b16 %v3781, %v3778
    %v3926 = vpack.c.b16 %v3785, %v3782
    %v3927 = vpack.c.b16 %v3786, %v3783
    %v3928 = vpack.c.b16 %v3787, %v3784
    %v3929 = vpack.c.b16 %v3791, %v3788
    %v3930 = vpack.c.b16 %v3792, %v3789
    %v3931 = vpack.c.b16 %v3793, %v3790
    %v3932 = vpack.c.b16 %v3797, %v3794
    %v3933 = vpack.c.b16 %v3798, %v3795
    %v3934 = vpack.c.b16 %v3799, %v3796
    %v3935 = vpack.c.b16 %v3803, %v3800
    %v3936 = vpack.c.b16 %v3804, %v3801
    %v3937 = vpack.c.b16 %v3805, %v3802
    %v3938 = vpack.c.b16 %v3809, %v3806
    %v3939 = vpack.c.b16 %v3810, %v3807
    %v3940 = vpack.c.b16 %v3811, %v3808
    %v3941 = vpack.c.b16 %v3815, %v3812
    %v3942 = vpack.c.b16 %v3816, %v3813
    %v3943 = vpack.c.b16 %v3817, %v3814
    %v3944 = vpack.c.b16 %v3821, %v3818
    %v3945 = vpack.c.b16 %v3822, %v3819
    %v3946 = vpack.c.b16 %v3823, %v3820
    %v3947 = vpack.c.b16 %v3827, %v3824
    %v3948 = vpack.c.b16 %v3828, %v3825
    %v3949 = vpack.c.b16 %v3829, %v3826
    %4070 = vmatprep.subr.bf16.mxu0 %v3831
    %4071 = vmatpush1.bf16.msra.mxu0 %v3830
    %4072 = vmatprep.subr.bf16.mxu0 %v3834
    %4073 = vmatpush1.bf16.msra.mxu0 %v3833
    %4074 = vmatprep.subr.bf16.mxu0 %v3837
    %4075 = vmatpush1.bf16.msra.mxu0 %v3836
    %4076 = vmatprep.subr.bf16.mxu0 %v3840
    %4077 = vmatpush1.bf16.msra.mxu0 %v3839
    %4078 = vmatprep.subr.bf16.mxu0 %v3843
    %4079 = vmatpush1.bf16.msra.mxu0 %v3842
    %4080 = vmatprep.subr.bf16.mxu0 %v3846
    %4081 = vmatpush1.bf16.msra.mxu0 %v3845
    %4082 = vmatprep.subr.bf16.mxu0 %v3849
    %4083 = vmatpush1.bf16.msra.mxu0 %v3848
    %4084 = vmatprep.subr.bf16.mxu0 %v3852
    %4085 = vmatpush1.bf16.msra.mxu0 %v3851
    %4086 = vmatprep.subr.bf16.mxu0 %v3855
    %4087 = vmatpush1.bf16.msra.mxu0 %v3854
    %4088 = vmatprep.subr.bf16.mxu0 %v3858
    %4089 = vmatpush1.bf16.msra.mxu0 %v3857
    %4090 = vmatprep.subr.bf16.mxu0 %v3861
    %4091 = vmatpush1.bf16.msra.mxu0 %v3860
    %4092 = vmatprep.subr.bf16.mxu0 %v3864
    %4093 = vmatpush1.bf16.msra.mxu0 %v3863
    %4094 = vmatprep.subr.bf16.mxu0 %v3867
    %4095 = vmatpush1.bf16.msra.mxu0 %v3866
    %4096 = vmatprep.subr.bf16.mxu0 %v3870
    %4097 = vmatpush1.bf16.msra.mxu0 %v3869
    %4098 = vmatprep.subr.bf16.mxu0 %v3873
    %4099 = vmatpush1.bf16.msra.mxu0 %v3872
    %4100 = vmatprep.subr.bf16.mxu0 %v3876
    %4101 = vmatpush1.bf16.msra.mxu0 %v3875
    %4102 = vmatprep.mubr.bf16.mxu0 %v3214
    %4103 = vmatmul.mubr.bf16.gmra.mrb[0].mxu0 %v3213
    %v4104 = vpop.f32.mrb[0].mxu0
    %v4105 = vadd.f32 %v3418, %v4104
    %v4106 = vpop.f32.mrb[0].mxu0
    %v4107 = vadd.f32 %v3422, %v4106
    %v4108 = vpop.f32.mrb[0].mxu0
    %v4109 = vadd.f32 %v3418, %v4108
    %v4110 = vpop.f32.mrb[0].mxu0
    %v4111 = vadd.f32 %v3422, %v4110
    %4112 = vmatprep.mubr.bf16.mxu0 %v3219
    %4113 = vmatmul.mubr.bf16.gmra.mrb[0].mxu0 %v3218
    %v4114 = vpop.f32.mrb[0].mxu0
    %v4115 = vadd.f32 %v3418, %v4114
    %v4116 = vpop.f32.mrb[0].mxu0
    %v4117 = vadd.f32 %v3422, %v4116
    %v4118 = vpop.f32.mrb[0].mxu0
    %v4119 = vadd.f32 %v3418, %v4118
    %v4120 = vpop.f32.mrb[0].mxu0
    %v4121 = vadd.f32 %v3422, %v4120
    %4122 = vmatprep.mubr.bf16.mxu0 %v3224
    %4123 = vmatmul.mubr.bf16.gmra.mrb[0].mxu0 %v3223
    %v4124 = vpop.f32.mrb[0].mxu0
    %v4125 = vadd.f32 %v3418, %v4124
    %v4126 = vpop.f32.mrb[0].mxu0
    %v4127 = vadd.f32 %v3422, %v4126
    %v4128 = vpop.f32.mrb[0].mxu0
    %v4129 = vadd.f32 %v3418, %v4128
    %v4130 = vpop.f32.mrb[0].mxu0
    %v4131 = vadd.f32 %v3422, %v4130
    %4132 = vmatprep.mubr.bf16.mxu0 %v3229
    %4133 = vmatmul.mubr.bf16.gmra.mrb[0].mxu0 %v3228
    %v4134 = vpop.f32.mrb[0].mxu0
    %v4135 = vadd.f32 %v3418, %v4134
    %v4136 = vpop.f32.mrb[0].mxu0
    %v4137 = vadd.f32 %v3422, %v4136
    %v4138 = vpop.f32.mrb[0].mxu0
    %v4139 = vadd.f32 %v3418, %v4138
    %v4140 = vpop.f32.mrb[0].mxu0
    %v4141 = vadd.f32 %v3422, %v4140
    %4142 = vmatprep.mubr.bf16.mxu0 %v3234
    %4143 = vmatmul.mubr.bf16.gmra.mrb[0].mxu0 %v3233
    %v4144 = vpop.f32.mrb[0].mxu0
    %v4145 = vadd.f32 %v3418, %v4144
    %v4146 = vpop.f32.mrb[0].mxu0
    %v4147 = vadd.f32 %v3422, %v4146
    %v4148 = vpop.f32.mrb[0].mxu0
    %v4149 = vadd.f32 %v3418, %v4148
    %v4150 = vpop.f32.mrb[0].mxu0
    %v4151 = vadd.f32 %v3422, %v4150
    %4152 = vmatprep.mubr.bf16.mxu0 %v3239
    %4153 = vmatmul.mubr.bf16.gmra.mrb[0].mxu0 %v3238
    %v4154 = vpop.f32.mrb[0].mxu0
    %v4155 = vadd.f32 %v3418, %v4154
    %v4156 = vpop.f32.mrb[0].mxu0
    %v4157 = vadd.f32 %v3422, %v4156
    %v4158 = vpop.f32.mrb[0].mxu0
    %v4159 = vadd.f32 %v3418, %v4158
    %v4160 = vpop.f32.mrb[0].mxu0
    %v4161 = vadd.f32 %v3422, %v4160
    %4162 = vmatprep.mubr.bf16.mxu0 %v3244
    %4163 = vmatmul.mubr.bf16.gmra.mrb[0].mxu0 %v3243
    %v4164 = vpop.f32.mrb[0].mxu0
    %v4165 = vadd.f32 %v3418, %v4164
    %v4166 = vpop.f32.mrb[0].mxu0
    %v4167 = vadd.f32 %v3422, %v4166
    %v4168 = vpop.f32.mrb[0].mxu0
    %v4169 = vadd.f32 %v3418, %v4168
    %v4170 = vpop.f32.mrb[0].mxu0
    %v4171 = vadd.f32 %v3422, %v4170
    %4172 = vmatprep.mubr.bf16.mxu0 %v3249
    %4173 = vmatmul.mubr.bf16.gmra.mrb[0].mxu0 %v3248
    %v4174 = vpop.f32.mrb[0].mxu0
    %v4175 = vadd.f32 %v3418, %v4174
    %v4176 = vpop.f32.mrb[0].mxu0
    %v4177 = vadd.f32 %v3422, %v4176
    %v4178 = vpop.f32.mrb[0].mxu0
    %v4179 = vadd.f32 %v3418, %v4178
    %v4180 = vpop.f32.mrb[0].mxu0
    %v4181 = vadd.f32 %v3422, %v4180
    %4182 = vdwg.mxu0
    %4183 = vmatprep.subr.bf16.mxu0 %v3879
    %4184 = vmatpush1.bf16.msra.mxu0 %v3878
    %4185 = vmatprep.subr.bf16.mxu0 %v3882
    %4186 = vmatpush1.bf16.msra.mxu0 %v3881
    %4187 = vmatprep.subr.bf16.mxu0 %v3885
    %4188 = vmatpush1.bf16.msra.mxu0 %v3884
    %4189 = vmatprep.subr.bf16.mxu0 %v3888
    %4190 = vmatpush1.bf16.msra.mxu0 %v3887
    %4191 = vmatprep.subr.bf16.mxu0 %v3891
    %4192 = vmatpush1.bf16.msra.mxu0 %v3890
    %4193 = vmatprep.subr.bf16.mxu0 %v3894
    %4194 = vmatpush1.bf16.msra.mxu0 %v3893
    %4195 = vmatprep.subr.bf16.mxu0 %v3897
    %4196 = vmatpush1.bf16.msra.mxu0 %v3896
    %4197 = vmatprep.subr.bf16.mxu0 %v3900
    %4198 = vmatpush1.bf16.msra.mxu0 %v3899
    %4199 = vmatprep.subr.bf16.mxu0 %v3903
    %4200 = vmatpush1.bf16.msra.mxu0 %v3902
    %4201 = vmatprep.subr.bf16.mxu0 %v3906
    %4202 = vmatpush1.bf16.msra.mxu0 %v3905
    %4203 = vmatprep.subr.bf16.mxu0 %v3909
    %4204 = vmatpush1.bf16.msra.mxu0 %v3908
    %4205 = vmatprep.subr.bf16.mxu0 %v3912
    %4206 = vmatpush1.bf16.msra.mxu0 %v3911
    %4207 = vmatprep.subr.bf16.mxu0 %v3915
    %4208 = vmatpush1.bf16.msra.mxu0 %v3914
    %4209 = vmatprep.subr.bf16.mxu0 %v3918
    %4210 = vmatpush1.bf16.msra.mxu0 %v3917
    %4211 = vmatprep.subr.bf16.mxu0 %v3921
    %4212 = vmatpush1.bf16.msra.mxu0 %v3920
    %4213 = vmatprep.subr.bf16.mxu0 %v3924
    %4214 = vmatpush1.bf16.msra.mxu0 %v3923
    %4215 = vmatprep.mubr.bf16.mxu0 %v3216
    %4216 = vmatmul.mubr.bf16.gmra.mrb[0].mxu0 %v3215
    %v4217 = vpop.f32.mrb[0].mxu0
    %v4218 = vadd.f32 %v4105, %v4217
    %v4219 = vpop.f32.mrb[0].mxu0
    %v4220 = vadd.f32 %v4107, %v4219
    %v4221 = vpop.f32.mrb[0].mxu0
    %v4222 = vadd.f32 %v4109, %v4221
    %v4223 = vpop.f32.mrb[0].mxu0
    %v4224 = vadd.f32 %v4111, %v4223
    %4225 = vmatprep.mubr.bf16.mxu0 %v3221
    %4226 = vmatmul.mubr.bf16.gmra.mrb[0].mxu0 %v3220
    %v4227 = vpop.f32.mrb[0].mxu0
    %v4228 = vadd.f32 %v4115, %v4227
    %v4229 = vpop.f32.mrb[0].mxu0
    %v4230 = vadd.f32 %v4117, %v4229
    %v4231 = vpop.f32.mrb[0].mxu0
    %v4232 = vadd.f32 %v4119, %v4231
    %v4233 = vpop.f32.mrb[0].mxu0
    %v4234 = vadd.f32 %v4121, %v4233
    %4235 = vmatprep.mubr.bf16.mxu0 %v3226
    %4236 = vmatmul.mubr.bf16.gmra.mrb[0].mxu0 %v3225
    %v4237 = vpop.f32.mrb[0].mxu0
    %v4238 = vadd.f32 %v4125, %v4237
    %v4239 = vpop.f32.mrb[0].mxu0
    %v4240 = vadd.f32 %v4127, %v4239
    %v4241 = vpop.f32.mrb[0].mxu0
    %v4242 = vadd.f32 %v4129, %v4241
    %v4243 = vpop.f32.mrb[0].mxu0
    %v4244 = vadd.f32 %v4131, %v4243
    %4245 = vmatprep.mubr.bf16.mxu0 %v3231
    %4246 = vmatmul.mubr.bf16.gmra.mrb[0].mxu0 %v3230
    %v4247 = vpop.f32.mrb[0].mxu0
    %v4248 = vadd.f32 %v4135, %v4247
    %v4249 = vpop.f32.mrb[0].mxu0
    %v4250 = vadd.f32 %v4137, %v4249
    %v4251 = vpop.f32.mrb[0].mxu0
    %v4252 = vadd.f32 %v4139, %v4251
    %v4253 = vpop.f32.mrb[0].mxu0
    %v4254 = vadd.f32 %v4141, %v4253
    %4255 = vmatprep.mubr.bf16.mxu0 %v3236
    %4256 = vmatmul.mubr.bf16.gmra.mrb[0].mxu0 %v3235
    %v4257 = vpop.f32.mrb[0].mxu0
    %v4258 = vadd.f32 %v4145, %v4257
    %v4259 = vpop.f32.mrb[0].mxu0
    %v4260 = vadd.f32 %v4147, %v4259
    %v4261 = vpop.f32.mrb[0].mxu0
    %v4262 = vadd.f32 %v4149, %v4261
    %v4263 = vpop.f32.mrb[0].mxu0
    %v4264 = vadd.f32 %v4151, %v4263
    %4265 = vmatprep.mubr.bf16.mxu0 %v3241
    %4266 = vmatmul.mubr.bf16.gmra.mrb[0].mxu0 %v3240
    %v4267 = vpop.f32.mrb[0].mxu0
    %v4268 = vadd.f32 %v4155, %v4267
    %v4269 = vpop.f32.mrb[0].mxu0
    %v4270 = vadd.f32 %v4157, %v4269
    %v4271 = vpop.f32.mrb[0].mxu0
    %v4272 = vadd.f32 %v4159, %v4271
    %v4273 = vpop.f32.mrb[0].mxu0
    %v4274 = vadd.f32 %v4161, %v4273
    %4275 = vmatprep.mubr.bf16.mxu0 %v3246
    %4276 = vmatmul.mubr.bf16.gmra.mrb[0].mxu0 %v3245
    %v4277 = vpop.f32.mrb[0].mxu0
    %v4278 = vadd.f32 %v4165, %v4277
    %v4279 = vpop.f32.mrb[0].mxu0
    %v4280 = vadd.f32 %v4167, %v4279
    %v4281 = vpop.f32.mrb[0].mxu0
    %v4282 = vadd.f32 %v4169, %v4281
    %v4283 = vpop.f32.mrb[0].mxu0
    %v4284 = vadd.f32 %v4171, %v4283
    %4285 = vmatprep.mubr.bf16.mxu0 %v3251
    %4286 = vmatmul.mubr.bf16.gmra.mrb[0].mxu0 %v3250
    %v4287 = vpop.f32.mrb[0].mxu0
    %v4288 = vadd.f32 %v4175, %v4287
    %v4289 = vpop.f32.mrb[0].mxu0
    %v4290 = vadd.f32 %v4177, %v4289
    %v4291 = vpop.f32.mrb[0].mxu0
    %v4292 = vadd.f32 %v4179, %v4291
    %v4293 = vpop.f32.mrb[0].mxu0
    %v4294 = vadd.f32 %v4181, %v4293
    %4295 = vdwg.mxu0
    %4296 = vmatprep.subr.bf16.mxu0 %v3927
    %4297 = vmatpush1.bf16.msra.mxu0 %v3926
    %4298 = vmatprep.subr.bf16.mxu0 %v3930
    %4299 = vmatpush1.bf16.msra.mxu0 %v3929
    %4300 = vmatprep.subr.bf16.mxu0 %v3933
    %4301 = vmatpush1.bf16.msra.mxu0 %v3932
    %4302 = vmatprep.subr.bf16.mxu0 %v3936
    %4303 = vmatpush1.bf16.msra.mxu0 %v3935
    %4304 = vmatprep.subr.bf16.mxu0 %v3939
    %4305 = vmatpush1.bf16.msra.mxu0 %v3938
    %4306 = vmatprep.subr.bf16.mxu0 %v3942
    %4307 = vmatpush1.bf16.msra.mxu0 %v3941
    %4308 = vmatprep.subr.bf16.mxu0 %v3945
    %4309 = vmatpush1.bf16.msra.mxu0 %v3944
    %4310 = vmatprep.subr.bf16.mxu0 %v3948
    %4311 = vmatpush1.bf16.msra.mxu0 %v3947
    %4312 = vmatprep.subr.bf16.mxu0 0
    %4313 = vmatpush1.bf16.msra.mxu0 0
    %4314 = vmatprep.subr.bf16.mxu0 0
    %4315 = vmatpush1.bf16.msra.mxu0 0
    %4316 = vmatprep.subr.bf16.mxu0 0
    %4317 = vmatpush1.bf16.msra.mxu0 0
    %4318 = vmatprep.subr.bf16.mxu0 0
    %4319 = vmatpush1.bf16.msra.mxu0 0
    %4320 = vmatprep.subr.bf16.mxu0 0
    %4321 = vmatpush1.bf16.msra.mxu0 0
    %4322 = vmatprep.subr.bf16.mxu0 0
    %4323 = vmatpush1.bf16.msra.mxu0 0
    %4324 = vmatprep.subr.bf16.mxu0 0
    %4325 = vmatpush1.bf16.msra.mxu0 0
    %4326 = vmatprep.subr.bf16.mxu0 0
    %4327 = vmatpush1.bf16.msra.mxu0 0
    %4328 = vmatprep.mubr.bf16.mxu0 0
    %4329 = vmatmul.mubr.bf16.gmra.mrb[0].mxu0 %v3217
    %v4330 = vpop.f32.mrb[0].mxu0
    %v4331 = vadd.f32 %v4218, %v4330
    %v4332 = vpop.f32.mrb[0].mxu0
    %v4333 = vadd.f32 %v4220, %v4332
    %v4334 = vpop.f32.mrb[0].mxu0
    %v4335 = vadd.f32 %v4222, %v4334
    %v4336 = vpop.f32.mrb[0].mxu0
    %v4337 = vadd.f32 %v4224, %v4336
    %4338 = vmatprep.mubr.bf16.mxu0 0
    %4339 = vmatmul.mubr.bf16.gmra.mrb[0].mxu0 %v3222
    %v4340 = vpop.f32.mrb[0].mxu0
    %v4341 = vadd.f32 %v4228, %v4340
    %v4342 = vpop.f32.mrb[0].mxu0
    %v4343 = vadd.f32 %v4230, %v4342
    %v4344 = vpop.f32.mrb[0].mxu0
    %v4345 = vadd.f32 %v4232, %v4344
    %v4346 = vpop.f32.mrb[0].mxu0
    %v4347 = vadd.f32 %v4234, %v4346
    %4348 = vmatprep.mubr.bf16.mxu0 0
    %4349 = vmatmul.mubr.bf16.gmra.mrb[0].mxu0 %v3227
    %v4350 = vpop.f32.mrb[0].mxu0
    %v4351 = vadd.f32 %v4238, %v4350
    %v4352 = vpop.f32.mrb[0].mxu0
    %v4353 = vadd.f32 %v4240, %v4352
    %v4354 = vpop.f32.mrb[0].mxu0
    %v4355 = vadd.f32 %v4242, %v4354
    %v4356 = vpop.f32.mrb[0].mxu0
    %v4357 = vadd.f32 %v4244, %v4356
    %4358 = vmatprep.mubr.bf16.mxu0 0
    %4359 = vmatmul.mubr.bf16.gmra.mrb[0].mxu0 %v3232
    %v4360 = vpop.f32.mrb[0].mxu0
    %v4361 = vadd.f32 %v4248, %v4360
    %v4362 = vpop.f32.mrb[0].mxu0
    %v4363 = vadd.f32 %v4250, %v4362
    %v4364 = vpop.f32.mrb[0].mxu0
    %v4365 = vadd.f32 %v4252, %v4364
    %v4366 = vpop.f32.mrb[0].mxu0
    %v4367 = vadd.f32 %v4254, %v4366
    %4368 = vmatprep.mubr.bf16.mxu0 0
    %4369 = vmatmul.mubr.bf16.gmra.mrb[0].mxu0 %v3237
    %v4370 = vpop.f32.mrb[0].mxu0
    %v4371 = vadd.f32 %v4258, %v4370
    %v4372 = vpop.f32.mrb[0].mxu0
    %v4373 = vadd.f32 %v4260, %v4372
    %v4374 = vpop.f32.mrb[0].mxu0
    %v4375 = vadd.f32 %v4262, %v4374
    %v4376 = vpop.f32.mrb[0].mxu0
    %v4377 = vadd.f32 %v4264, %v4376
    %4378 = vmatprep.mubr.bf16.mxu0 0
    %4379 = vmatmul.mubr.bf16.gmra.mrb[0].mxu0 %v3242
    %v4380 = vpop.f32.mrb[0].mxu0
    %v4381 = vadd.f32 %v4268, %v4380
    %v4382 = vpop.f32.mrb[0].mxu0
    %v4383 = vadd.f32 %v4270, %v4382
    %v4384 = vpop.f32.mrb[0].mxu0
    %v4385 = vadd.f32 %v4272, %v4384
    %v4386 = vpop.f32.mrb[0].mxu0
    %v4387 = vadd.f32 %v4274, %v4386
    %4388 = vmatprep.mubr.bf16.mxu0 0
    %4389 = vmatmul.mubr.bf16.gmra.mrb[0].mxu0 %v3247
    %v4390 = vpop.f32.mrb[0].mxu0
    %v4391 = vadd.f32 %v4278, %v4390
    %v4392 = vpop.f32.mrb[0].mxu0
    %v4393 = vadd.f32 %v4280, %v4392
    %v4394 = vpop.f32.mrb[0].mxu0
    %v4395 = vadd.f32 %v4282, %v4394
    %v4396 = vpop.f32.mrb[0].mxu0
    %v4397 = vadd.f32 %v4284, %v4396
    %4398 = vmatprep.mubr.bf16.mxu0 0
    %4399 = vmatmul.mubr.bf16.gmra.mrb[0].mxu0 %v3252
    %v4400 = vpop.f32.mrb[0].mxu0
    %v4401 = vadd.f32 %v4288, %v4400
    %v4402 = vpop.f32.mrb[0].mxu0
    %v4403 = vadd.f32 %v4290, %v4402
    %v4404 = vpop.f32.mrb[0].mxu0
    %v4405 = vadd.f32 %v4292, %v4404
    %v4406 = vpop.f32.mrb[0].mxu0
    %v4407 = vadd.f32 %v4294, %v4406
    %4408 = vdwg.mxu0
    %4409 = vmatprep.subr.bf16.mxu0 0
    %4410 = vmatpush1.bf16.msra.mxu0 %v3832
    %4411 = vmatprep.subr.bf16.mxu0 0
    %4412 = vmatpush1.bf16.msra.mxu0 %v3835
    %4413 = vmatprep.subr.bf16.mxu0 0
    %4414 = vmatpush1.bf16.msra.mxu0 %v3838
    %4415 = vmatprep.subr.bf16.mxu0 0
    %4416 = vmatpush1.bf16.msra.mxu0 %v3841
    %4417 = vmatprep.subr.bf16.mxu0 0
    %4418 = vmatpush1.bf16.msra.mxu0 %v3844
    %4419 = vmatprep.subr.bf16.mxu0 0
    %4420 = vmatpush1.bf16.msra.mxu0 %v3847
    %4421 = vmatprep.subr.bf16.mxu0 0
    %4422 = vmatpush1.bf16.msra.mxu0 %v3850
    %4423 = vmatprep.subr.bf16.mxu0 0
    %4424 = vmatpush1.bf16.msra.mxu0 %v3853
    %4425 = vmatprep.subr.bf16.mxu0 0
    %4426 = vmatpush1.bf16.msra.mxu0 %v3856
    %4427 = vmatprep.subr.bf16.mxu0 0
    %4428 = vmatpush1.bf16.msra.mxu0 %v3859
    %4429 = vmatprep.subr.bf16.mxu0 0
    %4430 = vmatpush1.bf16.msra.mxu0 %v3862
    %4431 = vmatprep.subr.bf16.mxu0 0
    %4432 = vmatpush1.bf16.msra.mxu0 %v3865
    %4433 = vmatprep.subr.bf16.mxu0 0
    %4434 = vmatpush1.bf16.msra.mxu0 %v3868
    %4435 = vmatprep.subr.bf16.mxu0 0
    %4436 = vmatpush1.bf16.msra.mxu0 %v3871
    %4437 = vmatprep.subr.bf16.mxu0 0
    %4438 = vmatpush1.bf16.msra.mxu0 %v3874
    %4439 = vmatprep.subr.bf16.mxu0 0
    %4440 = vmatpush1.bf16.msra.mxu0 %v3877
    %4441 = vmatprep.mubr.bf16.mxu0 %v3214
    %4442 = vmatmul.mubr.bf16.gmra.mrb[0].mxu0 %v3213
    %v4443 = vpop.f32.mrb[0].mxu0
    %v4444 = vadd.f32 %v3426, %v4443
    %v4445 = vpop.f32.mrb[0].mxu0
    %v4446 = vpop.f32.mrb[0].mxu0
    %v4447 = vadd.f32 %v3426, %v4446
    %v4448 = vpop.f32.mrb[0].mxu0
    %4449 = vmatprep.mubr.bf16.mxu0 %v3219
    %4450 = vmatmul.mubr.bf16.gmra.mrb[0].mxu0 %v3218
    %v4451 = vpop.f32.mrb[0].mxu0
    %v4452 = vadd.f32 %v3426, %v4451
    %v4453 = vpop.f32.mrb[0].mxu0
    %v4454 = vpop.f32.mrb[0].mxu0
    %v4455 = vadd.f32 %v3426, %v4454
    %v4456 = vpop.f32.mrb[0].mxu0
    %4457 = vmatprep.mubr.bf16.mxu0 %v3224
    %4458 = vmatmul.mubr.bf16.gmra.mrb[0].mxu0 %v3223
    %v4459 = vpop.f32.mrb[0].mxu0
    %v4460 = vadd.f32 %v3426, %v4459
    %v4461 = vpop.f32.mrb[0].mxu0
    %v4462 = vpop.f32.mrb[0].mxu0
    %v4463 = vadd.f32 %v3426, %v4462
    %v4464 = vpop.f32.mrb[0].mxu0
    %4465 = vmatprep.mubr.bf16.mxu0 %v3229
    %4466 = vmatmul.mubr.bf16.gmra.mrb[0].mxu0 %v3228
    %v4467 = vpop.f32.mrb[0].mxu0
    %v4468 = vadd.f32 %v3426, %v4467
    %v4469 = vpop.f32.mrb[0].mxu0
    %v4470 = vpop.f32.mrb[0].mxu0
    %v4471 = vadd.f32 %v3426, %v4470
    %v4472 = vpop.f32.mrb[0].mxu0
    %4473 = vmatprep.mubr.bf16.mxu0 %v3234
    %4474 = vmatmul.mubr.bf16.gmra.mrb[0].mxu0 %v3233
    %v4475 = vpop.f32.mrb[0].mxu0
    %v4476 = vadd.f32 %v3426, %v4475
    %v4477 = vpop.f32.mrb[0].mxu0
    %v4478 = vpop.f32.mrb[0].mxu0
    %v4479 = vadd.f32 %v3426, %v4478
    %v4480 = vpop.f32.mrb[0].mxu0
    %4481 = vmatprep.mubr.bf16.mxu0 %v3239
    %4482 = vmatmul.mubr.bf16.gmra.mrb[0].mxu0 %v3238
    %v4483 = vpop.f32.mrb[0].mxu0
    %v4484 = vadd.f32 %v3426, %v4483
    %v4485 = vpop.f32.mrb[0].mxu0
    %v4486 = vpop.f32.mrb[0].mxu0
    %v4487 = vadd.f32 %v3426, %v4486
    %v4488 = vpop.f32.mrb[0].mxu0
    %4489 = vmatprep.mubr.bf16.mxu0 %v3244
    %4490 = vmatmul.mubr.bf16.gmra.mrb[0].mxu0 %v3243
    %v4491 = vpop.f32.mrb[0].mxu0
    %v4492 = vadd.f32 %v3426, %v4491
    %v4493 = vpop.f32.mrb[0].mxu0
    %v4494 = vpop.f32.mrb[0].mxu0
    %v4495 = vadd.f32 %v3426, %v4494
    %v4496 = vpop.f32.mrb[0].mxu0
    %4497 = vmatprep.mubr.bf16.mxu0 %v3249
    %4498 = vmatmul.mubr.bf16.gmra.mrb[0].mxu0 %v3248
    %v4499 = vpop.f32.mrb[0].mxu0
    %v4500 = vadd.f32 %v3426, %v4499
    %v4501 = vpop.f32.mrb[0].mxu0
    %v4502 = vpop.f32.mrb[0].mxu0
    %v4503 = vadd.f32 %v3426, %v4502
    %v4504 = vpop.f32.mrb[0].mxu0
    %4505 = vdwg.mxu0
    %4506 = vmatprep.subr.bf16.mxu0 0
    %4507 = vmatpush1.bf16.msra.mxu0 %v3880
    %4508 = vmatprep.subr.bf16.mxu0 0
    %4509 = vmatpush1.bf16.msra.mxu0 %v3883
    %4510 = vmatprep.subr.bf16.mxu0 0
    %4511 = vmatpush1.bf16.msra.mxu0 %v3886
    %4512 = vmatprep.subr.bf16.mxu0 0
    %4513 = vmatpush1.bf16.msra.mxu0 %v3889
    %4514 = vmatprep.subr.bf16.mxu0 0
    %4515 = vmatpush1.bf16.msra.mxu0 %v3892
    %4516 = vmatprep.subr.bf16.mxu0 0
    %4517 = vmatpush1.bf16.msra.mxu0 %v3895
    %4518 = vmatprep.subr.bf16.mxu0 0
    %4519 = vmatpush1.bf16.msra.mxu0 %v3898
    %4520 = vmatprep.subr.bf16.mxu0 0
    %4521 = vmatpush1.bf16.msra.mxu0 %v3901
    %4522 = vmatprep.subr.bf16.mxu0 0
    %4523 = vmatpush1.bf16.msra.mxu0 %v3904
    %4524 = vmatprep.subr.bf16.mxu0 0
    %4525 = vmatpush1.bf16.msra.mxu0 %v3907
    %4526 = vmatprep.subr.bf16.mxu0 0
    %4527 = vmatpush1.bf16.msra.mxu0 %v3910
    %4528 = vmatprep.subr.bf16.mxu0 0
    %4529 = vmatpush1.bf16.msra.mxu0 %v3913
    %4530 = vmatprep.subr.bf16.mxu0 0
    %4531 = vmatpush1.bf16.msra.mxu0 %v3916
    %4532 = vmatprep.subr.bf16.mxu0 0
    %4533 = vmatpush1.bf16.msra.mxu0 %v3919
    %4534 = vmatprep.subr.bf16.mxu0 0
    %4535 = vmatpush1.bf16.msra.mxu0 %v3922
    %4536 = vmatprep.subr.bf16.mxu0 0
    %4537 = vmatpush1.bf16.msra.mxu0 %v3925
    %4538 = vmatprep.mubr.bf16.mxu0 %v3216
    %4539 = vmatmul.mubr.bf16.gmra.mrb[0].mxu0 %v3215
    %v4540 = vpop.f32.mrb[0].mxu0
    %v4541 = vadd.f32 %v4444, %v4540
    %v4542 = vpop.f32.mrb[0].mxu0
    %v4543 = vpop.f32.mrb[0].mxu0
    %v4544 = vadd.f32 %v4447, %v4543
    %v4545 = vpop.f32.mrb[0].mxu0
    %4546 = vmatprep.mubr.bf16.mxu0 %v3221
    %4547 = vmatmul.mubr.bf16.gmra.mrb[0].mxu0 %v3220
    %v4548 = vpop.f32.mrb[0].mxu0
    %v4549 = vadd.f32 %v4452, %v4548
    %v4550 = vpop.f32.mrb[0].mxu0
    %v4551 = vpop.f32.mrb[0].mxu0
    %v4552 = vadd.f32 %v4455, %v4551
    %v4553 = vpop.f32.mrb[0].mxu0
    %4554 = vmatprep.mubr.bf16.mxu0 %v3226
    %4555 = vmatmul.mubr.bf16.gmra.mrb[0].mxu0 %v3225
    %v4556 = vpop.f32.mrb[0].mxu0
    %v4557 = vadd.f32 %v4460, %v4556
    %v4558 = vpop.f32.mrb[0].mxu0
    %v4559 = vpop.f32.mrb[0].mxu0
    %v4560 = vadd.f32 %v4463, %v4559
    %v4561 = vpop.f32.mrb[0].mxu0
    %4562 = vmatprep.mubr.bf16.mxu0 %v3231
    %4563 = vmatmul.mubr.bf16.gmra.mrb[0].mxu0 %v3230
    %v4564 = vpop.f32.mrb[0].mxu0
    %v4565 = vadd.f32 %v4468, %v4564
    %v4566 = vpop.f32.mrb[0].mxu0
    %v4567 = vpop.f32.mrb[0].mxu0
    %v4568 = vadd.f32 %v4471, %v4567
    %v4569 = vpop.f32.mrb[0].mxu0
    %4570 = vmatprep.mubr.bf16.mxu0 %v3236
    %4571 = vmatmul.mubr.bf16.gmra.mrb[0].mxu0 %v3235
    %v4572 = vpop.f32.mrb[0].mxu0
    %v4573 = vadd.f32 %v4476, %v4572
    %v4574 = vpop.f32.mrb[0].mxu0
    %v4575 = vpop.f32.mrb[0].mxu0
    %v4576 = vadd.f32 %v4479, %v4575
    %v4577 = vpop.f32.mrb[0].mxu0
    %4578 = vmatprep.mubr.bf16.mxu0 %v3241
    %4579 = vmatmul.mubr.bf16.gmra.mrb[0].mxu0 %v3240
    %v4580 = vpop.f32.mrb[0].mxu0
    %v4581 = vadd.f32 %v4484, %v4580
    %v4582 = vpop.f32.mrb[0].mxu0
    %v4583 = vpop.f32.mrb[0].mxu0
    %v4584 = vadd.f32 %v4487, %v4583
    %v4585 = vpop.f32.mrb[0].mxu0
    %4586 = vmatprep.mubr.bf16.mxu0 %v3246
    %4587 = vmatmul.mubr.bf16.gmra.mrb[0].mxu0 %v3245
    %v4588 = vpop.f32.mrb[0].mxu0
    %v4589 = vadd.f32 %v4492, %v4588
    %v4590 = vpop.f32.mrb[0].mxu0
    %v4591 = vpop.f32.mrb[0].mxu0
    %v4592 = vadd.f32 %v4495, %v4591
    %v4593 = vpop.f32.mrb[0].mxu0
    %4594 = vmatprep.mubr.bf16.mxu0 %v3251
    %4595 = vmatmul.mubr.bf16.gmra.mrb[0].mxu0 %v3250
    %v4596 = vpop.f32.mrb[0].mxu0
    %v4597 = vadd.f32 %v4500, %v4596
    %v4598 = vpop.f32.mrb[0].mxu0
    %v4599 = vpop.f32.mrb[0].mxu0
    %v4600 = vadd.f32 %v4503, %v4599
    %v4601 = vpop.f32.mrb[0].mxu0
    %4602 = vdwg.mxu0
    %4603 = vmatprep.subr.bf16.mxu0 0
    %4604 = vmatpush1.bf16.msra.mxu0 %v3928
    %4605 = vmatprep.subr.bf16.mxu0 0
    %4606 = vmatpush1.bf16.msra.mxu0 %v3931
    %4607 = vmatprep.subr.bf16.mxu0 0
    %4608 = vmatpush1.bf16.msra.mxu0 %v3934
    %4609 = vmatprep.subr.bf16.mxu0 0
    %4610 = vmatpush1.bf16.msra.mxu0 %v3937
    %4611 = vmatprep.subr.bf16.mxu0 0
    %4612 = vmatpush1.bf16.msra.mxu0 %v3940
    %4613 = vmatprep.subr.bf16.mxu0 0
    %4614 = vmatpush1.bf16.msra.mxu0 %v3943
    %4615 = vmatprep.subr.bf16.mxu0 0
    %4616 = vmatpush1.bf16.msra.mxu0 %v3946
    %4617 = vmatprep.subr.bf16.mxu0 0
    %4618 = vmatpush1.bf16.msra.mxu0 %v3949
    %4619 = vmatprep.subr.bf16.mxu0 0
    %4620 = vmatpush1.bf16.msra.mxu0 0
    %4621 = vmatprep.subr.bf16.mxu0 0
    %4622 = vmatpush1.bf16.msra.mxu0 0
    %4623 = vmatprep.subr.bf16.mxu0 0
    %4624 = vmatpush1.bf16.msra.mxu0 0
    %4625 = vmatprep.subr.bf16.mxu0 0
    %4626 = vmatpush1.bf16.msra.mxu0 0
    %4627 = vmatprep.subr.bf16.mxu0 0
    %4628 = vmatpush1.bf16.msra.mxu0 0
    %4629 = vmatprep.subr.bf16.mxu0 0
    %4630 = vmatpush1.bf16.msra.mxu0 0
    %4631 = vmatprep.subr.bf16.mxu0 0
    %4632 = vmatpush1.bf16.msra.mxu0 0
    %4633 = vmatprep.subr.bf16.mxu0 0
    %4634 = vmatpush1.bf16.msra.mxu0 0
    %4635 = vmatprep.mubr.bf16.mxu0 0
    %4636 = vmatmul.mubr.bf16.gmra.mrb[0].mxu0 %v3217
    %v4637 = vpop.f32.mrb[0].mxu0
    %v4638 = vadd.f32 %v4541, %v4637
    %v4639 = vpop.f32.mrb[0].mxu0
    %v4640 = vpop.f32.mrb[0].mxu0
    %v4641 = vadd.f32 %v4544, %v4640
    %v4642 = vpop.f32.mrb[0].mxu0
    %4643 = vmatprep.mubr.bf16.mxu0 0
    %4644 = vmatmul.mubr.bf16.gmra.mrb[0].mxu0 %v3222
    %v4645 = vpop.f32.mrb[0].mxu0
    %v4646 = vadd.f32 %v4549, %v4645
    %v4647 = vpop.f32.mrb[0].mxu0
    %v4648 = vpop.f32.mrb[0].mxu0
    %v4649 = vadd.f32 %v4552, %v4648
    %v4650 = vpop.f32.mrb[0].mxu0
    %4651 = vmatprep.mubr.bf16.mxu0 0
    %4652 = vmatmul.mubr.bf16.gmra.mrb[0].mxu0 %v3227
    %v4653 = vpop.f32.mrb[0].mxu0
    %v4654 = vadd.f32 %v4557, %v4653
    %v4655 = vpop.f32.mrb[0].mxu0
    %v4656 = vpop.f32.mrb[0].mxu0
    %v4657 = vadd.f32 %v4560, %v4656
    %v4658 = vpop.f32.mrb[0].mxu0
    %4659 = vmatprep.mubr.bf16.mxu0 0
    %4660 = vmatmul.mubr.bf16.gmra.mrb[0].mxu0 %v3232
    %v4661 = vpop.f32.mrb[0].mxu0
    %v4662 = vadd.f32 %v4565, %v4661
    %v4663 = vpop.f32.mrb[0].mxu0
    %v4664 = vpop.f32.mrb[0].mxu0
    %v4665 = vadd.f32 %v4568, %v4664
    %v4666 = vpop.f32.mrb[0].mxu0
    %4667 = vmatprep.mubr.bf16.mxu0 0
    %4668 = vmatmul.mubr.bf16.gmra.mrb[0].mxu0 %v3237
    %v4669 = vpop.f32.mrb[0].mxu0
    %v4670 = vadd.f32 %v4573, %v4669
    %v4671 = vpop.f32.mrb[0].mxu0
    %v4672 = vpop.f32.mrb[0].mxu0
    %v4673 = vadd.f32 %v4576, %v4672
    %v4674 = vpop.f32.mrb[0].mxu0
    %4675 = vmatprep.mubr.bf16.mxu0 0
    %4676 = vmatmul.mubr.bf16.gmra.mrb[0].mxu0 %v3242
    %v4677 = vpop.f32.mrb[0].mxu0
    %v4678 = vadd.f32 %v4581, %v4677
    %v4679 = vpop.f32.mrb[0].mxu0
    %v4680 = vpop.f32.mrb[0].mxu0
    %v4681 = vadd.f32 %v4584, %v4680
    %v4682 = vpop.f32.mrb[0].mxu0
    %4683 = vmatprep.mubr.bf16.mxu0 0
    %4684 = vmatmul.mubr.bf16.gmra.mrb[0].mxu0 %v3247
    %v4685 = vpop.f32.mrb[0].mxu0
    %v4686 = vadd.f32 %v4589, %v4685
    %v4687 = vpop.f32.mrb[0].mxu0
    %v4688 = vpop.f32.mrb[0].mxu0
    %v4689 = vadd.f32 %v4592, %v4688
    %v4690 = vpop.f32.mrb[0].mxu0
    %4691 = vmatprep.mubr.bf16.mxu0 0
    %4692 = vmatmul.mubr.bf16.gmra.mrb[0].mxu0 %v3252
    %v4693 = vpop.f32.mrb[0].mxu0
    %v4694 = vadd.f32 %v4597, %v4693
    %v4695 = vpop.f32.mrb[0].mxu0
    %v4696 = vpop.f32.mrb[0].mxu0
    %v4697 = vadd.f32 %v4600, %v4696
    %v4698 = vpop.f32.mrb[0].mxu0
    %4699 = vdwg.mxu0
    %v4700 = vmax.f32 %v4331, 0.0
    %v4701 = vmax.f32 %v4333, 0.0
    %v4702 = vmax.f32 %v4638, 0.0
    %v4703 = vmax.f32 %v4335, 0.0
    %v4704 = vmax.f32 %v4337, 0.0
    %v4705 = vmax.f32 %v4641, 0.0
    %v4706 = vmax.f32 %v4341, 0.0
    %v4707 = vmax.f32 %v4343, 0.0
    %v4708 = vmax.f32 %v4646, 0.0
    %v4709 = vmax.f32 %v4345, 0.0
    %v4710 = vmax.f32 %v4347, 0.0
    %v4711 = vmax.f32 %v4649, 0.0
    %v4712 = vmax.f32 %v4351, 0.0
    %v4713 = vmax.f32 %v4353, 0.0
    %v4714 = vmax.f32 %v4654, 0.0
    %v4715 = vmax.f32 %v4355, 0.0
    %v4716 = vmax.f32 %v4357, 0.0
    %v4717 = vmax.f32 %v4657, 0.0
    %v4718 = vmax.f32 %v4361, 0.0
    %v4719 = vmax.f32 %v4363, 0.0
    %v4720 = vmax.f32 %v4662, 0.0
    %v4721 = vmax.f32 %v4365, 0.0
    %v4722 = vmax.f32 %v4367, 0.0
    %v4723 = vmax.f32 %v4665, 0.0
    %v4724 = vmax.f32 %v4371, 0.0
    %v4725 = vmax.f32 %v4373, 0.0
    %v4726 = vmax.f32 %v4670, 0.0
    %v4727 = vmax.f32 %v4375, 0.0
    %v4728 = vmax.f32 %v4377, 0.0
    %v4729 = vmax.f32 %v4673, 0.0
    %v4730 = vmax.f32 %v4381, 0.0
    %v4731 = vmax.f32 %v4383, 0.0
    %v4732 = vmax.f32 %v4678, 0.0
    %v4733 = vmax.f32 %v4385, 0.0
    %v4734 = vmax.f32 %v4387, 0.0
    %v4735 = vmax.f32 %v4681, 0.0
    %v4736 = vmax.f32 %v4391, 0.0
    %v4737 = vmax.f32 %v4393, 0.0
    %v4738 = vmax.f32 %v4686, 0.0
    %v4739 = vmax.f32 %v4395, 0.0
    %v4740 = vmax.f32 %v4397, 0.0
    %v4741 = vmax.f32 %v4689, 0.0
    %v4742 = vmax.f32 %v4401, 0.0
    %v4743 = vmax.f32 %v4403, 0.0
    %v4744 = vmax.f32 %v4694, 0.0
    %v4745 = vmax.f32 %v4405, 0.0
    %v4746 = vmax.f32 %v4407, 0.0
    %v4747 = vmax.f32 %v4697, 0.0
    %v4748 = vpack.c.bf16 %v4703, %v4700
    %v4749 = vpack.c.bf16 %v4704, %v4701
    %v4750 = vpack.c.bf16 %v4705, %v4702
    %v4751 = vpack.c.bf16 %v4709, %v4706
    %v4752 = vpack.c.bf16 %v4710, %v4707
    %v4753 = vpack.c.bf16 %v4711, %v4708
    %v4754 = vpack.c.bf16 %v4715, %v4712
    %v4755 = vpack.c.bf16 %v4716, %v4713
    %v4756 = vpack.c.bf16 %v4717, %v4714
    %v4757 = vpack.c.bf16 %v4721, %v4718
    %v4758 = vpack.c.bf16 %v4722, %v4719
    %v4759 = vpack.c.bf16 %v4723, %v4720
    %v4760 = vpack.c.bf16 %v4727, %v4724
    %v4761 = vpack.c.bf16 %v4728, %v4725
    %v4762 = vpack.c.bf16 %v4729, %v4726
    %v4763 = vpack.c.bf16 %v4733, %v4730
    %v4764 = vpack.c.bf16 %v4734, %v4731
    %v4765 = vpack.c.bf16 %v4735, %v4732
    %v4766 = vpack.c.bf16 %v4739, %v4736
    %v4767 = vpack.c.bf16 %v4740, %v4737
    %v4768 = vpack.c.bf16 %v4741, %v4738
    %v4769 = vpack.c.bf16 %v4745, %v4742
    %v4770 = vpack.c.bf16 %v4746, %v4743
    %v4771 = vpack.c.bf16 %v4747, %v4744
    %v4772 = vld [vmem:[%s5] sm:$0xff]
    %v4773 = vld [vmem:[%s5 + $0x8] sm:$0xff]
    %v4774 = vld [vmem:[%s5 + $0x10] sm:$0xff]
    %v4775 = vld [vmem:[%s5 + $0x18] sm:$0xff]
    %v4776 = vld [vmem:[%s5 + $0x20] sm:$0xff]
    %v4777 = vld [vmem:[%s5 + $0x28] sm:$0xff]
    %v4778 = vld [vmem:[%s5 + $0x30] sm:$0xff]
    %v4779 = vld [vmem:[%s5 + $0x38] sm:$0xff]
    %v4780 = vld [vmem:[%s5 + $0x40] sm:$0xff]
    %v4781 = vld [vmem:[%s5 + $0x48] sm:$0xff]
    %v4782 = vld [vmem:[%s5 + $0x50] sm:$0xff]
    %v4783 = vld [vmem:[%s5 + $0x58] sm:$0xff]
    %v4784 = vld [vmem:[%s5 + $0x60] sm:$0xff]
    %v4785 = vld [vmem:[%s5 + $0x68] sm:$0xff]
    %v4786 = vld [vmem:[%s5 + $0x70] sm:$0xff]
    %v4787 = vld [vmem:[%s5 + $0x78] sm:$0xff]
    %v4788 = vld [vmem:[%s5 + $0x80] sm:$0xff]
    %v4789 = vld [vmem:[%s5 + $0x88] sm:$0xff]
    %v4790 = vld [vmem:[%s5 + $0x90] sm:$0xff]
    %v4791 = vld [vmem:[%s5 + $0x98] sm:$0xff]
    %v4792 = vld [vmem:[%s5 + $0xa0] sm:$0xff]
    %v4793 = vld [vmem:[%s5 + $0xa8] sm:$0xff]
    %v4794 = vld [vmem:[%s5 + $0xb0] sm:$0xff]
    %v4795 = vld [vmem:[%s5 + $0xb8] sm:$0xff]
    %v4796 = vld [vmem:[%s5 + $0xc0] sm:$0xff]
    %v4797 = vld [vmem:[%s5 + $0xc8] sm:$0xff]
    %v4798 = vld [vmem:[%s5 + $0xd0] sm:$0xff]
    %v4799 = vld [vmem:[%s5 + $0xd8] sm:$0xff]
    %v4800 = vld [vmem:[%s5 + $0xe0] sm:$0xff]
    %v4801 = vld [vmem:[%s5 + $0xe8] sm:$0xff]
    %v4802 = vld [vmem:[%s5 + $0xf0] sm:$0xff]
    %v4803 = vld [vmem:[%s5 + $0xf8] sm:$0xff]
    %v4804 = vld [vmem:[%s5 + $0x100] sm:$0xff]
    %v4805 = vld [vmem:[%s5 + $0x108] sm:$0xff]
    %v4806 = vld [vmem:[%s5 + $0x110] sm:$0xff]
    %v4807 = vld [vmem:[%s5 + $0x118] sm:$0xff]
    %v4808 = vld [vmem:[%s5 + $0x120] sm:$0xff]
    %v4809 = vld [vmem:[%s5 + $0x128] sm:$0xff]
    %v4810 = vld [vmem:[%s5 + $0x130] sm:$0xff]
    %v4811 = vld [vmem:[%s5 + $0x138] sm:$0xff]
    %v4812 = vld [vmem:[%s5 + $0x140] sm:$0xff]
    %v4813 = vld [vmem:[%s5 + $0x148] sm:$0xff]
    %v4814 = vld [vmem:[%s5 + $0x150] sm:$0xff]
    %v4815 = vld [vmem:[%s5 + $0x158] sm:$0xff]
    %v4816 = vld [vmem:[%s5 + $0x160] sm:$0xff]
    %v4817 = vld [vmem:[%s5 + $0x168] sm:$0xff]
    %v4818 = vld [vmem:[%s5 + $0x170] sm:$0xff]
    %v4819 = vld [vmem:[%s5 + $0x178] sm:$0xff]
    %v4820 = vld [vmem:[%s6] sm:$0x3]
    %v4822 = vlaneseq
    %v4823 = vshrl.u32 %v4822, 7
    %v4824 = vsub.s32 0, %v4823
    %v4825 = vrot.slane %v4820, %v4824
    %v4826 = vlaneseq
    %v4827 = vshrl.u32 %v4826, 7
    %v4828 = vsub.s32 1, %v4827
    %v4829 = vrot.slane %v4820, %v4828
    %v4880 = vunpack.c.l.b16 %v4772
    %v4881 = vunpack.c.h.b16 %v4772
    %v4882 = vunpack.c.l.b16 %v4773
    %v4883 = vunpack.c.h.b16 %v4773
    %v4884 = vunpack.c.l.b16 %v4774
    %v4885 = vunpack.c.h.b16 %v4774
    %v4886 = vunpack.c.l.b16 %v4775
    %v4887 = vunpack.c.h.b16 %v4775
    %v4888 = vunpack.c.l.b16 %v4776
    %v4889 = vunpack.c.h.b16 %v4776
    %v4890 = vunpack.c.l.b16 %v4777
    %v4891 = vunpack.c.h.b16 %v4777
    %v4892 = vunpack.c.l.b16 %v4778
    %v4893 = vunpack.c.h.b16 %v4778
    %v4894 = vunpack.c.l.b16 %v4779
    %v4895 = vunpack.c.h.b16 %v4779
    %v4896 = vunpack.c.l.b16 %v4780
    %v4897 = vunpack.c.h.b16 %v4780
    %v4898 = vunpack.c.l.b16 %v4781
    %v4899 = vunpack.c.h.b16 %v4781
    %v4900 = vunpack.c.l.b16 %v4782
    %v4901 = vunpack.c.h.b16 %v4782
    %v4902 = vunpack.c.l.b16 %v4783
    %v4903 = vunpack.c.h.b16 %v4783
    %v4904 = vunpack.c.l.b16 %v4784
    %v4905 = vunpack.c.h.b16 %v4784
    %v4906 = vunpack.c.l.b16 %v4785
    %v4907 = vunpack.c.h.b16 %v4785
    %v4908 = vunpack.c.l.b16 %v4786
    %v4909 = vunpack.c.h.b16 %v4786
    %v4910 = vunpack.c.l.b16 %v4787
    %v4911 = vunpack.c.h.b16 %v4787
    %v4912 = vunpack.c.l.b16 %v4788
    %v4913 = vunpack.c.h.b16 %v4788
    %v4914 = vunpack.c.l.b16 %v4789
    %v4915 = vunpack.c.h.b16 %v4789
    %v4916 = vunpack.c.l.b16 %v4790
    %v4917 = vunpack.c.h.b16 %v4790
    %v4918 = vunpack.c.l.b16 %v4791
    %v4919 = vunpack.c.h.b16 %v4791
    %v4920 = vunpack.c.l.b16 %v4792
    %v4921 = vunpack.c.h.b16 %v4792
    %v4922 = vunpack.c.l.b16 %v4793
    %v4923 = vunpack.c.h.b16 %v4793
    %v4924 = vunpack.c.l.b16 %v4794
    %v4925 = vunpack.c.h.b16 %v4794
    %v4926 = vunpack.c.l.b16 %v4795
    %v4927 = vunpack.c.h.b16 %v4795
    %v4928 = vunpack.c.l.b16 %v4796
    %v4929 = vunpack.c.h.b16 %v4796
    %v4930 = vunpack.c.l.b16 %v4797
    %v4931 = vunpack.c.h.b16 %v4797
    %v4932 = vunpack.c.l.b16 %v4798
    %v4933 = vunpack.c.h.b16 %v4798
    %v4934 = vunpack.c.l.b16 %v4799
    %v4935 = vunpack.c.h.b16 %v4799
    %v4936 = vunpack.c.l.b16 %v4800
    %v4937 = vunpack.c.h.b16 %v4800
    %v4938 = vunpack.c.l.b16 %v4801
    %v4939 = vunpack.c.h.b16 %v4801
    %v4940 = vunpack.c.l.b16 %v4802
    %v4941 = vunpack.c.h.b16 %v4802
    %v4942 = vunpack.c.l.b16 %v4803
    %v4943 = vunpack.c.h.b16 %v4803
    %v4944 = vunpack.c.l.b16 %v4804
    %v4945 = vunpack.c.h.b16 %v4804
    %v4946 = vunpack.c.l.b16 %v4805
    %v4947 = vunpack.c.h.b16 %v4805
    %v4948 = vunpack.c.l.b16 %v4806
    %v4949 = vunpack.c.h.b16 %v4806
    %v4950 = vunpack.c.l.b16 %v4807
    %v4951 = vunpack.c.h.b16 %v4807
    %v4952 = vunpack.c.l.b16 %v4808
    %v4953 = vunpack.c.h.b16 %v4808
    %v4954 = vunpack.c.l.b16 %v4809
    %v4955 = vunpack.c.h.b16 %v4809
    %v4956 = vunpack.c.l.b16 %v4810
    %v4957 = vunpack.c.h.b16 %v4810
    %v4958 = vunpack.c.l.b16 %v4811
    %v4959 = vunpack.c.h.b16 %v4811
    %v4960 = vunpack.c.l.b16 %v4812
    %v4961 = vunpack.c.h.b16 %v4812
    %v4962 = vunpack.c.l.b16 %v4813
    %v4963 = vunpack.c.h.b16 %v4813
    %v4964 = vunpack.c.l.b16 %v4814
    %v4965 = vunpack.c.h.b16 %v4814
    %v4966 = vunpack.c.l.b16 %v4815
    %v4967 = vunpack.c.h.b16 %v4815
    %v4968 = vunpack.c.l.b16 %v4816
    %v4969 = vunpack.c.h.b16 %v4816
    %v4970 = vunpack.c.l.b16 %v4817
    %v4971 = vunpack.c.h.b16 %v4817
    %v4972 = vunpack.c.l.b16 %v4818
    %v4973 = vunpack.c.h.b16 %v4818
    %v4974 = vunpack.c.l.b16 %v4819
    %v4975 = vunpack.c.h.b16 %v4819
    %v4976 = vpack.c.b16 %v4882, %v4880
    %v4977 = vpack.c.b16 %v4883, %v4881
    %v4978 = vpack.c.b16 %v4886, %v4884
    %v4979 = vpack.c.b16 %v4887, %v4885
    %v4980 = vpack.c.b16 %v4890, %v4888
    %v4981 = vpack.c.b16 %v4891, %v4889
    %v4982 = vpack.c.b16 %v4894, %v4892
    %v4983 = vpack.c.b16 %v4895, %v4893
    %v4984 = vpack.c.b16 %v4898, %v4896
    %v4985 = vpack.c.b16 %v4899, %v4897
    %v4986 = vpack.c.b16 %v4902, %v4900
    %v4987 = vpack.c.b16 %v4903, %v4901
    %v4988 = vpack.c.b16 %v4906, %v4904
    %v4989 = vpack.c.b16 %v4907, %v4905
    %v4990 = vpack.c.b16 %v4910, %v4908
    %v4991 = vpack.c.b16 %v4911, %v4909
    %v4992 = vpack.c.b16 %v4914, %v4912
    %v4993 = vpack.c.b16 %v4915, %v4913
    %v4994 = vpack.c.b16 %v4918, %v4916
    %v4995 = vpack.c.b16 %v4919, %v4917
    %v4996 = vpack.c.b16 %v4922, %v4920
    %v4997 = vpack.c.b16 %v4923, %v4921
    %v4998 = vpack.c.b16 %v4926, %v4924
    %v4999 = vpack.c.b16 %v4927, %v4925
    %v5000 = vpack.c.b16 %v4930, %v4928
    %v5001 = vpack.c.b16 %v4931, %v4929
    %v5002 = vpack.c.b16 %v4934, %v4932
    %v5003 = vpack.c.b16 %v4935, %v4933
    %v5004 = vpack.c.b16 %v4938, %v4936
    %v5005 = vpack.c.b16 %v4939, %v4937
    %v5006 = vpack.c.b16 %v4942, %v4940
    %v5007 = vpack.c.b16 %v4943, %v4941
    %v5008 = vpack.c.b16 %v4946, %v4944
    %v5009 = vpack.c.b16 %v4947, %v4945
    %v5010 = vpack.c.b16 %v4950, %v4948
    %v5011 = vpack.c.b16 %v4951, %v4949
    %v5012 = vpack.c.b16 %v4954, %v4952
    %v5013 = vpack.c.b16 %v4955, %v4953
    %v5014 = vpack.c.b16 %v4958, %v4956
    %v5015 = vpack.c.b16 %v4959, %v4957
    %v5016 = vpack.c.b16 %v4962, %v4960
    %v5017 = vpack.c.b16 %v4963, %v4961
    %v5018 = vpack.c.b16 %v4966, %v4964
    %v5019 = vpack.c.b16 %v4967, %v4965
    %v5020 = vpack.c.b16 %v4970, %v4968
    %v5021 = vpack.c.b16 %v4971, %v4969
    %v5022 = vpack.c.b16 %v4974, %v4972
    %v5023 = vpack.c.b16 %v4975, %v4973
    %5072 = vmatprep.subr.bf16.mxu0 %v4977
    %5073 = vmatpush1.bf16.msra.mxu0 %v4976
    %5074 = vmatprep.subr.bf16.mxu0 %v4979
    %5075 = vmatpush1.bf16.msra.mxu0 %v4978
    %5076 = vmatprep.subr.bf16.mxu0 %v4981
    %5077 = vmatpush1.bf16.msra.mxu0 %v4980
    %5078 = vmatprep.subr.bf16.mxu0 %v4983
    %5079 = vmatpush1.bf16.msra.mxu0 %v4982
    %5080 = vmatprep.subr.bf16.mxu0 %v4985
    %5081 = vmatpush1.bf16.msra.mxu0 %v4984
    %5082 = vmatprep.subr.bf16.mxu0 %v4987
    %5083 = vmatpush1.bf16.msra.mxu0 %v4986
    %5084 = vmatprep.subr.bf16.mxu0 %v4989
    %5085 = vmatpush1.bf16.msra.mxu0 %v4988
    %5086 = vmatprep.subr.bf16.mxu0 %v4991
    %5087 = vmatpush1.bf16.msra.mxu0 %v4990
    %5088 = vmatprep.subr.bf16.mxu0 %v4993
    %5089 = vmatpush1.bf16.msra.mxu0 %v4992
    %5090 = vmatprep.subr.bf16.mxu0 %v4995
    %5091 = vmatpush1.bf16.msra.mxu0 %v4994
    %5092 = vmatprep.subr.bf16.mxu0 %v4997
    %5093 = vmatpush1.bf16.msra.mxu0 %v4996
    %5094 = vmatprep.subr.bf16.mxu0 %v4999
    %5095 = vmatpush1.bf16.msra.mxu0 %v4998
    %5096 = vmatprep.subr.bf16.mxu0 %v5001
    %5097 = vmatpush1.bf16.msra.mxu0 %v5000
    %5098 = vmatprep.subr.bf16.mxu0 %v5003
    %5099 = vmatpush1.bf16.msra.mxu0 %v5002
    %5100 = vmatprep.subr.bf16.mxu0 %v5005
    %5101 = vmatpush1.bf16.msra.mxu0 %v5004
    %5102 = vmatprep.subr.bf16.mxu0 %v5007
    %5103 = vmatpush1.bf16.msra.mxu0 %v5006
    %5104 = vmatprep.mubr.bf16.mxu0 %v4749
    %5105 = vmatmul.mubr.bf16.gmra.mrb[0].mxu0 %v4748
    %v5106 = vpop.f32.mrb[0].mxu0
    %v5107 = vadd.f32 %v4825, %v5106
    %v5108 = vpop.f32.mrb[0].mxu0
    %v5109 = vadd.f32 %v4829, %v5108
    %v5110 = vpop.f32.mrb[0].mxu0
    %v5111 = vadd.f32 %v4825, %v5110
    %v5112 = vpop.f32.mrb[0].mxu0
    %v5113 = vadd.f32 %v4829, %v5112
    %5114 = vmatprep.mubr.bf16.mxu0 %v4752
    %5115 = vmatmul.mubr.bf16.gmra.mrb[0].mxu0 %v4751
    %v5116 = vpop.f32.mrb[0].mxu0
    %v5117 = vadd.f32 %v4825, %v5116
    %v5118 = vpop.f32.mrb[0].mxu0
    %v5119 = vadd.f32 %v4829, %v5118
    %v5120 = vpop.f32.mrb[0].mxu0
    %v5121 = vadd.f32 %v4825, %v5120
    %v5122 = vpop.f32.mrb[0].mxu0
    %v5123 = vadd.f32 %v4829, %v5122
    %5124 = vmatprep.mubr.bf16.mxu0 %v4755
    %5125 = vmatmul.mubr.bf16.gmra.mrb[0].mxu0 %v4754
    %v5126 = vpop.f32.mrb[0].mxu0
    %v5127 = vadd.f32 %v4825, %v5126
    %v5128 = vpop.f32.mrb[0].mxu0
    %v5129 = vadd.f32 %v4829, %v5128
    %v5130 = vpop.f32.mrb[0].mxu0
    %v5131 = vadd.f32 %v4825, %v5130
    %v5132 = vpop.f32.mrb[0].mxu0
    %v5133 = vadd.f32 %v4829, %v5132
    %5134 = vmatprep.mubr.bf16.mxu0 %v4758
    %5135 = vmatmul.mubr.bf16.gmra.mrb[0].mxu0 %v4757
    %v5136 = vpop.f32.mrb[0].mxu0
    %v5137 = vadd.f32 %v4825, %v5136
    %v5138 = vpop.f32.mrb[0].mxu0
    %v5139 = vadd.f32 %v4829, %v5138
    %v5140 = vpop.f32.mrb[0].mxu0
    %v5141 = vadd.f32 %v4825, %v5140
    %v5142 = vpop.f32.mrb[0].mxu0
    %v5143 = vadd.f32 %v4829, %v5142
    %5144 = vmatprep.mubr.bf16.mxu0 %v4761
    %5145 = vmatmul.mubr.bf16.gmra.mrb[0].mxu0 %v4760
    %v5146 = vpop.f32.mrb[0].mxu0
    %v5147 = vadd.f32 %v4825, %v5146
    %v5148 = vpop.f32.mrb[0].mxu0
    %v5149 = vadd.f32 %v4829, %v5148
    %v5150 = vpop.f32.mrb[0].mxu0
    %v5151 = vadd.f32 %v4825, %v5150
    %v5152 = vpop.f32.mrb[0].mxu0
    %v5153 = vadd.f32 %v4829, %v5152
    %5154 = vmatprep.mubr.bf16.mxu0 %v4764
    %5155 = vmatmul.mubr.bf16.gmra.mrb[0].mxu0 %v4763
    %v5156 = vpop.f32.mrb[0].mxu0
    %v5157 = vadd.f32 %v4825, %v5156
    %v5158 = vpop.f32.mrb[0].mxu0
    %v5159 = vadd.f32 %v4829, %v5158
    %v5160 = vpop.f32.mrb[0].mxu0
    %v5161 = vadd.f32 %v4825, %v5160
    %v5162 = vpop.f32.mrb[0].mxu0
    %v5163 = vadd.f32 %v4829, %v5162
    %5164 = vmatprep.mubr.bf16.mxu0 %v4767
    %5165 = vmatmul.mubr.bf16.gmra.mrb[0].mxu0 %v4766
    %v5166 = vpop.f32.mrb[0].mxu0
    %v5167 = vadd.f32 %v4825, %v5166
    %v5168 = vpop.f32.mrb[0].mxu0
    %v5169 = vadd.f32 %v4829, %v5168
    %v5170 = vpop.f32.mrb[0].mxu0
    %v5171 = vadd.f32 %v4825, %v5170
    %v5172 = vpop.f32.mrb[0].mxu0
    %v5173 = vadd.f32 %v4829, %v5172
    %5174 = vmatprep.mubr.bf16.mxu0 %v4770
    %5175 = vmatmul.mubr.bf16.gmra.mrb[0].mxu0 %v4769
    %v5176 = vpop.f32.mrb[0].mxu0
    %v5177 = vadd.f32 %v4825, %v5176
    %v5178 = vpop.f32.mrb[0].mxu0
    %v5179 = vadd.f32 %v4829, %v5178
    %v5180 = vpop.f32.mrb[0].mxu0
    %v5181 = vadd.f32 %v4825, %v5180
    %v5182 = vpop.f32.mrb[0].mxu0
    %v5183 = vadd.f32 %v4829, %v5182
    %5184 = vdwg.mxu0
    %5185 = vmatprep.subr.bf16.mxu0 %v5009
    %5186 = vmatpush1.bf16.msra.mxu0 %v5008
    %5187 = vmatprep.subr.bf16.mxu0 %v5011
    %5188 = vmatpush1.bf16.msra.mxu0 %v5010
    %5189 = vmatprep.subr.bf16.mxu0 %v5013
    %5190 = vmatpush1.bf16.msra.mxu0 %v5012
    %5191 = vmatprep.subr.bf16.mxu0 %v5015
    %5192 = vmatpush1.bf16.msra.mxu0 %v5014
    %5193 = vmatprep.subr.bf16.mxu0 %v5017
    %5194 = vmatpush1.bf16.msra.mxu0 %v5016
    %5195 = vmatprep.subr.bf16.mxu0 %v5019
    %5196 = vmatpush1.bf16.msra.mxu0 %v5018
    %5197 = vmatprep.subr.bf16.mxu0 %v5021
    %5198 = vmatpush1.bf16.msra.mxu0 %v5020
    %5199 = vmatprep.subr.bf16.mxu0 %v5023
    %5200 = vmatpush1.bf16.msra.mxu0 %v5022
    %5201 = vmatprep.subr.bf16.mxu0 0
    %5202 = vmatpush1.bf16.msra.mxu0 0
    %5203 = vmatprep.subr.bf16.mxu0 0
    %5204 = vmatpush1.bf16.msra.mxu0 0
    %5205 = vmatprep.subr.bf16.mxu0 0
    %5206 = vmatpush1.bf16.msra.mxu0 0
    %5207 = vmatprep.subr.bf16.mxu0 0
    %5208 = vmatpush1.bf16.msra.mxu0 0
    %5209 = vmatprep.subr.bf16.mxu0 0
    %5210 = vmatpush1.bf16.msra.mxu0 0
    %5211 = vmatprep.subr.bf16.mxu0 0
    %5212 = vmatpush1.bf16.msra.mxu0 0
    %5213 = vmatprep.subr.bf16.mxu0 0
    %5214 = vmatpush1.bf16.msra.mxu0 0
    %5215 = vmatprep.subr.bf16.mxu0 0
    %5216 = vmatpush1.bf16.msra.mxu0 0
    %5217 = vmatprep.mubr.bf16.mxu0 0
    %5218 = vmatmul.mubr.bf16.gmra.mrb[0].mxu0 %v4750
    %v5219 = vpop.f32.mrb[0].mxu0
    %v5220 = vadd.f32 %v5107, %v5219
    %v5221 = vpop.f32.mrb[0].mxu0
    %v5222 = vadd.f32 %v5109, %v5221
    %v5223 = vpop.f32.mrb[0].mxu0
    %v5224 = vadd.f32 %v5111, %v5223
    %v5225 = vpop.f32.mrb[0].mxu0
    %v5226 = vadd.f32 %v5113, %v5225
    %5227 = vmatprep.mubr.bf16.mxu0 0
    %5228 = vmatmul.mubr.bf16.gmra.mrb[0].mxu0 %v4753
    %v5229 = vpop.f32.mrb[0].mxu0
    %v5230 = vadd.f32 %v5117, %v5229
    %v5231 = vpop.f32.mrb[0].mxu0
    %v5232 = vadd.f32 %v5119, %v5231
    %v5233 = vpop.f32.mrb[0].mxu0
    %v5234 = vadd.f32 %v5121, %v5233
    %v5235 = vpop.f32.mrb[0].mxu0
    %v5236 = vadd.f32 %v5123, %v5235
    %5237 = vmatprep.mubr.bf16.mxu0 0
    %5238 = vmatmul.mubr.bf16.gmra.mrb[0].mxu0 %v4756
    %v5239 = vpop.f32.mrb[0].mxu0
    %v5240 = vadd.f32 %v5127, %v5239
    %v5241 = vpop.f32.mrb[0].mxu0
    %v5242 = vadd.f32 %v5129, %v5241
    %v5243 = vpop.f32.mrb[0].mxu0
    %v5244 = vadd.f32 %v5131, %v5243
    %v5245 = vpop.f32.mrb[0].mxu0
    %v5246 = vadd.f32 %v5133, %v5245
    %5247 = vmatprep.mubr.bf16.mxu0 0
    %5248 = vmatmul.mubr.bf16.gmra.mrb[0].mxu0 %v4759
    %v5249 = vpop.f32.mrb[0].mxu0
    %v5250 = vadd.f32 %v5137, %v5249
    %v5251 = vpop.f32.mrb[0].mxu0
    %v5252 = vadd.f32 %v5139, %v5251
    %v5253 = vpop.f32.mrb[0].mxu0
    %v5254 = vadd.f32 %v5141, %v5253
    %v5255 = vpop.f32.mrb[0].mxu0
    %v5256 = vadd.f32 %v5143, %v5255
    %5257 = vmatprep.mubr.bf16.mxu0 0
    %5258 = vmatmul.mubr.bf16.gmra.mrb[0].mxu0 %v4762
    %v5259 = vpop.f32.mrb[0].mxu0
    %v5260 = vadd.f32 %v5147, %v5259
    %v5261 = vpop.f32.mrb[0].mxu0
    %v5262 = vadd.f32 %v5149, %v5261
    %v5263 = vpop.f32.mrb[0].mxu0
    %v5264 = vadd.f32 %v5151, %v5263
    %v5265 = vpop.f32.mrb[0].mxu0
    %v5266 = vadd.f32 %v5153, %v5265
    %5267 = vmatprep.mubr.bf16.mxu0 0
    %5268 = vmatmul.mubr.bf16.gmra.mrb[0].mxu0 %v4765
    %v5269 = vpop.f32.mrb[0].mxu0
    %v5270 = vadd.f32 %v5157, %v5269
    %v5271 = vpop.f32.mrb[0].mxu0
    %v5272 = vadd.f32 %v5159, %v5271
    %v5273 = vpop.f32.mrb[0].mxu0
    %v5274 = vadd.f32 %v5161, %v5273
    %v5275 = vpop.f32.mrb[0].mxu0
    %v5276 = vadd.f32 %v5163, %v5275
    %5277 = vmatprep.mubr.bf16.mxu0 0
    %5278 = vmatmul.mubr.bf16.gmra.mrb[0].mxu0 %v4768
    %v5279 = vpop.f32.mrb[0].mxu0
    %v5280 = vadd.f32 %v5167, %v5279
    %v5281 = vpop.f32.mrb[0].mxu0
    %v5282 = vadd.f32 %v5169, %v5281
    %v5283 = vpop.f32.mrb[0].mxu0
    %v5284 = vadd.f32 %v5171, %v5283
    %v5285 = vpop.f32.mrb[0].mxu0
    %v5286 = vadd.f32 %v5173, %v5285
    %5287 = vmatprep.mubr.bf16.mxu0 0
    %5288 = vmatmul.mubr.bf16.gmra.mrb[0].mxu0 %v4771
    %v5289 = vpop.f32.mrb[0].mxu0
    %v5290 = vadd.f32 %v5177, %v5289
    %v5291 = vpop.f32.mrb[0].mxu0
    %v5292 = vadd.f32 %v5179, %v5291
    %v5293 = vpop.f32.mrb[0].mxu0
    %v5294 = vadd.f32 %v5181, %v5293
    %v5295 = vpop.f32.mrb[0].mxu0
    %v5296 = vadd.f32 %v5183, %v5295
    %5297 = vdwg.mxu0
    %v5298 = vmax.f32 %v5220, 0.0
    %v5299 = vmax.f32 %v5222, 0.0
    %v5300 = vmax.f32 %v5224, 0.0
    %v5301 = vmax.f32 %v5226, 0.0
    %v5302 = vmax.f32 %v5230, 0.0
    %v5303 = vmax.f32 %v5232, 0.0
    %v5304 = vmax.f32 %v5234, 0.0
    %v5305 = vmax.f32 %v5236, 0.0
    %v5306 = vmax.f32 %v5240, 0.0
    %v5307 = vmax.f32 %v5242, 0.0
    %v5308 = vmax.f32 %v5244, 0.0
    %v5309 = vmax.f32 %v5246, 0.0
    %v5310 = vmax.f32 %v5250, 0.0
    %v5311 = vmax.f32 %v5252, 0.0
    %v5312 = vmax.f32 %v5254, 0.0
    %v5313 = vmax.f32 %v5256, 0.0
    %v5314 = vmax.f32 %v5260, 0.0
    %v5315 = vmax.f32 %v5262, 0.0
    %v5316 = vmax.f32 %v5264, 0.0
    %v5317 = vmax.f32 %v5266, 0.0
    %v5318 = vmax.f32 %v5270, 0.0
    %v5319 = vmax.f32 %v5272, 0.0
    %v5320 = vmax.f32 %v5274, 0.0
    %v5321 = vmax.f32 %v5276, 0.0
    %v5322 = vmax.f32 %v5280, 0.0
    %v5323 = vmax.f32 %v5282, 0.0
    %v5324 = vmax.f32 %v5284, 0.0
    %v5325 = vmax.f32 %v5286, 0.0
    %v5326 = vmax.f32 %v5290, 0.0
    %v5327 = vmax.f32 %v5292, 0.0
    %v5328 = vmax.f32 %v5294, 0.0
    %v5329 = vmax.f32 %v5296, 0.0
    %v5330 = vpack.c.bf16 %v5300, %v5298
    %v5331 = vpack.c.bf16 %v5301, %v5299
    %v5332 = vpack.c.bf16 %v5304, %v5302
    %v5333 = vpack.c.bf16 %v5305, %v5303
    %v5334 = vpack.c.bf16 %v5308, %v5306
    %v5335 = vpack.c.bf16 %v5309, %v5307
    %v5336 = vpack.c.bf16 %v5312, %v5310
    %v5337 = vpack.c.bf16 %v5313, %v5311
    %v5338 = vpack.c.bf16 %v5316, %v5314
    %v5339 = vpack.c.bf16 %v5317, %v5315
    %v5340 = vpack.c.bf16 %v5320, %v5318
    %v5341 = vpack.c.bf16 %v5321, %v5319
    %v5342 = vpack.c.bf16 %v5324, %v5322
    %v5343 = vpack.c.bf16 %v5325, %v5323
    %v5344 = vpack.c.bf16 %v5328, %v5326
    %v5345 = vpack.c.bf16 %v5329, %v5327
    %v5346 = vld [vmem:[%s7] sm:$0xf]
    %v5347 = vld [vmem:[%s7 + $0x4] sm:$0xf]
    %v5348 = vld [vmem:[%s7 + $0x8] sm:$0xf]
    %v5349 = vld [vmem:[%s7 + $0xc] sm:$0xf]
    %v5350 = vld [vmem:[%s7 + $0x10] sm:$0xf]
    %v5351 = vld [vmem:[%s7 + $0x14] sm:$0xf]
    %v5352 = vld [vmem:[%s7 + $0x18] sm:$0xf]
    %v5353 = vld [vmem:[%s7 + $0x1c] sm:$0xf]
    %v5354 = vld [vmem:[%s7 + $0x20] sm:$0xf]
    %v5355 = vld [vmem:[%s7 + $0x24] sm:$0xf]
    %v5356 = vld [vmem:[%s7 + $0x28] sm:$0xf]
    %v5357 = vld [vmem:[%s7 + $0x2c] sm:$0xf]
    %v5358 = vld [vmem:[%s7 + $0x30] sm:$0xf]
    %v5359 = vld [vmem:[%s7 + $0x34] sm:$0xf]
    %v5360 = vld [vmem:[%s7 + $0x38] sm:$0xf]
    %v5361 = vld [vmem:[%s7 + $0x3c] sm:$0xf]
    %v5362 = vld [vmem:[%s7 + $0x40] sm:$0xf]
    %v5363 = vld [vmem:[%s7 + $0x44] sm:$0xf]
    %v5364 = vld [vmem:[%s7 + $0x48] sm:$0xf]
    %v5365 = vld [vmem:[%s7 + $0x4c] sm:$0xf]
    %v5366 = vld [vmem:[%s7 + $0x50] sm:$0xf]
    %v5367 = vld [vmem:[%s7 + $0x54] sm:$0xf]
    %v5368 = vld [vmem:[%s7 + $0x58] sm:$0xf]
    %v5369 = vld [vmem:[%s7 + $0x5c] sm:$0xf]
    %v5370 = vld [vmem:[%s7 + $0x60] sm:$0xf]
    %v5371 = vld [vmem:[%s7 + $0x64] sm:$0xf]
    %v5372 = vld [vmem:[%s7 + $0x68] sm:$0xf]
    %v5373 = vld [vmem:[%s7 + $0x6c] sm:$0xf]
    %v5374 = vld [vmem:[%s7 + $0x70] sm:$0xf]
    %v5375 = vld [vmem:[%s7 + $0x74] sm:$0xf]
    %v5376 = vld [vmem:[%s7 + $0x78] sm:$0xf]
    %v5377 = vld [vmem:[%s7 + $0x7c] sm:$0xf]
    %v5378 = vld [vmem:[%s8] sm:$0x1]
    %v5380 = vlaneseq
    %v5381 = vshrl.u32 %v5380, 7
    %v5382 = vsub.s32 0, %v5381
    %v5383 = vrot.slane %v5378, %v5382
    %v5417 = vunpack.c.l.b16 %v5346
    %v5418 = vunpack.c.l.b16 %v5347
    %v5419 = vunpack.c.l.b16 %v5348
    %v5420 = vunpack.c.l.b16 %v5349
    %v5421 = vunpack.c.l.b16 %v5350
    %v5422 = vunpack.c.l.b16 %v5351
    %v5423 = vunpack.c.l.b16 %v5352
    %v5424 = vunpack.c.l.b16 %v5353
    %v5425 = vunpack.c.l.b16 %v5354
    %v5426 = vunpack.c.l.b16 %v5355
    %v5427 = vunpack.c.l.b16 %v5356
    %v5428 = vunpack.c.l.b16 %v5357
    %v5429 = vunpack.c.l.b16 %v5358
    %v5430 = vunpack.c.l.b16 %v5359
    %v5431 = vunpack.c.l.b16 %v5360
    %v5432 = vunpack.c.l.b16 %v5361
    %v5433 = vunpack.c.l.b16 %v5362
    %v5434 = vunpack.c.l.b16 %v5363
    %v5435 = vunpack.c.l.b16 %v5364
    %v5436 = vunpack.c.l.b16 %v5365
    %v5437 = vunpack.c.l.b16 %v5366
    %v5438 = vunpack.c.l.b16 %v5367
    %v5439 = vunpack.c.l.b16 %v5368
    %v5440 = vunpack.c.l.b16 %v5369
    %v5441 = vunpack.c.l.b16 %v5370
    %v5442 = vunpack.c.l.b16 %v5371
    %v5443 = vunpack.c.l.b16 %v5372
    %v5444 = vunpack.c.l.b16 %v5373
    %v5445 = vunpack.c.l.b16 %v5374
    %v5446 = vunpack.c.l.b16 %v5375
    %v5447 = vunpack.c.l.b16 %v5376
    %v5448 = vunpack.c.l.b16 %v5377
    %v5449 = vpack.c.b16 %v5418, %v5417
    %v5450 = vpack.c.b16 %v5420, %v5419
    %v5451 = vpack.c.b16 %v5422, %v5421
    %v5452 = vpack.c.b16 %v5424, %v5423
    %v5453 = vpack.c.b16 %v5426, %v5425
    %v5454 = vpack.c.b16 %v5428, %v5427
    %v5455 = vpack.c.b16 %v5430, %v5429
    %v5456 = vpack.c.b16 %v5432, %v5431
    %v5457 = vpack.c.b16 %v5434, %v5433
    %v5458 = vpack.c.b16 %v5436, %v5435
    %v5459 = vpack.c.b16 %v5438, %v5437
    %v5460 = vpack.c.b16 %v5440, %v5439
    %v5461 = vpack.c.b16 %v5442, %v5441
    %v5462 = vpack.c.b16 %v5444, %v5443
    %v5463 = vpack.c.b16 %v5446, %v5445
    %v5464 = vpack.c.b16 %v5448, %v5447
    %5481 = vmatprep.subr.bf16.mxu0 0
    %5482 = vmatpush1.bf16.msra.mxu0 %v5449
    %5483 = vmatprep.subr.bf16.mxu0 0
    %5484 = vmatpush1.bf16.msra.mxu0 %v5450
    %5485 = vmatprep.subr.bf16.mxu0 0
    %5486 = vmatpush1.bf16.msra.mxu0 %v5451
    %5487 = vmatprep.subr.bf16.mxu0 0
    %5488 = vmatpush1.bf16.msra.mxu0 %v5452
    %5489 = vmatprep.subr.bf16.mxu0 0
    %5490 = vmatpush1.bf16.msra.mxu0 %v5453
    %5491 = vmatprep.subr.bf16.mxu0 0
    %5492 = vmatpush1.bf16.msra.mxu0 %v5454
    %5493 = vmatprep.subr.bf16.mxu0 0
    %5494 = vmatpush1.bf16.msra.mxu0 %v5455
    %5495 = vmatprep.subr.bf16.mxu0 0
    %5496 = vmatpush1.bf16.msra.mxu0 %v5456
    %5497 = vmatprep.subr.bf16.mxu0 0
    %5498 = vmatpush1.bf16.msra.mxu0 %v5457
    %5499 = vmatprep.subr.bf16.mxu0 0
    %5500 = vmatpush1.bf16.msra.mxu0 %v5458
    %5501 = vmatprep.subr.bf16.mxu0 0
    %5502 = vmatpush1.bf16.msra.mxu0 %v5459
    %5503 = vmatprep.subr.bf16.mxu0 0
    %5504 = vmatpush1.bf16.msra.mxu0 %v5460
    %5505 = vmatprep.subr.bf16.mxu0 0
    %5506 = vmatpush1.bf16.msra.mxu0 %v5461
    %5507 = vmatprep.subr.bf16.mxu0 0
    %5508 = vmatpush1.bf16.msra.mxu0 %v5462
    %5509 = vmatprep.subr.bf16.mxu0 0
    %5510 = vmatpush1.bf16.msra.mxu0 %v5463
    %5511 = vmatprep.subr.bf16.mxu0 0
    %5512 = vmatpush1.bf16.msra.mxu0 %v5464
    %5513 = vmatprep.mubr.bf16.mxu0 %v5331
    %5514 = vmatmul.mubr.bf16.gmra.mrb[0].mxu0 %v5330
    %v5515 = vpop.f32.mrb[0].mxu0
    %v5516 = vadd.f32 %v5383, %v5515
    %v5517 = vpop.f32.mrb[0].mxu0
    %v5518 = vpop.f32.mrb[0].mxu0
    %v5519 = vadd.f32 %v5383, %v5518
    %v5520 = vpop.f32.mrb[0].mxu0
    %5521 = vmatprep.mubr.bf16.mxu0 %v5333
    %5522 = vmatmul.mubr.bf16.gmra.mrb[0].mxu0 %v5332
    %v5523 = vpop.f32.mrb[0].mxu0
    %v5524 = vadd.f32 %v5383, %v5523
    %v5525 = vpop.f32.mrb[0].mxu0
    %v5526 = vpop.f32.mrb[0].mxu0
    %v5527 = vadd.f32 %v5383, %v5526
    %v5528 = vpop.f32.mrb[0].mxu0
    %5529 = vmatprep.mubr.bf16.mxu0 %v5335
    %5530 = vmatmul.mubr.bf16.gmra.mrb[0].mxu0 %v5334
    %v5531 = vpop.f32.mrb[0].mxu0
    %v5532 = vadd.f32 %v5383, %v5531
    %v5533 = vpop.f32.mrb[0].mxu0
    %v5534 = vpop.f32.mrb[0].mxu0
    %v5535 = vadd.f32 %v5383, %v5534
    %v5536 = vpop.f32.mrb[0].mxu0
    %5537 = vmatprep.mubr.bf16.mxu0 %v5337
    %5538 = vmatmul.mubr.bf16.gmra.mrb[0].mxu0 %v5336
    %v5539 = vpop.f32.mrb[0].mxu0
    %v5540 = vadd.f32 %v5383, %v5539
    %v5541 = vpop.f32.mrb[0].mxu0
    %v5542 = vpop.f32.mrb[0].mxu0
    %v5543 = vadd.f32 %v5383, %v5542
    %v5544 = vpop.f32.mrb[0].mxu0
    %5545 = vmatprep.mubr.bf16.mxu0 %v5339
    %5546 = vmatmul.mubr.bf16.gmra.mrb[0].mxu0 %v5338
    %v5547 = vpop.f32.mrb[0].mxu0
    %v5548 = vadd.f32 %v5383, %v5547
    %v5549 = vpop.f32.mrb[0].mxu0
    %v5550 = vpop.f32.mrb[0].mxu0
    %v5551 = vadd.f32 %v5383, %v5550
    %v5552 = vpop.f32.mrb[0].mxu0
    %5553 = vmatprep.mubr.bf16.mxu0 %v5341
    %5554 = vmatmul.mubr.bf16.gmra.mrb[0].mxu0 %v5340
    %v5555 = vpop.f32.mrb[0].mxu0
    %v5556 = vadd.f32 %v5383, %v5555
    %v5557 = vpop.f32.mrb[0].mxu0
    %v5558 = vpop.f32.mrb[0].mxu0
    %v5559 = vadd.f32 %v5383, %v5558
    %v5560 = vpop.f32.mrb[0].mxu0
    %5561 = vmatprep.mubr.bf16.mxu0 %v5343
    %5562 = vmatmul.mubr.bf16.gmra.mrb[0].mxu0 %v5342
    %v5563 = vpop.f32.mrb[0].mxu0
    %v5564 = vadd.f32 %v5383, %v5563
    %v5565 = vpop.f32.mrb[0].mxu0
    %v5566 = vpop.f32.mrb[0].mxu0
    %v5567 = vadd.f32 %v5383, %v5566
    %v5568 = vpop.f32.mrb[0].mxu0
    %5569 = vmatprep.mubr.bf16.mxu0 %v5345
    %5570 = vmatmul.mubr.bf16.gmra.mrb[0].mxu0 %v5344
    %v5571 = vpop.f32.mrb[0].mxu0
    %v5572 = vadd.f32 %v5383, %v5571
    %v5573 = vpop.f32.mrb[0].mxu0
    %v5574 = vpop.f32.mrb[0].mxu0
    %v5575 = vadd.f32 %v5383, %v5574
    %v5576 = vpop.f32.mrb[0].mxu0
    %5577 = vdwg.mxu0
    %v5578 = vmax.f32 %v5516, 0.0
    %v5579 = vmax.f32 %v5519, 0.0
    %v5580 = vmax.f32 %v5524, 0.0
    %v5581 = vmax.f32 %v5527, 0.0
    %v5582 = vmax.f32 %v5532, 0.0
    %v5583 = vmax.f32 %v5535, 0.0
    %v5584 = vmax.f32 %v5540, 0.0
    %v5585 = vmax.f32 %v5543, 0.0
    %v5586 = vmax.f32 %v5548, 0.0
    %v5587 = vmax.f32 %v5551, 0.0
    %v5588 = vmax.f32 %v5556, 0.0
    %v5589 = vmax.f32 %v5559, 0.0
    %v5590 = vmax.f32 %v5564, 0.0
    %v5591 = vmax.f32 %v5567, 0.0
    %v5592 = vmax.f32 %v5572, 0.0
    %v5593 = vmax.f32 %v5575, 0.0
    %v5594 = vpack.c.bf16 %v5579, %v5578
    %v5595 = vpack.c.bf16 %v5581, %v5580
    %v5596 = vpack.c.bf16 %v5583, %v5582
    %v5597 = vpack.c.bf16 %v5585, %v5584
    %v5598 = vpack.c.bf16 %v5587, %v5586
    %v5599 = vpack.c.bf16 %v5589, %v5588
    %v5600 = vpack.c.bf16 %v5591, %v5590
    %v5601 = vpack.c.bf16 %v5593, %v5592
    %v5602 = vld [vmem:[%s9] sm:$0xf]
    %v5603 = vld [vmem:[%s9 + $0x4] sm:$0xf]
    %v5604 = vld [vmem:[%s9 + $0x8] sm:$0xf]
    %v5605 = vld [vmem:[%s9 + $0xc] sm:$0xf]
    %v5606 = vld [vmem:[%s9 + $0x10] sm:$0xf]
    %v5607 = vld [vmem:[%s9 + $0x14] sm:$0xf]
    %v5608 = vld [vmem:[%s9 + $0x18] sm:$0xf]
    %v5609 = vld [vmem:[%s9 + $0x1c] sm:$0xf]
    %v5610 = vld [vmem:[%s9 + $0x20] sm:$0xf]
    %v5611 = vld [vmem:[%s9 + $0x24] sm:$0xf]
    %v5612 = vld [vmem:[%s9 + $0x28] sm:$0xf]
    %v5613 = vld [vmem:[%s9 + $0x2c] sm:$0xf]
    %v5614 = vld [vmem:[%s9 + $0x30] sm:$0xf]
    %v5615 = vld [vmem:[%s9 + $0x34] sm:$0xf]
    %v5616 = vld [vmem:[%s9 + $0x38] sm:$0xf]
    %v5617 = vld [vmem:[%s9 + $0x3c] sm:$0xf]
    %v5618 = vld [vmem:[%s10] sm:$0x1]
    %v5620 = vlaneseq
    %v5621 = vshrl.u32 %v5620, 7
    %v5622 = vsub.s32 0, %v5621
    %v5623 = vrot.slane %v5618, %v5622
    %v5641 = vunpack.c.l.b16 %v5602
    %v5642 = vunpack.c.l.b16 %v5603
    %v5643 = vunpack.c.l.b16 %v5604
    %v5644 = vunpack.c.l.b16 %v5605
    %v5645 = vunpack.c.l.b16 %v5606
    %v5646 = vunpack.c.l.b16 %v5607
    %v5647 = vunpack.c.l.b16 %v5608
    %v5648 = vunpack.c.l.b16 %v5609
    %v5649 = vunpack.c.l.b16 %v5610
    %v5650 = vunpack.c.l.b16 %v5611
    %v5651 = vunpack.c.l.b16 %v5612
    %v5652 = vunpack.c.l.b16 %v5613
    %v5653 = vunpack.c.l.b16 %v5614
    %v5654 = vunpack.c.l.b16 %v5615
    %v5655 = vunpack.c.l.b16 %v5616
    %v5656 = vunpack.c.l.b16 %v5617
    %v5657 = vpack.c.b16 %v5642, %v5641
    %v5658 = vpack.c.b16 %v5644, %v5643
    %v5659 = vpack.c.b16 %v5646, %v5645
    %v5660 = vpack.c.b16 %v5648, %v5647
    %v5661 = vpack.c.b16 %v5650, %v5649
    %v5662 = vpack.c.b16 %v5652, %v5651
    %v5663 = vpack.c.b16 %v5654, %v5653
    %v5664 = vpack.c.b16 %v5656, %v5655
    %5673 = vmatprep.subr.bf16.mxu0 0
    %5674 = vmatpush1.bf16.msra.mxu0 %v5657
    %5675 = vmatprep.subr.bf16.mxu0 0
    %5676 = vmatpush1.bf16.msra.mxu0 %v5658
    %5677 = vmatprep.subr.bf16.mxu0 0
    %5678 = vmatpush1.bf16.msra.mxu0 %v5659
    %5679 = vmatprep.subr.bf16.mxu0 0
    %5680 = vmatpush1.bf16.msra.mxu0 %v5660
    %5681 = vmatprep.subr.bf16.mxu0 0
    %5682 = vmatpush1.bf16.msra.mxu0 %v5661
    %5683 = vmatprep.subr.bf16.mxu0 0
    %5684 = vmatpush1.bf16.msra.mxu0 %v5662
    %5685 = vmatprep.subr.bf16.mxu0 0
    %5686 = vmatpush1.bf16.msra.mxu0 %v5663
    %5687 = vmatprep.subr.bf16.mxu0 0
    %5688 = vmatpush1.bf16.msra.mxu0 %v5664
    %5689 = vmatprep.subr.bf16.mxu0 0
    %5690 = vmatpush1.bf16.msra.mxu0 0
    %5691 = vmatprep.subr.bf16.mxu0 0
    %5692 = vmatpush1.bf16.msra.mxu0 0
    %5693 = vmatprep.subr.bf16.mxu0 0
    %5694 = vmatpush1.bf16.msra.mxu0 0
    %5695 = vmatprep.subr.bf16.mxu0 0
    %5696 = vmatpush1.bf16.msra.mxu0 0
    %5697 = vmatprep.subr.bf16.mxu0 0
    %5698 = vmatpush1.bf16.msra.mxu0 0
    %5699 = vmatprep.subr.bf16.mxu0 0
    %5700 = vmatpush1.bf16.msra.mxu0 0
    %5701 = vmatprep.subr.bf16.mxu0 0
    %5702 = vmatpush1.bf16.msra.mxu0 0
    %5703 = vmatprep.subr.bf16.mxu0 0
    %5704 = vmatpush1.bf16.msra.mxu0 0
    %5705 = vmatprep.mubr.bf16.mxu0 0
    %5706 = vmatmul.mubr.bf16.gmra.mrb[0].mxu0 %v5594
    %v5707 = vpop.f32.mrb[0].mxu0
    %v5708 = vadd.f32 %v5623, %v5707
    %v5709 = vpop.f32.mrb[0].mxu0
    %v5710 = vpop.f32.mrb[0].mxu0
    %v5711 = vadd.f32 %v5623, %v5710
    %v5712 = vpop.f32.mrb[0].mxu0
    %5713 = vmatprep.mubr.bf16.mxu0 0
    %5714 = vmatmul.mubr.bf16.gmra.mrb[0].mxu0 %v5595
    %v5715 = vpop.f32.mrb[0].mxu0
    %v5716 = vadd.f32 %v5623, %v5715
    %v5717 = vpop.f32.mrb[0].mxu0
    %v5718 = vpop.f32.mrb[0].mxu0
    %v5719 = vadd.f32 %v5623, %v5718
    %v5720 = vpop.f32.mrb[0].mxu0
    %5721 = vmatprep.mubr.bf16.mxu0 0
    %5722 = vmatmul.mubr.bf16.gmra.mrb[0].mxu0 %v5596
    %v5723 = vpop.f32.mrb[0].mxu0
    %v5724 = vadd.f32 %v5623, %v5723
    %v5725 = vpop.f32.mrb[0].mxu0
    %v5726 = vpop.f32.mrb[0].mxu0
    %v5727 = vadd.f32 %v5623, %v5726
    %v5728 = vpop.f32.mrb[0].mxu0
    %5729 = vmatprep.mubr.bf16.mxu0 0
    %5730 = vmatmul.mubr.bf16.gmra.mrb[0].mxu0 %v5597
    %v5731 = vpop.f32.mrb[0].mxu0
    %v5732 = vadd.f32 %v5623, %v5731
    %v5733 = vpop.f32.mrb[0].mxu0
    %v5734 = vpop.f32.mrb[0].mxu0
    %v5735 = vadd.f32 %v5623, %v5734
    %v5736 = vpop.f32.mrb[0].mxu0
    %5737 = vmatprep.mubr.bf16.mxu0 0
    %5738 = vmatmul.mubr.bf16.gmra.mrb[0].mxu0 %v5598
    %v5739 = vpop.f32.mrb[0].mxu0
    %v5740 = vadd.f32 %v5623, %v5739
    %v5741 = vpop.f32.mrb[0].mxu0
    %v5742 = vpop.f32.mrb[0].mxu0
    %v5743 = vadd.f32 %v5623, %v5742
    %v5744 = vpop.f32.mrb[0].mxu0
    %5745 = vmatprep.mubr.bf16.mxu0 0
    %5746 = vmatmul.mubr.bf16.gmra.mrb[0].mxu0 %v5599
    %v5747 = vpop.f32.mrb[0].mxu0
    %v5748 = vadd.f32 %v5623, %v5747
    %v5749 = vpop.f32.mrb[0].mxu0
    %v5750 = vpop.f32.mrb[0].mxu0
    %v5751 = vadd.f32 %v5623, %v5750
    %v5752 = vpop.f32.mrb[0].mxu0
    %5753 = vmatprep.mubr.bf16.mxu0 0
    %5754 = vmatmul.mubr.bf16.gmra.mrb[0].mxu0 %v5600
    %v5755 = vpop.f32.mrb[0].mxu0
    %v5756 = vadd.f32 %v5623, %v5755
    %v5757 = vpop.f32.mrb[0].mxu0
    %v5758 = vpop.f32.mrb[0].mxu0
    %v5759 = vadd.f32 %v5623, %v5758
    %v5760 = vpop.f32.mrb[0].mxu0
    %5761 = vmatprep.mubr.bf16.mxu0 0
    %5762 = vmatmul.mubr.bf16.gmra.mrb[0].mxu0 %v5601
    %v5763 = vpop.f32.mrb[0].mxu0
    %v5764 = vadd.f32 %v5623, %v5763
    %v5765 = vpop.f32.mrb[0].mxu0
    %v5766 = vpop.f32.mrb[0].mxu0
    %v5767 = vadd.f32 %v5623, %v5766
    %v5768 = vpop.f32.mrb[0].mxu0
    %5769 = vdwg.mxu0
    %5770 = vst [vmem:[%s11] sm:$0xff] %v5708
    %5771 = vst [vmem:[%s11 + $0x8] sm:$0xff] %v5711
    %5772 = vst [vmem:[%s11 + $0x10] sm:$0xff] %v5716
    %5773 = vst [vmem:[%s11 + $0x18] sm:$0xff] %v5719
    %5774 = vst [vmem:[%s11 + $0x20] sm:$0xff] %v5724
    %5775 = vst [vmem:[%s11 + $0x28] sm:$0xff] %v5727
    %5776 = vst [vmem:[%s11 + $0x30] sm:$0xff] %v5732
    %5777 = vst [vmem:[%s11 + $0x38] sm:$0xff] %v5735
    %5778 = vst [vmem:[%s11 + $0x40] sm:$0xff] %v5740
    %5779 = vst [vmem:[%s11 + $0x48] sm:$0xff] %v5743
    %5780 = vst [vmem:[%s11 + $0x50] sm:$0xff] %v5748
    %5781 = vst [vmem:[%s11 + $0x58] sm:$0xff] %v5751
    %5782 = vst [vmem:[%s11 + $0x60] sm:$0xff] %v5756
    %5783 = vst [vmem:[%s11 + $0x68] sm:$0xff] %v5759
    %5784 = vst [vmem:[%s11 + $0x70] sm:$0xff] %v5764
    %5785 = vst [vmem:[%s11 + $0x78] sm:$0xff] %v5767
    // Predicated region
    $region50: #{mlp_forward.1} parent=1 // pred_check
      _
    $region51: #{mlp_forward.1} parent=1 // pred_check_branch
      %5787 = sbr.rel (0) target = $region53
    $region52: #{mlp_forward.1} parent=1 // pred_region
      _
    $region53: #{mlp_forward.1} parent=1 // pred_fallthru
      _
    // Predicated region
    $region54: #{mlp_forward.1} parent=1 // pred_check
      _
    $region55: #{mlp_forward.1} parent=1 // pred_check_branch
      %5789 = sbr.rel (0) target = $region57
    $region56: #{mlp_forward.1} parent=1 // pred_region
      _
    $region57: #{mlp_forward.1} parent=1 // pred_fallthru
      _
    %5790 = vsyncpa [#allocation3], 1

</llo_original>
